<compile_context>
chip_gen: v5e
topology: v5e:2x2
jax: 0.10.0
libtpu: 0.0.40
codegen_flags: <defaults>
</compile_context>

<pallas_src>
import functools
from math import ceil

import jax
import jax.numpy as jnp
from jax import lax
from jax.experimental import pallas as pl
from jax.experimental.pallas import tpu as pltpu

LANE = 128


def _round_up(x, m):
    return (x + m - 1) // m * m


# ------------------------------ Pallas kernel ------------------------------ #
def _conv_bn_relu_kernel(x_ref, w_ref, scale_ref, shift_ref, o_ref, *,
                         taps, sh, sw, Ho, Wo):
    """One image per grid step.

    x_ref     : (P, Hq, Wq, Cp) bf16  phase-decomposed padded input slab
    w_ref     : (T, Cp, Op)     bf16  one (Cp, Op) weight slice per kernel tap
    scale_ref : (1, Op)         f32   folded BatchNorm scale
    shift_ref : (1, Op)         f32   folded BatchNorm shift
    o_ref     : (Ho, Wo, Op)          output tile (bf16 or f32)
    """
    Cp = x_ref.shape[-1]
    Op = w_ref.shape[-1]
    acc = jnp.zeros((Ho * Wo, Op), jnp.float32)
    for t, (di, dj) in enumerate(taps):                    # kh*kw <= 9, unrolled
        p = (di % sh) * sw + (dj % sw)                     # phase index
        qh, qw = di // sh, dj // sw                        # offset within phase
        patch = x_ref[p, qh:qh + Ho, qw:qw + Wo, :]        # (Ho, Wo, Cp) bf16
        acc += jnp.dot(patch.reshape(Ho * Wo, Cp), w_ref[t],
                       preferred_element_type=jnp.float32)
    y = acc * scale_ref[...] + shift_ref[...]              # folded BatchNorm
    y = jnp.maximum(y, 0.0)                                # ReLU
    o_ref[...] = y.reshape(Ho, Wo, Op).astype(o_ref.dtype)


# ------------------------------- JAX wrappers ------------------------------ #
def _phase_decompose(x, sh, sw):
    """(N, Hp, Wp, C) -> (N*P, Hq, Wq, C) with P = sh*sw phases per image.

    Phase (rh, rw) holds x[:, rh::sh, rw::sw, :]; done once in XLA so the
    kernel never needs strided loads.  Identity for stride (1, 1).
    """
    N, Hp, Wp, C = x.shape
    if sh == 1 and sw == 1:
        return x, 1, Hp, Wp
    Hq, Wq = -(-Hp // sh), -(-Wp // sw)
    x = jnp.pad(x, ((0, 0), (0, Hq * sh - Hp), (0, Wq * sw - Wp), (0, 0)))
    x = x.reshape(N, Hq, sh, Wq, sw, C).transpose(0, 2, 4, 1, 3, 5)
    return x.reshape(N * sh * sw, Hq, Wq, C), sh * sw, Hq, Wq


def _conv_bn_relu(x, weight, gamma, beta, mean, var, *, stride, eps=1e-3,
                  out_dtype=jnp.bfloat16):
    """Fused valid-conv + folded BatchNorm (inference) + ReLU.

    x      : (N, Hp, Wp, Cp) NHWC, channel dim already padded to LANE, bf16
    weight : (O, C, kh, kw)  PyTorch OIHW layout (unpadded)
    returns: (N, Ho, Wo, Op) NHWC, Op = round_up(O, LANE); padded output
             channels are exactly zero.
    """
    sh, sw = stride
    O, C, kh, kw = weight.shape
    N, Hp, Wp, Cp = x.shape
    Ho = (Hp - kh) // sh + 1
    Wo = (Wp - kw) // sw + 1
    Op = _round_up(O, LANE)
    T = kh * kw
    taps = tuple((di, dj) for di in range(kh) for dj in range(kw))

    # (O, C, kh, kw) -> (kh*kw, Cp, Op), zero-padded, bf16 for the MXU.
    w = jnp.transpose(weight, (2, 3, 1, 0)).reshape(T, C, O)
    w = jnp.pad(w, ((0, 0), (0, Cp - C), (0, Op - O))).astype(jnp.bfloat16)

    # Fold BatchNorm (inference) into per-channel scale/shift (f32).  Padded
    # channels get scale = shift = 0 so they stay exactly zero after ReLU.
    scale = (gamma / jnp.sqrt(var + eps)).astype(jnp.float32)
    shift = (beta - mean * scale).astype(jnp.float32)
    scale = jnp.pad(scale, (0, Op - O)).reshape(1, Op)
    shift = jnp.pad(shift, (0, Op - O)).reshape(1, Op)

    xq, P, Hq, Wq = _phase_decompose(x.astype(jnp.bfloat16), sh, sw)

    kernel = functools.partial(_conv_bn_relu_kernel, taps=taps, sh=sh, sw=sw,
                               Ho=Ho, Wo=Wo)
    return pl.pallas_call(
        kernel,
        out_shape=jax.ShapeDtypeStruct((N, Ho, Wo, Op), out_dtype),
        grid_spec=pltpu.PrefetchScalarGridSpec(
            num_scalar_prefetch=0,
            grid=(N,),
            in_specs=[
                # all P phases of image n, whole spatial slab in VMEM
                pl.BlockSpec((P, Hq, Wq, Cp), lambda n: (n, 0, 0, 0)),
                # grid-invariant weight / BN params
                pl.BlockSpec((T, Cp, Op), lambda n: (0, 0, 0)),
                pl.BlockSpec((1, Op), lambda n: (0, 0)),
                pl.BlockSpec((1, Op), lambda n: (0, 0)),
            ],
            out_specs=pl.BlockSpec((None, Ho, Wo, Op), lambda n: (n, 0, 0, 0)),
        ),
        compiler_params=pltpu.CompilerParams(
            dimension_semantics=("parallel",)),
    )(xq, w, scale, shift)


def calc_padding(in_size, kernel_size, stride):
    if in_size[0] % stride[0] == 0:
        pad_along_height = max(kernel_size[0] - stride[0], 0)
    else:
        pad_along_height = max(kernel_size[0] - in_size[0] % stride[0], 0)
    if in_size[1] % stride[1] == 0:
        pad_along_width = max(kernel_size[1] - stride[1], 0)
    else:
        pad_along_width = max(kernel_size[1] - in_size[1] % stride[1], 0)
    pad_top = pad_along_height // 2
    pad_bottom = pad_along_height - pad_top
    pad_left = pad_along_width // 2
    pad_right = pad_along_width - pad_left
    return [pad_left, pad_right, pad_top, pad_bottom]


def _rep_pad_nhwc(x, padding):          # padding: (left, right, top, bottom)
    l, r, t, b = padding
    return jnp.pad(x, ((0, 0), (t, b), (l, r), (0, 0)), mode="edge")


def inception_branch_factorization1_forward(x, params, *, kernel_size, stride,
                                            in_size):
    """x: (N, C, H, W) f32 NCHW.  Returns (N, O, Ho, Wo) f32 NCHW."""
    (w1, g1, b1, m1, v1), (w2, g2, b2, m2, v2), (w3, g3, b3, m3, v3) = params
    out_channels = w3.shape[0]
    ks = (ceil(kernel_size[0] / 2), ceil(kernel_size[1] / 2))
    pad1 = [ks[1] // 2 - 1 + ks[1] % 2, ks[1] // 2,
            ks[0] // 2 - 1 + ks[0] % 2, ks[0] // 2]
    pad2 = calc_padding([in_size[1], in_size[2]], ks, stride)

    # Single NCHW -> NHWC conversion + channel pad to 128 at the boundary.
    xh = jnp.transpose(x, (0, 2, 3, 1))
    Cin = xh.shape[-1]
    xh = jnp.pad(xh, ((0, 0), (0, 0), (0, 0), (0, _round_up(Cin, LANE) - Cin)))
    xh = xh.astype(jnp.bfloat16)

    xh = _conv_bn_relu(xh, w1, g1, b1, m1, v1, stride=(1, 1))        # branch_1
    xh = _rep_pad_nhwc(xh, pad1)                                     # same_padding1
    xh = _conv_bn_relu(xh, w2, g2, b2, m2, v2, stride=(1, 1))        # branch_2
    xh = _rep_pad_nhwc(xh, pad2)                                     # same_padding2
    xh = _conv_bn_relu(xh, w3, g3, b3, m3, v3, stride=tuple(stride),
                       out_dtype=jnp.float32)                        # branch_3

    xh = xh[..., :out_channels]                 # drop lane padding
    return jnp.transpose(xh, (0, 3, 1, 2))      # single NHWC -> NCHW


# -------------------------------- reference -------------------------------- #
def _ref_basic_conv2d(x, w, gamma, beta, mean, var, *, stride, eps=1e-3,
                      operand_dtype=jnp.float32):
    y = lax.conv_general_dilated(
        x.astype(operand_dtype), w.astype(operand_dtype),
        window_strides=stride, padding="VALID",
        dimension_numbers=("NCHW", "OIHW", "NCHW"),
        preferred_element_type=jnp.float32)
    scale = gamma / jnp.sqrt(var + eps)
    shift = beta - mean * scale
    y = y * scale.reshape(1, -1, 1, 1) + shift.reshape(1, -1, 1, 1)
    return jnp.maximum(y, 0.0)


def _reference(x, params, *, kernel_size, stride, in_size,
               operand_dtype=jnp.float32):
    (w1, g1, b1, m1, v1), (w2, g2, b2, m2, v2), (w3, g3, b3, m3, v3) = params
    ks = (ceil(kernel_size[0] / 2), ceil(kernel_size[1] / 2))
    pad1 = [ks[1] // 2 - 1 + ks[1] % 2, ks[1] // 2,
            ks[0] // 2 - 1 + ks[0] % 2, ks[0] // 2]
    pad2 = calc_padding([in_size[1], in_size[2]], ks, stride)

    def rep_pad(z, p):
        l, r, t, b = p
        return jnp.pad(z, ((0, 0), (0, 0), (t, b), (l, r)), mode="edge")

    y = _ref_basic_conv2d(x, w1, g1, b1, m1, v1, stride=(1, 1),
                          operand_dtype=operand_dtype)
    y = rep_pad(y, pad1)
    y = _ref_basic_conv2d(y, w2, g2, b2, m2, v2, stride=(1, 1),
                          operand_dtype=operand_dtype)
    y = rep_pad(y, pad2)
    y = _ref_basic_conv2d(y, w3, g3, b3, m3, v3, stride=tuple(stride),
                          operand_dtype=operand_dtype)
    return y


# ----------------------------------- main ----------------------------------- #
if __name__ == "__main__":
    N = 2
    in_channels, out_channels = 4, 8
    H = W = 16
    kernel_size = (5, 5)          # -> factorized ks = (3, 3)
    stride = (2, 2)
    in_size = (in_channels, H, W)

    key = jax.random.PRNGKey(0)
    kx, k1, k2, k3 = jax.random.split(key, 4)

    x = jax.random.normal(kx, (N, in_channels, H, W), dtype=jnp.float32)

    ks = (ceil(kernel_size[0] / 2), ceil(kernel_size[1] / 2))

    def make_conv_bn(k, cin, cout, ksz):
        kw_, kg, kb, km, kv = jax.random.split(k, 5)
        fan_in = cin * ksz[0] * ksz[1]
        bound = 1.0 / (fan_in ** 0.5)
        w = jax.random.uniform(kw_, (cout, cin, ksz[0], ksz[1]), jnp.float32,
                               -bound, bound)
        gamma = jax.random.uniform(kg, (cout,), jnp.float32, 0.5, 1.5)
        beta = jax.random.uniform(kb, (cout,), jnp.float32, -0.5, 0.5)
        mean = 0.1 * jax.random.normal(km, (cout,), jnp.float32)
        var = jax.random.uniform(kv, (cout,), jnp.float32, 0.5, 1.5)
        return (w, gamma, beta, mean, var)

    params = (
        make_conv_bn(k1, in_channels, out_channels, (1, 1)),   # branch_1
        make_conv_bn(k2, out_channels, out_channels, ks),      # branch_2
        make_conv_bn(k3, out_channels, out_channels, ks),      # branch_3
    )

    fwd = jax.jit(functools.partial(
        inception_branch_factorization1_forward,
        kernel_size=kernel_size, stride=stride, in_size=in_size))
    out = jax.block_until_ready(fwd(x, params))

    # Reference with matching bf16-operand / f32-accumulation numerics.
    ref_bf16 = _reference(x, params, kernel_size=kernel_size, stride=stride,
                          in_size=in_size, operand_dtype=jnp.bfloat16)
    # Full-f32 reference (sanity: only bf16 operand rounding should differ).
    ref_f32 = _reference(x, params, kernel_size=kernel_size, stride=stride,
                         in_size=in_size, operand_dtype=jnp.float32)

    assert out.shape == ref_f32.shape == (N, out_channels, 8, 8), (
        out.shape, ref_f32.shape)
    assert jnp.allclose(out, ref_bf16, atol=5e-3, rtol=5e-3), float(
        jnp.max(jnp.abs(out - ref_bf16)))
    assert jnp.allclose(out, ref_f32, atol=5e-2, rtol=5e-2), float(
        jnp.max(jnp.abs(out - ref_f32)))

    print("KERNEL_OK")
</pallas_src>

<mosaic_0001>
module attributes {stable_mosaic.version = 11 : i64} {
  func.func @_conv_bn_relu_kernel(%arg0: i32, %arg1: memref<1x16x16x128xbf16, #tpu.memory_space<vmem>>, %arg2: memref<1x128x128xbf16, #tpu.memory_space<vmem>>, %arg3: memref<1x128xf32, #tpu.memory_space<vmem>>, %arg4: memref<1x128xf32, #tpu.memory_space<vmem>>, %arg5: memref<1x16x16x128xbf16, #tpu.memory_space<vmem>>) attributes {dimension_semantics = [#tpu.dimension_semantics<parallel>], iteration_bounds = array<i64: 2>, scalar_prefetch = 0 : i64, scratch_operands = 0 : i64, tpu.core_type = #tpu.core_type<tc>, window_params = [{transform_indices = @transform_0, window_bounds = array<i64: 1, 16, 16, 128>}, {pipeline_mode = #tpu.pipeline_mode<synchronous>, transform_indices = @transform_1, window_bounds = array<i64: 1, 128, 128>}, {pipeline_mode = #tpu.pipeline_mode<synchronous>, transform_indices = @transform_2, window_bounds = array<i64: 1, 128>}, {pipeline_mode = #tpu.pipeline_mode<synchronous>, transform_indices = @transform_3, window_bounds = array<i64: 1, 128>}, {transform_indices = @transform_4, window_bounds = array<i64: 1, 16, 16, 128>}]} {
    %cst = arith.constant 0.000000e+00 : f32
    %0 = vector.broadcast %cst : f32 to vector<256x128xf32>
    %c0 = arith.constant 0 : index
    %c0_0 = arith.constant 0 : index
    %c0_1 = arith.constant 0 : index
    %c0_2 = arith.constant 0 : index
    %1 = vector.load %arg1[%c0, %c0_0, %c0_1, %c0_2] : memref<1x16x16x128xbf16, #tpu.memory_space<vmem>>, vector<1x16x16x128xbf16>
    %2 = vector.shape_cast %1 : vector<1x16x16x128xbf16> to vector<16x16x128xbf16>
    %3 = vector.shape_cast %2 : vector<16x16x128xbf16> to vector<256x128xbf16>
    %c0_3 = arith.constant 0 : index
    %c0_4 = arith.constant 0 : index
    %c0_5 = arith.constant 0 : index
    %4 = vector.load %arg2[%c0_3, %c0_4, %c0_5] : memref<1x128x128xbf16, #tpu.memory_space<vmem>>, vector<1x128x128xbf16>
    %5 = vector.shape_cast %4 : vector<1x128x128xbf16> to vector<128x128xbf16>
    %cst_6 = arith.constant dense<0.000000e+00> : vector<256x128xf32>
    %6 = tpu.matmul %3, %5, %cst_6 {dimension_numbers = #tpu.dot_dimension_numbers<[1], [0], [0], [1], [0, 0, 1, 1], [], []>} : vector<256x128xbf16>, vector<128x128xbf16>, vector<256x128xf32> -> vector<256x128xf32>
    %7 = arith.addf %0, %6 : vector<256x128xf32>
    %c0_7 = arith.constant 0 : index
    %c0_8 = arith.constant 0 : index
    %8 = vector.load %arg3[%c0_7, %c0_8] : memref<1x128xf32, #tpu.memory_space<vmem>>, vector<1x128xf32>
    %9 = vector.broadcast %8 : vector<1x128xf32> to vector<256x128xf32>
    %10 = arith.mulf %7, %9 : vector<256x128xf32>
    %c0_9 = arith.constant 0 : index
    %c0_10 = arith.constant 0 : index
    %11 = vector.load %arg4[%c0_9, %c0_10] : memref<1x128xf32, #tpu.memory_space<vmem>>, vector<1x128xf32>
    %12 = vector.broadcast %11 : vector<1x128xf32> to vector<256x128xf32>
    %13 = arith.addf %10, %12 : vector<256x128xf32>
    %cst_11 = arith.constant 0.000000e+00 : f32
    %14 = vector.broadcast %cst_11 : f32 to vector<256x128xf32>
    %15 = arith.maximumf %13, %14 : vector<256x128xf32>
    %16 = vector.shape_cast %15 : vector<256x128xf32> to vector<16x16x128xf32>
    %17 = arith.truncf %16 : vector<16x16x128xf32> to vector<16x16x128xbf16>
    %c0_12 = arith.constant 0 : index
    %c0_13 = arith.constant 0 : index
    %c0_14 = arith.constant 0 : index
    %c0_15 = arith.constant 0 : index
    %18 = vector.load %arg5[%c0_12, %c0_13, %c0_14, %c0_15] : memref<1x16x16x128xbf16, #tpu.memory_space<vmem>>, vector<1x16x16x128xbf16>
    %19 = vector.shape_cast %18 : vector<1x16x16x128xbf16> to vector<16x16x128xbf16>
    %20 = vector.shape_cast %17 : vector<16x16x128xbf16> to vector<1x16x16x128xbf16>
    tpu.vector_store %arg5[%c0_12, %c0_13, %c0_14, %c0_15], %20 {strides = array<i32>} : memref<1x16x16x128xbf16, #tpu.memory_space<vmem>>, vector<1x16x16x128xbf16>,
    return
  }
  func.func @transform_0(%arg0: i32) -> (i32, i32, i32, i32) {
    %c0_i32 = arith.constant 0 : i32
    %c0_i32_0 = arith.constant 0 : i32
    %c0_i32_1 = arith.constant 0 : i32
    %c0_i32_2 = arith.constant 0 : i32
    return %arg0, %c0_i32, %c0_i32_0, %c0_i32_1 : i32, i32, i32, i32
  }
  func.func @transform_1(%arg0: i32) -> (i32, i32, i32) {
    %c0_i32 = arith.constant 0 : i32
    %c0_i32_0 = arith.constant 0 : i32
    %c0_i32_1 = arith.constant 0 : i32
    %c0_i32_2 = arith.constant 0 : i32
    return %c0_i32, %c0_i32_0, %c0_i32_1 : i32, i32, i32
  }
  func.func @transform_2(%arg0: i32) -> (i32, i32) {
    %c0_i32 = arith.constant 0 : i32
    %c0_i32_0 = arith.constant 0 : i32
    %c0_i32_1 = arith.constant 0 : i32
    return %c0_i32, %c0_i32_0 : i32, i32
  }
  func.func @transform_3(%arg0: i32) -> (i32, i32) {
    %c0_i32 = arith.constant 0 : i32
    %c0_i32_0 = arith.constant 0 : i32
    %c0_i32_1 = arith.constant 0 : i32
    return %c0_i32, %c0_i32_0 : i32, i32
  }
  func.func @transform_4(%arg0: i32) -> (i32, i32, i32, i32) {
    %c0_i32 = arith.constant 0 : i32
    %c0_i32_0 = arith.constant 0 : i32
    %c0_i32_1 = arith.constant 0 : i32
    %c0_i32_2 = arith.constant 0 : i32
    return %arg0, %c0_i32, %c0_i32_0, %c0_i32_1 : i32, i32, i32, i32
  }
}

module attributes {stable_mosaic.version = 11 : i64} {
  func.func @_conv_bn_relu_kernel(%arg0: i32, %arg1: memref<1x18x18x128xbf16, #tpu.memory_space<vmem>>, %arg2: memref<9x128x128xbf16, #tpu.memory_space<vmem>>, %arg3: memref<1x128xf32, #tpu.memory_space<vmem>>, %arg4: memref<1x128xf32, #tpu.memory_space<vmem>>, %arg5: memref<1x16x16x128xbf16, #tpu.memory_space<vmem>>) attributes {dimension_semantics = [#tpu.dimension_semantics<parallel>], iteration_bounds = array<i64: 2>, scalar_prefetch = 0 : i64, scratch_operands = 0 : i64, tpu.core_type = #tpu.core_type<tc>, window_params = [{transform_indices = @transform_0, window_bounds = array<i64: 1, 18, 18, 128>}, {pipeline_mode = #tpu.pipeline_mode<synchronous>, transform_indices = @transform_1, window_bounds = array<i64: 9, 128, 128>}, {pipeline_mode = #tpu.pipeline_mode<synchronous>, transform_indices = @transform_2, window_bounds = array<i64: 1, 128>}, {pipeline_mode = #tpu.pipeline_mode<synchronous>, transform_indices = @transform_3, window_bounds = array<i64: 1, 128>}, {transform_indices = @transform_4, window_bounds = array<i64: 1, 16, 16, 128>}]} {
    %cst = arith.constant 0.000000e+00 : f32
    %0 = vector.broadcast %cst : f32 to vector<256x128xf32>
    %c0 = arith.constant 0 : index
    %c0_0 = arith.constant 0 : index
    %c0_1 = arith.constant 0 : index
    %c0_2 = arith.constant 0 : index
    %1 = vector.load %arg1[%c0, %c0_0, %c0_1, %c0_2] : memref<1x18x18x128xbf16, #tpu.memory_space<vmem>>, vector<1x16x16x128xbf16>
    %2 = vector.shape_cast %1 : vector<1x16x16x128xbf16> to vector<16x16x128xbf16>
    %3 = vector.shape_cast %2 : vector<16x16x128xbf16> to vector<256x128xbf16>
    %c0_3 = arith.constant 0 : index
    %c0_4 = arith.constant 0 : index
    %c0_5 = arith.constant 0 : index
    %4 = vector.load %arg2[%c0_3, %c0_4, %c0_5] : memref<9x128x128xbf16, #tpu.memory_space<vmem>>, vector<1x128x128xbf16>
    %5 = vector.shape_cast %4 : vector<1x128x128xbf16> to vector<128x128xbf16>
    %cst_6 = arith.constant dense<0.000000e+00> : vector<256x128xf32>
    %6 = tpu.matmul %3, %5, %cst_6 {dimension_numbers = #tpu.dot_dimension_numbers<[1], [0], [0], [1], [0, 0, 1, 1], [], []>} : vector<256x128xbf16>, vector<128x128xbf16>, vector<256x128xf32> -> vector<256x128xf32>
    %7 = arith.addf %0, %6 : vector<256x128xf32>
    %c0_7 = arith.constant 0 : index
    %c0_8 = arith.constant 0 : index
    %c1 = arith.constant 1 : index
    %c0_9 = arith.constant 0 : index
    %8 = vector.load %arg1[%c0_7, %c0_8, %c1, %c0_9] : memref<1x18x18x128xbf16, #tpu.memory_space<vmem>>, vector<1x16x16x128xbf16>
    %9 = vector.shape_cast %8 : vector<1x16x16x128xbf16> to vector<16x16x128xbf16>
    %10 = vector.shape_cast %9 : vector<16x16x128xbf16> to vector<256x128xbf16>
    %c1_10 = arith.constant 1 : index
    %c0_11 = arith.constant 0 : index
    %c0_12 = arith.constant 0 : index
    %11 = vector.load %arg2[%c1_10, %c0_11, %c0_12] : memref<9x128x128xbf16, #tpu.memory_space<vmem>>, vector<1x128x128xbf16>
    %12 = vector.shape_cast %11 : vector<1x128x128xbf16> to vector<128x128xbf16>
    %cst_13 = arith.constant dense<0.000000e+00> : vector<256x128xf32>
    %13 = tpu.matmul %10, %12, %cst_13 {dimension_numbers = #tpu.dot_dimension_numbers<[1], [0], [0], [1], [0, 0, 1, 1], [], []>} : vector<256x128xbf16>, vector<128x128xbf16>, vector<256x128xf32> -> vector<256x128xf32>
    %14 = arith.addf %7, %13 : vector<256x128xf32>
    %c0_14 = arith.constant 0 : index
    %c0_15 = arith.constant 0 : index
    %c2 = arith.constant 2 : index
    %c0_16 = arith.constant 0 : index
    %15 = vector.load %arg1[%c0_14, %c0_15, %c2, %c0_16] : memref<1x18x18x128xbf16, #tpu.memory_space<vmem>>, vector<1x16x16x128xbf16>
    %16 = vector.shape_cast %15 : vector<1x16x16x128xbf16> to vector<16x16x128xbf16>
    %17 = vector.shape_cast %16 : vector<16x16x128xbf16> to vector<256x128xbf16>
    %c2_17 = arith.constant 2 : index
    %c0_18 = arith.constant 0 : index
    %c0_19 = arith.constant 0 : index
    %18 = vector.load %arg2[%c2_17, %c0_18, %c0_19] : memref<9x128x128xbf16, #tpu.memory_space<vmem>>, vector<1x128x128xbf16>
    %19 = vector.shape_cast %18 : vector<1x128x128xbf16> to vector<128x128xbf16>
    %cst_20 = arith.constant dense<0.000000e+00> : vector<256x128xf32>
    %20 = tpu.matmul %17, %19, %cst_20 {dimension_numbers = #tpu.dot_dimension_numbers<[1], [0], [0], [1], [0, 0, 1, 1], [], []>} : vector<256x128xbf16>, vector<128x128xbf16>, vector<256x128xf32> -> vector<256x128xf32>
    %21 = arith.addf %14, %20 : vector<256x128xf32>
    %c0_21 = arith.constant 0 : index
    %c1_22 = arith.constant 1 : index
    %c0_23 = arith.constant 0 : index
    %c0_24 = arith.constant 0 : index
    %22 = vector.load %arg1[%c0_21, %c1_22, %c0_23, %c0_24] : memref<1x18x18x128xbf16, #tpu.memory_space<vmem>>, vector<1x16x16x128xbf16>
    %23 = vector.shape_cast %22 : vector<1x16x16x128xbf16> to vector<16x16x128xbf16>
    %24 = vector.shape_cast %23 : vector<16x16x128xbf16> to vector<256x128xbf16>
    %c3 = arith.constant 3 : index
    %c0_25 = arith.constant 0 : index
    %c0_26 = arith.constant 0 : index
    %25 = vector.load %arg2[%c3, %c0_25, %c0_26] : memref<9x128x128xbf16, #tpu.memory_space<vmem>>, vector<1x128x128xbf16>
    %26 = vector.shape_cast %25 : vector<1x128x128xbf16> to vector<128x128xbf16>
    %cst_27 = arith.constant dense<0.000000e+00> : vector<256x128xf32>
    %27 = tpu.matmul %24, %26, %cst_27 {dimension_numbers = #tpu.dot_dimension_numbers<[1], [0], [0], [1], [0, 0, 1, 1], [], []>} : vector<256x128xbf16>, vector<128x128xbf16>, vector<256x128xf32> -> vector<256x128xf32>
    %28 = arith.addf %21, %27 : vector<256x128xf32>
    %c0_28 = arith.constant 0 : index
    %c1_29 = arith.constant 1 : index
    %c1_30 = arith.constant 1 : index
    %c0_31 = arith.constant 0 : index
    %29 = vector.load %arg1[%c0_28, %c1_29, %c1_30, %c0_31] : memref<1x18x18x128xbf16, #tpu.memory_space<vmem>>, vector<1x16x16x128xbf16>
    %30 = vector.shape_cast %29 : vector<1x16x16x128xbf16> to vector<16x16x128xbf16>
    %31 = vector.shape_cast %30 : vector<16x16x128xbf16> to vector<256x128xbf16>
    %c4 = arith.constant 4 : index
    %c0_32 = arith.constant 0 : index
    %c0_33 = arith.constant 0 : index
    %32 = vector.load %arg2[%c4, %c0_32, %c0_33] : memref<9x128x128xbf16, #tpu.memory_space<vmem>>, vector<1x128x128xbf16>
    %33 = vector.shape_cast %32 : vector<1x128x128xbf16> to vector<128x128xbf16>
    %cst_34 = arith.constant dense<0.000000e+00> : vector<256x128xf32>
    %34 = tpu.matmul %31, %33, %cst_34 {dimension_numbers = #tpu.dot_dimension_numbers<[1], [0], [0], [1], [0, 0, 1, 1], [], []>} : vector<256x128xbf16>, vector<128x128xbf16>, vector<256x128xf32> -> vector<256x128xf32>
    %35 = arith.addf %28, %34 : vector<256x128xf32>
    %c0_35 = arith.constant 0 : index
    %c1_36 = arith.constant 1 : index
    %c2_37 = arith.constant 2 : index
    %c0_38 = arith.constant 0 : index
    %36 = vector.load %arg1[%c0_35, %c1_36, %c2_37, %c0_38] : memref<1x18x18x128xbf16, #tpu.memory_space<vmem>>, vector<1x16x16x128xbf16>
    %37 = vector.shape_cast %36 : vector<1x16x16x128xbf16> to vector<16x16x128xbf16>
    %38 = vector.shape_cast %37 : vector<16x16x128xbf16> to vector<256x128xbf16>
    %c5 = arith.constant 5 : index
    %c0_39 = arith.constant 0 : index
    %c0_40 = arith.constant 0 : index
    %39 = vector.load %arg2[%c5, %c0_39, %c0_40] : memref<9x128x128xbf16, #tpu.memory_space<vmem>>, vector<1x128x128xbf16>
    %40 = vector.shape_cast %39 : vector<1x128x128xbf16> to vector<128x128xbf16>
    %cst_41 = arith.constant dense<0.000000e+00> : vector<256x128xf32>
    %41 = tpu.matmul %38, %40, %cst_41 {dimension_numbers = #tpu.dot_dimension_numbers<[1], [0], [0], [1], [0, 0, 1, 1], [], []>} : vector<256x128xbf16>, vector<128x128xbf16>, vector<256x128xf32> -> vector<256x128xf32>
    %42 = arith.addf %35, %41 : vector<256x128xf32>
    %c0_42 = arith.constant 0 : index
    %c2_43 = arith.constant 2 : index
    %c0_44 = arith.constant 0 : index
    %c0_45 = arith.constant 0 : index
    %43 = vector.load %arg1[%c0_42, %c2_43, %c0_44, %c0_45] : memref<1x18x18x128xbf16, #tpu.memory_space<vmem>>, vector<1x16x16x128xbf16>
    %44 = vector.shape_cast %43 : vector<1x16x16x128xbf16> to vector<16x16x128xbf16>
    %45 = vector.shape_cast %44 : vector<16x16x128xbf16> to vector<256x128xbf16>
    %c6 = arith.constant 6 : index
    %c0_46 = arith.constant 0 : index
    %c0_47 = arith.constant 0 : index
    %46 = vector.load %arg2[%c6, %c0_46, %c0_47] : memref<9x128x128xbf16, #tpu.memory_space<vmem>>, vector<1x128x128xbf16>
    %47 = vector.shape_cast %46 : vector<1x128x128xbf16> to vector<128x128xbf16>
    %cst_48 = arith.constant dense<0.000000e+00> : vector<256x128xf32>
    %48 = tpu.matmul %45, %47, %cst_48 {dimension_numbers = #tpu.dot_dimension_numbers<[1], [0], [0], [1], [0, 0, 1, 1], [], []>} : vector<256x128xbf16>, vector<128x128xbf16>, vector<256x128xf32> -> vector<256x128xf32>
    %49 = arith.addf %42, %48 : vector<256x128xf32>
    %c0_49 = arith.constant 0 : index
    %c2_50 = arith.constant 2 : index
    %c1_51 = arith.constant 1 : index
    %c0_52 = arith.constant 0 : index
    %50 = vector.load %arg1[%c0_49, %c2_50, %c1_51, %c0_52] : memref<1x18x18x128xbf16, #tpu.memory_space<vmem>>, vector<1x16x16x128xbf16>
    %51 = vector.shape_cast %50 : vector<1x16x16x128xbf16> to vector<16x16x128xbf16>
    %52 = vector.shape_cast %51 : vector<16x16x128xbf16> to vector<256x128xbf16>
    %c7 = arith.constant 7 : index
    %c0_53 = arith.constant 0 : index
    %c0_54 = arith.constant 0 : index
    %53 = vector.load %arg2[%c7, %c0_53, %c0_54] : memref<9x128x128xbf16, #tpu.memory_space<vmem>>, vector<1x128x128xbf16>
    %54 = vector.shape_cast %53 : vector<1x128x128xbf16> to vector<128x128xbf16>
    %cst_55 = arith.constant dense<0.000000e+00> : vector<256x128xf32>
    %55 = tpu.matmul %52, %54, %cst_55 {dimension_numbers = #tpu.dot_dimension_numbers<[1], [0], [0], [1], [0, 0, 1, 1], [], []>} : vector<256x128xbf16>, vector<128x128xbf16>, vector<256x128xf32> -> vector<256x128xf32>
    %56 = arith.addf %49, %55 : vector<256x128xf32>
    %c0_56 = arith.constant 0 : index
    %c2_57 = arith.constant 2 : index
    %c2_58 = arith.constant 2 : index
    %c0_59 = arith.constant 0 : index
    %57 = vector.load %arg1[%c0_56, %c2_57, %c2_58, %c0_59] : memref<1x18x18x128xbf16, #tpu.memory_space<vmem>>, vector<1x16x16x128xbf16>
    %58 = vector.shape_cast %57 : vector<1x16x16x128xbf16> to vector<16x16x128xbf16>
    %59 = vector.shape_cast %58 : vector<16x16x128xbf16> to vector<256x128xbf16>
    %c8 = arith.constant 8 : index
    %c0_60 = arith.constant 0 : index
    %c0_61 = arith.constant 0 : index
    %60 = vector.load %arg2[%c8, %c0_60, %c0_61] : memref<9x128x128xbf16, #tpu.memory_space<vmem>>, vector<1x128x128xbf16>
    %61 = vector.shape_cast %60 : vector<1x128x128xbf16> to vector<128x128xbf16>
    %cst_62 = arith.constant dense<0.000000e+00> : vector<256x128xf32>
    %62 = tpu.matmul %59, %61, %cst_62 {dimension_numbers = #tpu.dot_dimension_numbers<[1], [0], [0], [1], [0, 0, 1, 1], [], []>} : vector<256x128xbf16>, vector<128x128xbf16>, vector<256x128xf32> -> vector<256x128xf32>
    %63 = arith.addf %56, %62 : vector<256x128xf32>
    %c0_63 = arith.constant 0 : index
    %c0_64 = arith.constant 0 : index
    %64 = vector.load %arg3[%c0_63, %c0_64] : memref<1x128xf32, #tpu.memory_space<vmem>>, vector<1x128xf32>
    %65 = vector.broadcast %64 : vector<1x128xf32> to vector<256x128xf32>
    %66 = arith.mulf %63, %65 : vector<256x128xf32>
    %c0_65 = arith.constant 0 : index
    %c0_66 = arith.constant 0 : index
    %67 = vector.load %arg4[%c0_65, %c0_66] : memref<1x128xf32, #tpu.memory_space<vmem>>, vector<1x128xf32>
    %68 = vector.broadcast %67 : vector<1x128xf32> to vector<256x128xf32>
    %69 = arith.addf %66, %68 : vector<256x128xf32>
    %cst_67 = arith.constant 0.000000e+00 : f32
    %70 = vector.broadcast %cst_67 : f32 to vector<256x128xf32>
    %71 = arith.maximumf %69, %70 : vector<256x128xf32>
    %72 = vector.shape_cast %71 : vector<256x128xf32> to vector<16x16x128xf32>
    %73 = arith.truncf %72 : vector<16x16x128xf32> to vector<16x16x128xbf16>
    %c0_68 = arith.constant 0 : index
    %c0_69 = arith.constant 0 : index
    %c0_70 = arith.constant 0 : index
    %c0_71 = arith.constant 0 : index
    %74 = vector.load %arg5[%c0_68, %c0_69, %c0_70, %c0_71] : memref<1x16x16x128xbf16, #tpu.memory_space<vmem>>, vector<1x16x16x128xbf16>
    %75 = vector.shape_cast %74 : vector<1x16x16x128xbf16> to vector<16x16x128xbf16>
    %76 = vector.shape_cast %73 : vector<16x16x128xbf16> to vector<1x16x16x128xbf16>
    tpu.vector_store %arg5[%c0_68, %c0_69, %c0_70, %c0_71], %76 {strides = array<i32>} : memref<1x16x16x128xbf16, #tpu.memory_space<vmem>>, vector<1x16x16x128xbf16>,
    return
  }
  func.func @transform_0(%arg0: i32) -> (i32, i32, i32, i32) {
    %c0_i32 = arith.constant 0 : i32
    %c0_i32_0 = arith.constant 0 : i32
    %c0_i32_1 = arith.constant 0 : i32
    %c0_i32_2 = arith.constant 0 : i32
    return %arg0, %c0_i32, %c0_i32_0, %c0_i32_1 : i32, i32, i32, i32
  }
  func.func @transform_1(%arg0: i32) -> (i32, i32, i32) {
    %c0_i32 = arith.constant 0 : i32
    %c0_i32_0 = arith.constant 0 : i32
    %c0_i32_1 = arith.constant 0 : i32
    %c0_i32_2 = arith.constant 0 : i32
    return %c0_i32, %c0_i32_0, %c0_i32_1 : i32, i32, i32
  }
  func.func @transform_2(%arg0: i32) -> (i32, i32) {
    %c0_i32 = arith.constant 0 : i32
    %c0_i32_0 = arith.constant 0 : i32
    %c0_i32_1 = arith.constant 0 : i32
    return %c0_i32, %c0_i32_0 : i32, i32
  }
  func.func @transform_3(%arg0: i32) -> (i32, i32) {
    %c0_i32 = arith.constant 0 : i32
    %c0_i32_0 = arith.constant 0 : i32
    %c0_i32_1 = arith.constant 0 : i32
    return %c0_i32, %c0_i32_0 : i32, i32
  }
  func.func @transform_4(%arg0: i32) -> (i32, i32, i32, i32) {
    %c0_i32 = arith.constant 0 : i32
    %c0_i32_0 = arith.constant 0 : i32
    %c0_i32_1 = arith.constant 0 : i32
    %c0_i32_2 = arith.constant 0 : i32
    return %arg0, %c0_i32, %c0_i32_0, %c0_i32_1 : i32, i32, i32, i32
  }
}

module attributes {stable_mosaic.version = 11 : i64} {
  func.func @_conv_bn_relu_kernel(%arg0: i32, %arg1: memref<4x9x9x128xbf16, #tpu.memory_space<vmem>>, %arg2: memref<9x128x128xbf16, #tpu.memory_space<vmem>>, %arg3: memref<1x128xf32, #tpu.memory_space<vmem>>, %arg4: memref<1x128xf32, #tpu.memory_space<vmem>>, %arg5: memref<1x8x8x128xf32, #tpu.memory_space<vmem>>) attributes {dimension_semantics = [#tpu.dimension_semantics<parallel>], iteration_bounds = array<i64: 2>, scalar_prefetch = 0 : i64, scratch_operands = 0 : i64, tpu.core_type = #tpu.core_type<tc>, window_params = [{transform_indices = @transform_0, window_bounds = array<i64: 4, 9, 9, 128>}, {pipeline_mode = #tpu.pipeline_mode<synchronous>, transform_indices = @transform_1, window_bounds = array<i64: 9, 128, 128>}, {pipeline_mode = #tpu.pipeline_mode<synchronous>, transform_indices = @transform_2, window_bounds = array<i64: 1, 128>}, {pipeline_mode = #tpu.pipeline_mode<synchronous>, transform_indices = @transform_3, window_bounds = array<i64: 1, 128>}, {transform_indices = @transform_4, window_bounds = array<i64: 1, 8, 8, 128>}]} {
    %cst = arith.constant 0.000000e+00 : f32
    %0 = vector.broadcast %cst : f32 to vector<64x128xf32>
    %c0 = arith.constant 0 : index
    %c0_0 = arith.constant 0 : index
    %c0_1 = arith.constant 0 : index
    %c0_2 = arith.constant 0 : index
    %1 = vector.load %arg1[%c0, %c0_0, %c0_1, %c0_2] : memref<4x9x9x128xbf16, #tpu.memory_space<vmem>>, vector<1x8x8x128xbf16>
    %2 = vector.shape_cast %1 : vector<1x8x8x128xbf16> to vector<8x8x128xbf16>
    %3 = vector.shape_cast %2 : vector<8x8x128xbf16> to vector<64x128xbf16>
    %c0_3 = arith.constant 0 : index
    %c0_4 = arith.constant 0 : index
    %c0_5 = arith.constant 0 : index
    %4 = vector.load %arg2[%c0_3, %c0_4, %c0_5] : memref<9x128x128xbf16, #tpu.memory_space<vmem>>, vector<1x128x128xbf16>
    %5 = vector.shape_cast %4 : vector<1x128x128xbf16> to vector<128x128xbf16>
    %cst_6 = arith.constant dense<0.000000e+00> : vector<64x128xf32>
    %6 = tpu.matmul %3, %5, %cst_6 {dimension_numbers = #tpu.dot_dimension_numbers<[1], [0], [0], [1], [0, 0, 1, 1], [], []>} : vector<64x128xbf16>, vector<128x128xbf16>, vector<64x128xf32> -> vector<64x128xf32>
    %7 = arith.addf %0, %6 : vector<64x128xf32>
    %c1 = arith.constant 1 : index
    %c0_7 = arith.constant 0 : index
    %c0_8 = arith.constant 0 : index
    %c0_9 = arith.constant 0 : index
    %8 = vector.load %arg1[%c1, %c0_7, %c0_8, %c0_9] : memref<4x9x9x128xbf16, #tpu.memory_space<vmem>>, vector<1x8x8x128xbf16>
    %9 = vector.shape_cast %8 : vector<1x8x8x128xbf16> to vector<8x8x128xbf16>
    %10 = vector.shape_cast %9 : vector<8x8x128xbf16> to vector<64x128xbf16>
    %c1_10 = arith.constant 1 : index
    %c0_11 = arith.constant 0 : index
    %c0_12 = arith.constant 0 : index
    %11 = vector.load %arg2[%c1_10, %c0_11, %c0_12] : memref<9x128x128xbf16, #tpu.memory_space<vmem>>, vector<1x128x128xbf16>
    %12 = vector.shape_cast %11 : vector<1x128x128xbf16> to vector<128x128xbf16>
    %cst_13 = arith.constant dense<0.000000e+00> : vector<64x128xf32>
    %13 = tpu.matmul %10, %12, %cst_13 {dimension_numbers = #tpu.dot_dimension_numbers<[1], [0], [0], [1], [0, 0, 1, 1], [], []>} : vector<64x128xbf16>, vector<128x128xbf16>, vector<64x128xf32> -> vector<64x128xf32>
    %14 = arith.addf %7, %13 : vector<64x128xf32>
    %c0_14 = arith.constant 0 : index
    %c0_15 = arith.constant 0 : index
    %c1_16 = arith.constant 1 : index
    %c0_17 = arith.constant 0 : index
    %15 = vector.load %arg1[%c0_14, %c0_15, %c1_16, %c0_17] : memref<4x9x9x128xbf16, #tpu.memory_space<vmem>>, vector<1x8x8x128xbf16>
    %16 = vector.shape_cast %15 : vector<1x8x8x128xbf16> to vector<8x8x128xbf16>
    %17 = vector.shape_cast %16 : vector<8x8x128xbf16> to vector<64x128xbf16>
    %c2 = arith.constant 2 : index
    %c0_18 = arith.constant 0 : index
    %c0_19 = arith.constant 0 : index
    %18 = vector.load %arg2[%c2, %c0_18, %c0_19] : memref<9x128x128xbf16, #tpu.memory_space<vmem>>, vector<1x128x128xbf16>
    %19 = vector.shape_cast %18 : vector<1x128x128xbf16> to vector<128x128xbf16>
    %cst_20 = arith.constant dense<0.000000e+00> : vector<64x128xf32>
    %20 = tpu.matmul %17, %19, %cst_20 {dimension_numbers = #tpu.dot_dimension_numbers<[1], [0], [0], [1], [0, 0, 1, 1], [], []>} : vector<64x128xbf16>, vector<128x128xbf16>, vector<64x128xf32> -> vector<64x128xf32>
    %21 = arith.addf %14, %20 : vector<64x128xf32>
    %c2_21 = arith.constant 2 : index
    %c0_22 = arith.constant 0 : index
    %c0_23 = arith.constant 0 : index
    %c0_24 = arith.constant 0 : index
    %22 = vector.load %arg1[%c2_21, %c0_22, %c0_23, %c0_24] : memref<4x9x9x128xbf16, #tpu.memory_space<vmem>>, vector<1x8x8x128xbf16>
    %23 = vector.shape_cast %22 : vector<1x8x8x128xbf16> to vector<8x8x128xbf16>
    %24 = vector.shape_cast %23 : vector<8x8x128xbf16> to vector<64x128xbf16>
    %c3 = arith.constant 3 : index
    %c0_25 = arith.constant 0 : index
    %c0_26 = arith.constant 0 : index
    %25 = vector.load %arg2[%c3, %c0_25, %c0_26] : memref<9x128x128xbf16, #tpu.memory_space<vmem>>, vector<1x128x128xbf16>
    %26 = vector.shape_cast %25 : vector<1x128x128xbf16> to vector<128x128xbf16>
    %cst_27 = arith.constant dense<0.000000e+00> : vector<64x128xf32>
    %27 = tpu.matmul %24, %26, %cst_27 {dimension_numbers = #tpu.dot_dimension_numbers<[1], [0], [0], [1], [0, 0, 1, 1], [], []>} : vector<64x128xbf16>, vector<128x128xbf16>, vector<64x128xf32> -> vector<64x128xf32>
    %28 = arith.addf %21, %27 : vector<64x128xf32>
    %c3_28 = arith.constant 3 : index
    %c0_29 = arith.constant 0 : index
    %c0_30 = arith.constant 0 : index
    %c0_31 = arith.constant 0 : index
    %29 = vector.load %arg1[%c3_28, %c0_29, %c0_30, %c0_31] : memref<4x9x9x128xbf16, #tpu.memory_space<vmem>>, vector<1x8x8x128xbf16>
    %30 = vector.shape_cast %29 : vector<1x8x8x128xbf16> to vector<8x8x128xbf16>
    %31 = vector.shape_cast %30 : vector<8x8x128xbf16> to vector<64x128xbf16>
    %c4 = arith.constant 4 : index
    %c0_32 = arith.constant 0 : index
    %c0_33 = arith.constant 0 : index
    %32 = vector.load %arg2[%c4, %c0_32, %c0_33] : memref<9x128x128xbf16, #tpu.memory_space<vmem>>, vector<1x128x128xbf16>
    %33 = vector.shape_cast %32 : vector<1x128x128xbf16> to vector<128x128xbf16>
    %cst_34 = arith.constant dense<0.000000e+00> : vector<64x128xf32>
    %34 = tpu.matmul %31, %33, %cst_34 {dimension_numbers = #tpu.dot_dimension_numbers<[1], [0], [0], [1], [0, 0, 1, 1], [], []>} : vector<64x128xbf16>, vector<128x128xbf16>, vector<64x128xf32> -> vector<64x128xf32>
    %35 = arith.addf %28, %34 : vector<64x128xf32>
    %c2_35 = arith.constant 2 : index
    %c0_36 = arith.constant 0 : index
    %c1_37 = arith.constant 1 : index
    %c0_38 = arith.constant 0 : index
    %36 = vector.load %arg1[%c2_35, %c0_36, %c1_37, %c0_38] : memref<4x9x9x128xbf16, #tpu.memory_space<vmem>>, vector<1x8x8x128xbf16>
    %37 = vector.shape_cast %36 : vector<1x8x8x128xbf16> to vector<8x8x128xbf16>
    %38 = vector.shape_cast %37 : vector<8x8x128xbf16> to vector<64x128xbf16>
    %c5 = arith.constant 5 : index
    %c0_39 = arith.constant 0 : index
    %c0_40 = arith.constant 0 : index
    %39 = vector.load %arg2[%c5, %c0_39, %c0_40] : memref<9x128x128xbf16, #tpu.memory_space<vmem>>, vector<1x128x128xbf16>
    %40 = vector.shape_cast %39 : vector<1x128x128xbf16> to vector<128x128xbf16>
    %cst_41 = arith.constant dense<0.000000e+00> : vector<64x128xf32>
    %41 = tpu.matmul %38, %40, %cst_41 {dimension_numbers = #tpu.dot_dimension_numbers<[1], [0], [0], [1], [0, 0, 1, 1], [], []>} : vector<64x128xbf16>, vector<128x128xbf16>, vector<64x128xf32> -> vector<64x128xf32>
    %42 = arith.addf %35, %41 : vector<64x128xf32>
    %c0_42 = arith.constant 0 : index
    %c1_43 = arith.constant 1 : index
    %c0_44 = arith.constant 0 : index
    %c0_45 = arith.constant 0 : index
    %43 = vector.load %arg1[%c0_42, %c1_43, %c0_44, %c0_45] : memref<4x9x9x128xbf16, #tpu.memory_space<vmem>>, vector<1x8x8x128xbf16>
    %44 = vector.shape_cast %43 : vector<1x8x8x128xbf16> to vector<8x8x128xbf16>
    %45 = vector.shape_cast %44 : vector<8x8x128xbf16> to vector<64x128xbf16>
    %c6 = arith.constant 6 : index
    %c0_46 = arith.constant 0 : index
    %c0_47 = arith.constant 0 : index
    %46 = vector.load %arg2[%c6, %c0_46, %c0_47] : memref<9x128x128xbf16, #tpu.memory_space<vmem>>, vector<1x128x128xbf16>
    %47 = vector.shape_cast %46 : vector<1x128x128xbf16> to vector<128x128xbf16>
    %cst_48 = arith.constant dense<0.000000e+00> : vector<64x128xf32>
    %48 = tpu.matmul %45, %47, %cst_48 {dimension_numbers = #tpu.dot_dimension_numbers<[1], [0], [0], [1], [0, 0, 1, 1], [], []>} : vector<64x128xbf16>, vector<128x128xbf16>, vector<64x128xf32> -> vector<64x128xf32>
    %49 = arith.addf %42, %48 : vector<64x128xf32>
    %c1_49 = arith.constant 1 : index
    %c1_50 = arith.constant 1 : index
    %c0_51 = arith.constant 0 : index
    %c0_52 = arith.constant 0 : index
    %50 = vector.load %arg1[%c1_49, %c1_50, %c0_51, %c0_52] : memref<4x9x9x128xbf16, #tpu.memory_space<vmem>>, vector<1x8x8x128xbf16>
    %51 = vector.shape_cast %50 : vector<1x8x8x128xbf16> to vector<8x8x128xbf16>
    %52 = vector.shape_cast %51 : vector<8x8x128xbf16> to vector<64x128xbf16>
    %c7 = arith.constant 7 : index
    %c0_53 = arith.constant 0 : index
    %c0_54 = arith.constant 0 : index
    %53 = vector.load %arg2[%c7, %c0_53, %c0_54] : memref<9x128x128xbf16, #tpu.memory_space<vmem>>, vector<1x128x128xbf16>
    %54 = vector.shape_cast %53 : vector<1x128x128xbf16> to vector<128x128xbf16>
    %cst_55 = arith.constant dense<0.000000e+00> : vector<64x128xf32>
    %55 = tpu.matmul %52, %54, %cst_55 {dimension_numbers = #tpu.dot_dimension_numbers<[1], [0], [0], [1], [0, 0, 1, 1], [], []>} : vector<64x128xbf16>, vector<128x128xbf16>, vector<64x128xf32> -> vector<64x128xf32>
    %56 = arith.addf %49, %55 : vector<64x128xf32>
    %c0_56 = arith.constant 0 : index
    %c1_57 = arith.constant 1 : index
    %c1_58 = arith.constant 1 : index
    %c0_59 = arith.constant 0 : index
    %57 = vector.load %arg1[%c0_56, %c1_57, %c1_58, %c0_59] : memref<4x9x9x128xbf16, #tpu.memory_space<vmem>>, vector<1x8x8x128xbf16>
    %58 = vector.shape_cast %57 : vector<1x8x8x128xbf16> to vector<8x8x128xbf16>
    %59 = vector.shape_cast %58 : vector<8x8x128xbf16> to vector<64x128xbf16>
    %c8 = arith.constant 8 : index
    %c0_60 = arith.constant 0 : index
    %c0_61 = arith.constant 0 : index
    %60 = vector.load %arg2[%c8, %c0_60, %c0_61] : memref<9x128x128xbf16, #tpu.memory_space<vmem>>, vector<1x128x128xbf16>
    %61 = vector.shape_cast %60 : vector<1x128x128xbf16> to vector<128x128xbf16>
    %cst_62 = arith.constant dense<0.000000e+00> : vector<64x128xf32>
    %62 = tpu.matmul %59, %61, %cst_62 {dimension_numbers = #tpu.dot_dimension_numbers<[1], [0], [0], [1], [0, 0, 1, 1], [], []>} : vector<64x128xbf16>, vector<128x128xbf16>, vector<64x128xf32> -> vector<64x128xf32>
    %63 = arith.addf %56, %62 : vector<64x128xf32>
    %c0_63 = arith.constant 0 : index
    %c0_64 = arith.constant 0 : index
    %64 = vector.load %arg3[%c0_63, %c0_64] : memref<1x128xf32, #tpu.memory_space<vmem>>, vector<1x128xf32>
    %65 = vector.broadcast %64 : vector<1x128xf32> to vector<64x128xf32>
    %66 = arith.mulf %63, %65 : vector<64x128xf32>
    %c0_65 = arith.constant 0 : index
    %c0_66 = arith.constant 0 : index
    %67 = vector.load %arg4[%c0_65, %c0_66] : memref<1x128xf32, #tpu.memory_space<vmem>>, vector<1x128xf32>
    %68 = vector.broadcast %67 : vector<1x128xf32> to vector<64x128xf32>
    %69 = arith.addf %66, %68 : vector<64x128xf32>
    %cst_67 = arith.constant 0.000000e+00 : f32
    %70 = vector.broadcast %cst_67 : f32 to vector<64x128xf32>
    %71 = arith.maximumf %69, %70 : vector<64x128xf32>
    %72 = vector.shape_cast %71 : vector<64x128xf32> to vector<8x8x128xf32>
    %c0_68 = arith.constant 0 : index
    %c0_69 = arith.constant 0 : index
    %c0_70 = arith.constant 0 : index
    %c0_71 = arith.constant 0 : index
    %73 = vector.load %arg5[%c0_68, %c0_69, %c0_70, %c0_71] : memref<1x8x8x128xf32, #tpu.memory_space<vmem>>, vector<1x8x8x128xf32>
    %74 = vector.shape_cast %73 : vector<1x8x8x128xf32> to vector<8x8x128xf32>
    %75 = vector.shape_cast %72 : vector<8x8x128xf32> to vector<1x8x8x128xf32>
    tpu.vector_store %arg5[%c0_68, %c0_69, %c0_70, %c0_71], %75 {strides = array<i32>} : memref<1x8x8x128xf32, #tpu.memory_space<vmem>>, vector<1x8x8x128xf32>,
    return
  }
  func.func @transform_0(%arg0: i32) -> (i32, i32, i32, i32) {
    %c0_i32 = arith.constant 0 : i32
    %c0_i32_0 = arith.constant 0 : i32
    %c0_i32_1 = arith.constant 0 : i32
    %c0_i32_2 = arith.constant 0 : i32
    return %arg0, %c0_i32, %c0_i32_0, %c0_i32_1 : i32, i32, i32, i32
  }
  func.func @transform_1(%arg0: i32) -> (i32, i32, i32) {
    %c0_i32 = arith.constant 0 : i32
    %c0_i32_0 = arith.constant 0 : i32
    %c0_i32_1 = arith.constant 0 : i32
    %c0_i32_2 = arith.constant 0 : i32
    return %c0_i32, %c0_i32_0, %c0_i32_1 : i32, i32, i32
  }
  func.func @transform_2(%arg0: i32) -> (i32, i32) {
    %c0_i32 = arith.constant 0 : i32
    %c0_i32_0 = arith.constant 0 : i32
    %c0_i32_1 = arith.constant 0 : i32
    return %c0_i32, %c0_i32_0 : i32, i32
  }
  func.func @transform_3(%arg0: i32) -> (i32, i32) {
    %c0_i32 = arith.constant 0 : i32
    %c0_i32_0 = arith.constant 0 : i32
    %c0_i32_1 = arith.constant 0 : i32
    return %c0_i32, %c0_i32_0 : i32, i32
  }
  func.func @transform_4(%arg0: i32) -> (i32, i32, i32, i32) {
    %c0_i32 = arith.constant 0 : i32
    %c0_i32_0 = arith.constant 0 : i32
    %c0_i32_1 = arith.constant 0 : i32
    %c0_i32_2 = arith.constant 0 : i32
    return %arg0, %c0_i32, %c0_i32_0, %c0_i32_1 : i32, i32, i32, i32
  }
}

</mosaic_0001>

<llo_original>
// kernel: inception_branch_factorization1_forward.3
$region0: #{inception_branch_factorization1_forward.3}
  #allocation0 [shape = 'u32[]', space=smem, size = 0x4, offset = 0x4, fixed_abs, tag = 'smem constant byte address 0x4 - core index']
  #allocation1 [shape = 'u32[72,128]{1,0:T(1,128)}', space=vmem, size = 0x9000, scoped, tag = 'internal scratch']
  %s0 = inlined_call_operand.vmem [shape: bf16[2,16,16,128], index: 0, kind: input, shape index: {}]
  %s1 = inlined_call_operand.vmem [shape: bf16[1,128,128], index: 1, kind: input, shape index: {}]
  %s2 = inlined_call_operand.vmem [shape: f32[1,128], index: 2, kind: input, shape index: {}]
  %s3 = inlined_call_operand.vmem [shape: f32[1,128], index: 3, kind: input, shape index: {}]
  %s4 = inlined_call_operand.vmem [shape: bf16[2,16,16,128], index: 4, kind: output, shape index: {}]
  %s5 = sld [smem:[#allocation0]]
  $region49: #{inception_branch_factorization1_forward.3} parent=0
    _
  %s7 = ssub.s32 1, %s5
  %s8 = scalar_select 0, %s7, %s5
  loop: start=0, step=1, limit=4
  $region2: #{inception_branch_factorization1_forward.3} parent=0 // loop_pre_header
    _
  $region3: #{inception_branch_factorization1_forward.3} parent=0 // loop_header
    %s10 = sphi 0, %s14
    %p11 = scmp.ge.s32.totalorder %s10, 4
    %s20 = sphi 0, %s22
    %s23 = sphi 0, %s20
    %s24 = sphi 0, %s23
    %s40 = sphi 0, %s24
    %s44 = sphi 0, %s44
    %s46 = sphi 0, %s44
    %s47 = sphi 0, %s46
    %s61 = sphi 0, %s47
    %s65 = sphi 0, %s65
    %s67 = sphi 0, %s65
    %s68 = sphi 0, %s67
    %s82 = sphi 0, %s68
    %s86 = sphi 0, %s86
    %s88 = sphi 0, %s86
    %s89 = sphi 0, %s88
    %s103 = sphi 0, %s89
    %s109 = sphi 0, %s111
    %s112 = sphi 0, %s109
    %s113 = sphi 0, %s112
    %s129 = sphi 0, %s113
  $region4: #{inception_branch_factorization1_forward.3} parent=0 // loop_header_branch
    %13 = sbr.rel (%p11) target = $region8
  $region5: #{inception_branch_factorization1_forward.3} parent=0 // loop_body
    %s15 = ssub.s32 %s10, 1
    %s16 = ssub.s32 %s10, 2
    %s17 = sadd.s32 %s10, 1
    %s18 = ssub.s32 %s10, %s17
    %p19 = scmp.eq.s32.totalorder %s18, 0
    %s21 = sadd.s32 %s20, 1
    %s22 = scalar_select %p19, %s20, %s21
    %p25 = pneg %p19
    %p26 = scmp.eq.s32.totalorder %s10, 1
    %p27 = por %p25, %p26
    %p28 = scmp.ne.s32.totalorder %s20, %s23
    %p29 = scmp.eq.s32.totalorder %s10, 0
    %p30 = por %p28, %p29
    %p31 = scmp.ne.s32.totalorder %s20, %s23
    %p32 = scmp.eq.s32.totalorder %s15, 1
    %p33 = por %p31, %p32
    %p34 = scmp.ne.s32.totalorder %s23, %s24
    %p35 = scmp.eq.s32.totalorder %s15, 0
    %p36 = por %p34, %p35
    %p37 = scmp.ne.s32.totalorder %s23, %s24
    %p38 = scmp.eq.s32.totalorder %s16, 1
    %p39 = por %p37, %p38
    %p41 = scmp.ne.s32.totalorder %s24, %s40
    %p42 = scmp.eq.s32.totalorder %s16, 0
    %p43 = por %p41, %p42
    %s45 = sadd.s32 %s44, 1
    %p48 = scmp.eq.s32.totalorder %s10, 1
    %p49 = scmp.ne.s32.totalorder %s44, %s46
    %p50 = scmp.eq.s32.totalorder %s10, 0
    %p51 = por %p49, %p50
    %p52 = scmp.ne.s32.totalorder %s44, %s46
    %p53 = scmp.eq.s32.totalorder %s15, 1
    %p54 = por %p52, %p53
    %p55 = scmp.ne.s32.totalorder %s46, %s47
    %p56 = scmp.eq.s32.totalorder %s15, 0
    %p57 = por %p55, %p56
    %p58 = scmp.ne.s32.totalorder %s46, %s47
    %p59 = scmp.eq.s32.totalorder %s16, 1
    %p60 = por %p58, %p59
    %p62 = scmp.ne.s32.totalorder %s47, %s61
    %p63 = scmp.eq.s32.totalorder %s16, 0
    %p64 = por %p62, %p63
    %s66 = sadd.s32 %s65, 1
    %p69 = scmp.eq.s32.totalorder %s10, 1
    %p70 = scmp.ne.s32.totalorder %s65, %s67
    %p71 = scmp.eq.s32.totalorder %s10, 0
    %p72 = por %p70, %p71
    %p73 = scmp.ne.s32.totalorder %s65, %s67
    %p74 = scmp.eq.s32.totalorder %s15, 1
    %p75 = por %p73, %p74
    %p76 = scmp.ne.s32.totalorder %s67, %s68
    %p77 = scmp.eq.s32.totalorder %s15, 0
    %p78 = por %p76, %p77
    %p79 = scmp.ne.s32.totalorder %s67, %s68
    %p80 = scmp.eq.s32.totalorder %s16, 1
    %p81 = por %p79, %p80
    %p83 = scmp.ne.s32.totalorder %s68, %s82
    %p84 = scmp.eq.s32.totalorder %s16, 0
    %p85 = por %p83, %p84
    %s87 = sadd.s32 %s86, 1
    %p90 = scmp.eq.s32.totalorder %s10, 1
    %p91 = scmp.ne.s32.totalorder %s86, %s88
    %p92 = scmp.eq.s32.totalorder %s10, 0
    %p93 = por %p91, %p92
    %p94 = scmp.ne.s32.totalorder %s86, %s88
    %p95 = scmp.eq.s32.totalorder %s15, 1
    %p96 = por %p94, %p95
    %p97 = scmp.ne.s32.totalorder %s88, %s89
    %p98 = scmp.eq.s32.totalorder %s15, 0
    %p99 = por %p97, %p98
    %p100 = scmp.ne.s32.totalorder %s88, %s89
    %p101 = scmp.eq.s32.totalorder %s16, 1
    %p102 = por %p100, %p101
    %p104 = scmp.ne.s32.totalorder %s89, %s103
    %p105 = scmp.eq.s32.totalorder %s16, 0
    %p106 = por %p104, %p105
    %s107 = ssub.s32 %s10, %s17
    %p108 = scmp.eq.s32.totalorder %s107, 0
    %s110 = sadd.s32 %s109, 1
    %s111 = scalar_select %p108, %s109, %s110
    %p114 = pneg %p108
    %p115 = scmp.eq.s32.totalorder %s10, 1
    %p116 = por %p114, %p115
    %p117 = scmp.ne.s32.totalorder %s109, %s112
    %p118 = scmp.eq.s32.totalorder %s10, 0
    %p119 = por %p117, %p118
    %p120 = scmp.ne.s32.totalorder %s109, %s112
    %p121 = scmp.eq.s32.totalorder %s15, 1
    %p122 = por %p120, %p121
    %p123 = scmp.ne.s32.totalorder %s112, %s113
    %p124 = scmp.eq.s32.totalorder %s15, 0
    %p125 = por %p123, %p124
    %p126 = scmp.ne.s32.totalorder %s112, %s113
    %p127 = scmp.eq.s32.totalorder %s16, 1
    %p128 = por %p126, %p127
    %p130 = scmp.ne.s32.totalorder %s113, %s129
    %p131 = scmp.eq.s32.totalorder %s16, 0
    %p132 = por %p130, %p131
    %p133 = scmp.le.s32.totalorder 1, %s10
    %p134 = scmp.lt.s32.totalorder %s10, 3
    %p135 = pnand %p133, %p134
    %p136 = pneg %p135
    // Predicated region
    $region9: #{inception_branch_factorization1_forward.3} parent=5 // pred_check
      _
    $region10: #{inception_branch_factorization1_forward.3} parent=5 // pred_check_branch
      %138 = sbr.rel (%p135) target = $region12
    $region11: #{inception_branch_factorization1_forward.3} parent=5 // pred_region
      %s139 = ssub.s32 %s10, 1
      // Predicated region
      $region13: #{inception_branch_factorization1_forward.3} parent=11 // pred_check
        %p140 = pneg %p57
      $region14: #{inception_branch_factorization1_forward.3} parent=11 // pred_check_branch
        %142 = sbr.rel (%p140) target = $region16
      $region15: #{inception_branch_factorization1_forward.3} parent=11 // pred_region
        _
      $region16: #{inception_branch_factorization1_forward.3} parent=11 // pred_fallthru
        _
      // Predicated region
      $region17: #{inception_branch_factorization1_forward.3} parent=11 // pred_check
        %p143 = pneg %p78
      $region18: #{inception_branch_factorization1_forward.3} parent=11 // pred_check_branch
        %145 = sbr.rel (%p143) target = $region20
      $region19: #{inception_branch_factorization1_forward.3} parent=11 // pred_region
        _
      $region20: #{inception_branch_factorization1_forward.3} parent=11 // pred_fallthru
        _
      // Predicated region
      $region21: #{inception_branch_factorization1_forward.3} parent=11 // pred_check
        %p146 = pneg %p99
      $region22: #{inception_branch_factorization1_forward.3} parent=11 // pred_check_branch
        %148 = sbr.rel (%p146) target = $region24
      $region23: #{inception_branch_factorization1_forward.3} parent=11 // pred_region
        _
      $region24: #{inception_branch_factorization1_forward.3} parent=11 // pred_fallthru
        _
    $region12: #{inception_branch_factorization1_forward.3} parent=5 // pred_fallthru
      _
    %p149 = scmp.lt.s32.totalorder %s10, 2
    // Predicated region
    $region25: #{inception_branch_factorization1_forward.3} parent=5 // pred_check
      %p150 = pneg %p149
    $region26: #{inception_branch_factorization1_forward.3} parent=5 // pred_check_branch
      %152 = sbr.rel (%p150) target = $region28
    $region27: #{inception_branch_factorization1_forward.3} parent=5 // pred_region
      // Predicated region
      $region29: #{inception_branch_factorization1_forward.3} parent=27 // pred_check
        %p153 = pneg %p30
      $region30: #{inception_branch_factorization1_forward.3} parent=27 // pred_check_branch
        %155 = sbr.rel (%p153) target = $region32
      $region31: #{inception_branch_factorization1_forward.3} parent=27 // pred_region
        %p156 = scmp.lt.s32.totalorder %s10, 1
        %s157 = scalar_select %p156, %s10, 1
        %s158 = smul.addr %s157, 32
        %s159 = smul.addr %s158, 4
        %s160 = scalar_lea.vmem %s0, %s159
      $region32: #{inception_branch_factorization1_forward.3} parent=27 // pred_fallthru
        _
    $region28: #{inception_branch_factorization1_forward.3} parent=5 // pred_fallthru
      _
    %p161 = scmp.le.s32.totalorder 1, %s10
    %p162 = scmp.lt.s32.totalorder %s10, 3
    %p163 = pnand %p161, %p162
    %p164 = pneg %p163
    // Predicated region
    $region33: #{inception_branch_factorization1_forward.3} parent=5 // pred_check
      _
    $region34: #{inception_branch_factorization1_forward.3} parent=5 // pred_check_branch
      %166 = sbr.rel (%p163) target = $region36
    $region35: #{inception_branch_factorization1_forward.3} parent=5 // pred_region
      %s167 = ssub.s32 %s10, 1
      %p168 = scmp.lt.s32.totalorder %s15, 1
      %s169 = scalar_select %p168, %s15, 1
      %s170 = smul.addr %s169, 32
      %s171 = smul.addr %s170, 4
      %s172 = scalar_lea.vmem %s0, %s171
      %p173 = pneg %p36
      %p174 = pneg %p33
      %p175 = pneg %p57
      %p176 = pneg %p54
      %p177 = pneg %p78
      %p178 = pneg %p75
      %p179 = pneg %p99
      %p180 = pneg %p96
      %p181 = pneg %p125
      %p182 = pneg %p122
      %p183 = scmp.lt.s32.totalorder %s15, 1
      %s184 = scalar_select %p183, %s15, 1
      %s185 = smul.addr %s184, 32
      %s186 = smul.addr %s185, 4
      %s187 = scalar_lea.vmem %s4, %s186
      %p188 = scmp.lt.s32.totalorder %s15, 1
      %s189 = scalar_select %p188, %s15, 1
      %s190 = smul.addr %s189, 32
      %s191 = smul.addr %s190, 4
      %s192 = scalar_lea.vmem %s0, %s191
      %p193 = scmp.lt.s32.totalorder %s15, 1
      %s194 = scalar_select %p193, %s15, 1
      %s195 = smul.addr %s194, 32
      %s196 = smul.addr %s195, 4
      %s197 = scalar_lea.vmem %s4, %s196
      %v198 = vld [vmem:[%s192] sm:$0xf]
      %v199 = vld [vmem:[%s192 + $0x4] sm:$0xf]
      %v200 = vld [vmem:[%s192 + $0x8] sm:$0xf]
      %v201 = vld [vmem:[%s192 + $0xc] sm:$0xf]
      %v202 = vld [vmem:[%s192 + $0x10] sm:$0xf]
      %v203 = vld [vmem:[%s192 + $0x14] sm:$0xf]
      %v204 = vld [vmem:[%s192 + $0x18] sm:$0xf]
      %v205 = vld [vmem:[%s192 + $0x1c] sm:$0xf]
      %v206 = vld [vmem:[%s192 + $0x20] sm:$0xf]
      %v207 = vld [vmem:[%s192 + $0x24] sm:$0xf]
      %v208 = vld [vmem:[%s192 + $0x28] sm:$0xf]
      %v209 = vld [vmem:[%s192 + $0x2c] sm:$0xf]
      %v210 = vld [vmem:[%s192 + $0x30] sm:$0xf]
      %v211 = vld [vmem:[%s192 + $0x34] sm:$0xf]
      %v212 = vld [vmem:[%s192 + $0x38] sm:$0xf]
      %v213 = vld [vmem:[%s192 + $0x3c] sm:$0xf]
      %v214 = vld [vmem:[%s192 + $0x40] sm:$0xf]
      %v215 = vld [vmem:[%s192 + $0x44] sm:$0xf]
      %v216 = vld [vmem:[%s192 + $0x48] sm:$0xf]
      %v217 = vld [vmem:[%s192 + $0x4c] sm:$0xf]
      %v218 = vld [vmem:[%s192 + $0x50] sm:$0xf]
      %v219 = vld [vmem:[%s192 + $0x54] sm:$0xf]
      %v220 = vld [vmem:[%s192 + $0x58] sm:$0xf]
      %v221 = vld [vmem:[%s192 + $0x5c] sm:$0xf]
      %v222 = vld [vmem:[%s192 + $0x60] sm:$0xf]
      %v223 = vld [vmem:[%s192 + $0x64] sm:$0xf]
      %v224 = vld [vmem:[%s192 + $0x68] sm:$0xf]
      %v225 = vld [vmem:[%s192 + $0x6c] sm:$0xf]
      %v226 = vld [vmem:[%s192 + $0x70] sm:$0xf]
      %v227 = vld [vmem:[%s192 + $0x74] sm:$0xf]
      %v228 = vld [vmem:[%s192 + $0x78] sm:$0xf]
      %v229 = vld [vmem:[%s192 + $0x7c] sm:$0xf]
      %v230 = vld [vmem:[%s1] sm:$0xf]
      %v231 = vld [vmem:[%s1 + $0x4] sm:$0xf]
      %v232 = vld [vmem:[%s1 + $0x8] sm:$0xf]
      %v233 = vld [vmem:[%s1 + $0xc] sm:$0xf]
      %v234 = vld [vmem:[%s1 + $0x10] sm:$0xf]
      %v235 = vld [vmem:[%s1 + $0x14] sm:$0xf]
      %v236 = vld [vmem:[%s1 + $0x18] sm:$0xf]
      %v237 = vld [vmem:[%s1 + $0x1c] sm:$0xf]
      %v238 = vld [vmem:[%s1 + $0x20] sm:$0xf]
      %v239 = vld [vmem:[%s1 + $0x24] sm:$0xf]
      %v240 = vld [vmem:[%s1 + $0x28] sm:$0xf]
      %v241 = vld [vmem:[%s1 + $0x2c] sm:$0xf]
      %v242 = vld [vmem:[%s1 + $0x30] sm:$0xf]
      %v243 = vld [vmem:[%s1 + $0x34] sm:$0xf]
      %v244 = vld [vmem:[%s1 + $0x38] sm:$0xf]
      %v245 = vld [vmem:[%s1 + $0x3c] sm:$0xf]
      %v278 = vunpack.c.l.b16 %v198
      %v279 = vunpack.c.l.b16 %v199
      %v280 = vunpack.c.l.b16 %v200
      %v281 = vunpack.c.l.b16 %v201
      %v282 = vunpack.c.l.b16 %v202
      %v283 = vunpack.c.l.b16 %v203
      %v284 = vunpack.c.l.b16 %v204
      %v285 = vunpack.c.l.b16 %v205
      %v286 = vunpack.c.l.b16 %v206
      %v287 = vunpack.c.l.b16 %v207
      %v288 = vunpack.c.l.b16 %v208
      %v289 = vunpack.c.l.b16 %v209
      %v290 = vunpack.c.l.b16 %v210
      %v291 = vunpack.c.l.b16 %v211
      %v292 = vunpack.c.l.b16 %v212
      %v293 = vunpack.c.l.b16 %v213
      %v294 = vunpack.c.l.b16 %v214
      %v295 = vunpack.c.l.b16 %v215
      %v296 = vunpack.c.l.b16 %v216
      %v297 = vunpack.c.l.b16 %v217
      %v298 = vunpack.c.l.b16 %v218
      %v299 = vunpack.c.l.b16 %v219
      %v300 = vunpack.c.l.b16 %v220
      %v301 = vunpack.c.l.b16 %v221
      %v302 = vunpack.c.l.b16 %v222
      %v303 = vunpack.c.l.b16 %v223
      %v304 = vunpack.c.l.b16 %v224
      %v305 = vunpack.c.l.b16 %v225
      %v306 = vunpack.c.l.b16 %v226
      %v307 = vunpack.c.l.b16 %v227
      %v308 = vunpack.c.l.b16 %v228
      %v309 = vunpack.c.l.b16 %v229
      %v310 = vpack.c.b16 %v279, %v278
      %v311 = vpack.c.b16 %v281, %v280
      %v312 = vpack.c.b16 %v283, %v282
      %v313 = vpack.c.b16 %v285, %v284
      %v314 = vpack.c.b16 %v287, %v286
      %v315 = vpack.c.b16 %v289, %v288
      %v316 = vpack.c.b16 %v291, %v290
      %v317 = vpack.c.b16 %v293, %v292
      %v318 = vpack.c.b16 %v295, %v294
      %v319 = vpack.c.b16 %v297, %v296
      %v320 = vpack.c.b16 %v299, %v298
      %v321 = vpack.c.b16 %v301, %v300
      %v322 = vpack.c.b16 %v303, %v302
      %v323 = vpack.c.b16 %v305, %v304
      %v324 = vpack.c.b16 %v307, %v306
      %v325 = vpack.c.b16 %v309, %v308
      %v358 = vunpack.c.l.b16 %v230
      %v359 = vunpack.c.l.b16 %v231
      %v360 = vunpack.c.l.b16 %v232
      %v361 = vunpack.c.l.b16 %v233
      %v362 = vunpack.c.l.b16 %v234
      %v363 = vunpack.c.l.b16 %v235
      %v364 = vunpack.c.l.b16 %v236
      %v365 = vunpack.c.l.b16 %v237
      %v366 = vunpack.c.l.b16 %v238
      %v367 = vunpack.c.l.b16 %v239
      %v368 = vunpack.c.l.b16 %v240
      %v369 = vunpack.c.l.b16 %v241
      %v370 = vunpack.c.l.b16 %v242
      %v371 = vunpack.c.l.b16 %v243
      %v372 = vunpack.c.l.b16 %v244
      %v373 = vunpack.c.l.b16 %v245
      %v374 = vpack.c.b16 %v359, %v358
      %v375 = vpack.c.b16 %v361, %v360
      %v376 = vpack.c.b16 %v363, %v362
      %v377 = vpack.c.b16 %v365, %v364
      %v378 = vpack.c.b16 %v367, %v366
      %v379 = vpack.c.b16 %v369, %v368
      %v380 = vpack.c.b16 %v371, %v370
      %v381 = vpack.c.b16 %v373, %v372
      %390 = vmatpush.bf16.msra.mxu0 %v381
      %391 = vmatpush.bf16.msra.mxu0 %v380
      %392 = vmatpush.bf16.msra.mxu0 %v379
      %393 = vmatpush.bf16.msra.mxu0 %v378
      %394 = vmatpush.bf16.msra.mxu0 %v377
      %395 = vmatpush.bf16.msra.mxu0 %v376
      %396 = vmatpush.bf16.msra.mxu0 %v375
      %397 = vmatpush.bf16.msra.mxu0 %v374
      %398 = vmatmul.bf16.gmra.mxu0 %v310
      %v399 = vpop.f32.mrf.mxu0
      %v400 = vadd.f32 0.0, %v399
      %v401 = vpop.f32.mrf.mxu0
      %v402 = vadd.f32 0.0, %v401
      %403 = vmatmul.bf16.gmra.mxu0 %v311
      %v404 = vpop.f32.mrf.mxu0
      %v405 = vadd.f32 0.0, %v404
      %v406 = vpop.f32.mrf.mxu0
      %v407 = vadd.f32 0.0, %v406
      %408 = vmatmul.bf16.gmra.mxu0 %v312
      %v409 = vpop.f32.mrf.mxu0
      %v410 = vadd.f32 0.0, %v409
      %v411 = vpop.f32.mrf.mxu0
      %v412 = vadd.f32 0.0, %v411
      %413 = vmatmul.bf16.gmra.mxu0 %v313
      %v414 = vpop.f32.mrf.mxu0
      %v415 = vadd.f32 0.0, %v414
      %v416 = vpop.f32.mrf.mxu0
      %v417 = vadd.f32 0.0, %v416
      %418 = vmatmul.bf16.gmra.mxu0 %v314
      %v419 = vpop.f32.mrf.mxu0
      %v420 = vadd.f32 0.0, %v419
      %v421 = vpop.f32.mrf.mxu0
      %v422 = vadd.f32 0.0, %v421
      %423 = vmatmul.bf16.gmra.mxu0 %v315
      %v424 = vpop.f32.mrf.mxu0
      %v425 = vadd.f32 0.0, %v424
      %v426 = vpop.f32.mrf.mxu0
      %v427 = vadd.f32 0.0, %v426
      %428 = vmatmul.bf16.gmra.mxu0 %v316
      %v429 = vpop.f32.mrf.mxu0
      %v430 = vadd.f32 0.0, %v429
      %v431 = vpop.f32.mrf.mxu0
      %v432 = vadd.f32 0.0, %v431
      %433 = vmatmul.bf16.gmra.mxu0 %v317
      %v434 = vpop.f32.mrf.mxu0
      %v435 = vadd.f32 0.0, %v434
      %v436 = vpop.f32.mrf.mxu0
      %v437 = vadd.f32 0.0, %v436
      %438 = vmatmul.bf16.gmra.mxu0 %v318
      %v439 = vpop.f32.mrf.mxu0
      %v440 = vadd.f32 0.0, %v439
      %v441 = vpop.f32.mrf.mxu0
      %v442 = vadd.f32 0.0, %v441
      %443 = vmatmul.bf16.gmra.mxu0 %v319
      %v444 = vpop.f32.mrf.mxu0
      %v445 = vadd.f32 0.0, %v444
      %v446 = vpop.f32.mrf.mxu0
      %v447 = vadd.f32 0.0, %v446
      %448 = vmatmul.bf16.gmra.mxu0 %v320
      %v449 = vpop.f32.mrf.mxu0
      %v450 = vadd.f32 0.0, %v449
      %v451 = vpop.f32.mrf.mxu0
      %v452 = vadd.f32 0.0, %v451
      %453 = vmatmul.bf16.gmra.mxu0 %v321
      %v454 = vpop.f32.mrf.mxu0
      %v455 = vadd.f32 0.0, %v454
      %v456 = vpop.f32.mrf.mxu0
      %v457 = vadd.f32 0.0, %v456
      %458 = vmatmul.bf16.gmra.mxu0 %v322
      %v459 = vpop.f32.mrf.mxu0
      %v460 = vadd.f32 0.0, %v459
      %v461 = vpop.f32.mrf.mxu0
      %v462 = vadd.f32 0.0, %v461
      %463 = vmatmul.bf16.gmra.mxu0 %v323
      %v464 = vpop.f32.mrf.mxu0
      %v465 = vadd.f32 0.0, %v464
      %v466 = vpop.f32.mrf.mxu0
      %v467 = vadd.f32 0.0, %v466
      %468 = vmatmul.bf16.gmra.mxu0 %v324
      %v469 = vpop.f32.mrf.mxu0
      %v470 = vadd.f32 0.0, %v469
      %v471 = vpop.f32.mrf.mxu0
      %v472 = vadd.f32 0.0, %v471
      %473 = vmatmul.bf16.gmra.mxu0 %v325
      %v474 = vpop.f32.mrf.mxu0
      %v475 = vadd.f32 0.0, %v474
      %v476 = vpop.f32.mrf.mxu0
      %v477 = vadd.f32 0.0, %v476
      %478 = vdwg.mxu0
      %v479 = vld [vmem:[%s2] sm:$0x1]
      %v481 = vperm.slane %v479, 0
      %v483 = vmul.f32 %v400, %v481
      %v484 = vmul.f32 %v402, %v481
      %v485 = vmul.f32 %v405, %v481
      %v486 = vmul.f32 %v407, %v481
      %v487 = vmul.f32 %v410, %v481
      %v488 = vmul.f32 %v412, %v481
      %v489 = vmul.f32 %v415, %v481
      %v490 = vmul.f32 %v417, %v481
      %v491 = vmul.f32 %v420, %v481
      %v492 = vmul.f32 %v422, %v481
      %v493 = vmul.f32 %v425, %v481
      %v494 = vmul.f32 %v427, %v481
      %v495 = vmul.f32 %v430, %v481
      %v496 = vmul.f32 %v432, %v481
      %v497 = vmul.f32 %v435, %v481
      %v498 = vmul.f32 %v437, %v481
      %v499 = vmul.f32 %v440, %v481
      %v500 = vmul.f32 %v442, %v481
      %v501 = vmul.f32 %v445, %v481
      %v502 = vmul.f32 %v447, %v481
      %v503 = vmul.f32 %v450, %v481
      %v504 = vmul.f32 %v452, %v481
      %v505 = vmul.f32 %v455, %v481
      %v506 = vmul.f32 %v457, %v481
      %v507 = vmul.f32 %v460, %v481
      %v508 = vmul.f32 %v462, %v481
      %v509 = vmul.f32 %v465, %v481
      %v510 = vmul.f32 %v467, %v481
      %v511 = vmul.f32 %v470, %v481
      %v512 = vmul.f32 %v472, %v481
      %v513 = vmul.f32 %v475, %v481
      %v514 = vmul.f32 %v477, %v481
      %v515 = vld [vmem:[%s3] sm:$0x1]
      %v517 = vperm.slane %v515, 0
      %v519 = vadd.f32 %v483, %v517
      %v520 = vadd.f32 %v484, %v517
      %v521 = vadd.f32 %v485, %v517
      %v522 = vadd.f32 %v486, %v517
      %v523 = vadd.f32 %v487, %v517
      %v524 = vadd.f32 %v488, %v517
      %v525 = vadd.f32 %v489, %v517
      %v526 = vadd.f32 %v490, %v517
      %v527 = vadd.f32 %v491, %v517
      %v528 = vadd.f32 %v492, %v517
      %v529 = vadd.f32 %v493, %v517
      %v530 = vadd.f32 %v494, %v517
      %v531 = vadd.f32 %v495, %v517
      %v532 = vadd.f32 %v496, %v517
      %v533 = vadd.f32 %v497, %v517
      %v534 = vadd.f32 %v498, %v517
      %v535 = vadd.f32 %v499, %v517
      %v536 = vadd.f32 %v500, %v517
      %v537 = vadd.f32 %v501, %v517
      %v538 = vadd.f32 %v502, %v517
      %v539 = vadd.f32 %v503, %v517
      %v540 = vadd.f32 %v504, %v517
      %v541 = vadd.f32 %v505, %v517
      %v542 = vadd.f32 %v506, %v517
      %v543 = vadd.f32 %v507, %v517
      %v544 = vadd.f32 %v508, %v517
      %v545 = vadd.f32 %v509, %v517
      %v546 = vadd.f32 %v510, %v517
      %v547 = vadd.f32 %v511, %v517
      %v548 = vadd.f32 %v512, %v517
      %v549 = vadd.f32 %v513, %v517
      %v550 = vadd.f32 %v514, %v517
      %v551 = vmax.f32 %v519, 0.0
      %v552 = vmax.f32 %v520, 0.0
      %v553 = vmax.f32 %v521, 0.0
      %v554 = vmax.f32 %v522, 0.0
      %v555 = vmax.f32 %v523, 0.0
      %v556 = vmax.f32 %v524, 0.0
      %v557 = vmax.f32 %v525, 0.0
      %v558 = vmax.f32 %v526, 0.0
      %v559 = vmax.f32 %v527, 0.0
      %v560 = vmax.f32 %v528, 0.0
      %v561 = vmax.f32 %v529, 0.0
      %v562 = vmax.f32 %v530, 0.0
      %v563 = vmax.f32 %v531, 0.0
      %v564 = vmax.f32 %v532, 0.0
      %v565 = vmax.f32 %v533, 0.0
      %v566 = vmax.f32 %v534, 0.0
      %v567 = vmax.f32 %v535, 0.0
      %v568 = vmax.f32 %v536, 0.0
      %v569 = vmax.f32 %v537, 0.0
      %v570 = vmax.f32 %v538, 0.0
      %v571 = vmax.f32 %v539, 0.0
      %v572 = vmax.f32 %v540, 0.0
      %v573 = vmax.f32 %v541, 0.0
      %v574 = vmax.f32 %v542, 0.0
      %v575 = vmax.f32 %v543, 0.0
      %v576 = vmax.f32 %v544, 0.0
      %v577 = vmax.f32 %v545, 0.0
      %v578 = vmax.f32 %v546, 0.0
      %v579 = vmax.f32 %v547, 0.0
      %v580 = vmax.f32 %v548, 0.0
      %v581 = vmax.f32 %v549, 0.0
      %v582 = vmax.f32 %v550, 0.0
      %v583 = vpack.c.bf16 %v551, %v551
      %v584 = vpack.c.bf16 %v552, %v552
      %v585 = vpack.c.bf16 %v553, %v553
      %v586 = vpack.c.bf16 %v554, %v554
      %v587 = vpack.c.bf16 %v555, %v555
      %v588 = vpack.c.bf16 %v556, %v556
      %v589 = vpack.c.bf16 %v557, %v557
      %v590 = vpack.c.bf16 %v558, %v558
      %v591 = vpack.c.bf16 %v559, %v559
      %v592 = vpack.c.bf16 %v560, %v560
      %v593 = vpack.c.bf16 %v561, %v561
      %v594 = vpack.c.bf16 %v562, %v562
      %v595 = vpack.c.bf16 %v563, %v563
      %v596 = vpack.c.bf16 %v564, %v564
      %v597 = vpack.c.bf16 %v565, %v565
      %v598 = vpack.c.bf16 %v566, %v566
      %v599 = vpack.c.bf16 %v567, %v567
      %v600 = vpack.c.bf16 %v568, %v568
      %v601 = vpack.c.bf16 %v569, %v569
      %v602 = vpack.c.bf16 %v570, %v570
      %v603 = vpack.c.bf16 %v571, %v571
      %v604 = vpack.c.bf16 %v572, %v572
      %v605 = vpack.c.bf16 %v573, %v573
      %v606 = vpack.c.bf16 %v574, %v574
      %v607 = vpack.c.bf16 %v575, %v575
      %v608 = vpack.c.bf16 %v576, %v576
      %v609 = vpack.c.bf16 %v577, %v577
      %v610 = vpack.c.bf16 %v578, %v578
      %v611 = vpack.c.bf16 %v579, %v579
      %v612 = vpack.c.bf16 %v580, %v580
      %v613 = vpack.c.bf16 %v581, %v581
      %v614 = vpack.c.bf16 %v582, %v582
      %615 = vst [vmem:[%s197] sm:$0xf] %v583
      %616 = vst [vmem:[%s197 + $0x4] sm:$0xf] %v584
      %617 = vst [vmem:[%s197 + $0x8] sm:$0xf] %v585
      %618 = vst [vmem:[%s197 + $0xc] sm:$0xf] %v586
      %619 = vst [vmem:[%s197 + $0x10] sm:$0xf] %v587
      %620 = vst [vmem:[%s197 + $0x14] sm:$0xf] %v588
      %621 = vst [vmem:[%s197 + $0x18] sm:$0xf] %v589
      %622 = vst [vmem:[%s197 + $0x1c] sm:$0xf] %v590
      %623 = vst [vmem:[%s197 + $0x20] sm:$0xf] %v591
      %624 = vst [vmem:[%s197 + $0x24] sm:$0xf] %v592
      %625 = vst [vmem:[%s197 + $0x28] sm:$0xf] %v593
      %626 = vst [vmem:[%s197 + $0x2c] sm:$0xf] %v594
      %627 = vst [vmem:[%s197 + $0x30] sm:$0xf] %v595
      %628 = vst [vmem:[%s197 + $0x34] sm:$0xf] %v596
      %629 = vst [vmem:[%s197 + $0x38] sm:$0xf] %v597
      %630 = vst [vmem:[%s197 + $0x3c] sm:$0xf] %v598
      %631 = vst [vmem:[%s197 + $0x40] sm:$0xf] %v599
      %632 = vst [vmem:[%s197 + $0x44] sm:$0xf] %v600
      %633 = vst [vmem:[%s197 + $0x48] sm:$0xf] %v601
      %634 = vst [vmem:[%s197 + $0x4c] sm:$0xf] %v602
      %635 = vst [vmem:[%s197 + $0x50] sm:$0xf] %v603
      %636 = vst [vmem:[%s197 + $0x54] sm:$0xf] %v604
      %637 = vst [vmem:[%s197 + $0x58] sm:$0xf] %v605
      %638 = vst [vmem:[%s197 + $0x5c] sm:$0xf] %v606
      %639 = vst [vmem:[%s197 + $0x60] sm:$0xf] %v607
      %640 = vst [vmem:[%s197 + $0x64] sm:$0xf] %v608
      %641 = vst [vmem:[%s197 + $0x68] sm:$0xf] %v609
      %642 = vst [vmem:[%s197 + $0x6c] sm:$0xf] %v610
      %643 = vst [vmem:[%s197 + $0x70] sm:$0xf] %v611
      %644 = vst [vmem:[%s197 + $0x74] sm:$0xf] %v612
      %645 = vst [vmem:[%s197 + $0x78] sm:$0xf] %v613
      %646 = vst [vmem:[%s197 + $0x7c] sm:$0xf] %v614
      %p647 = scmp.lt.s32.totalorder %s15, 1
      %s648 = scalar_select %p647, %s15, 1
      %s649 = smul.addr %s648, 32
      %s650 = smul.addr %s649, 4
      %s651 = scalar_lea.vmem %s4, %s650
      // Predicated region
      $region37: #{inception_branch_factorization1_forward.3} parent=35 // pred_check
        %p652 = pneg %p122
      $region38: #{inception_branch_factorization1_forward.3} parent=35 // pred_check_branch
        %654 = sbr.rel (%p652) target = $region40
      $region39: #{inception_branch_factorization1_forward.3} parent=35 // pred_region
        _
      $region40: #{inception_branch_factorization1_forward.3} parent=35 // pred_fallthru
        _
    $region36: #{inception_branch_factorization1_forward.3} parent=5 // pred_fallthru
      _
    %p655 = scmp.le.s32.totalorder 2, %s10
    // Predicated region
    $region41: #{inception_branch_factorization1_forward.3} parent=5 // pred_check
      %p656 = pneg %p655
    $region42: #{inception_branch_factorization1_forward.3} parent=5 // pred_check_branch
      %658 = sbr.rel (%p656) target = $region44
    $region43: #{inception_branch_factorization1_forward.3} parent=5 // pred_region
      %s659 = ssub.s32 %s10, 2
      // Predicated region
      $region45: #{inception_branch_factorization1_forward.3} parent=43 // pred_check
        %p660 = pneg %p128
      $region46: #{inception_branch_factorization1_forward.3} parent=43 // pred_check_branch
        %662 = sbr.rel (%p660) target = $region48
      $region47: #{inception_branch_factorization1_forward.3} parent=43 // pred_region
        %p663 = scmp.lt.s32.totalorder %s16, 1
        %s664 = scalar_select %p663, %s16, 1
        %s665 = smul.addr %s664, 32
        %s666 = smul.addr %s665, 4
        %s667 = scalar_lea.vmem %s4, %s666
      $region48: #{inception_branch_factorization1_forward.3} parent=43 // pred_fallthru
        _
    $region44: #{inception_branch_factorization1_forward.3} parent=5 // pred_fallthru
      _
  $region6: #{inception_branch_factorization1_forward.3} parent=0 // loop_footer
    %s14 = sadd.s32 1, %s10
  $region7: #{inception_branch_factorization1_forward.3} parent=0 // loop_footer_branch
    %9 = sbr.rel target = $region3
  $region8: #{inception_branch_factorization1_forward.3} parent=0 // loop_exit
    _

// kernel: inception_branch_factorization1_forward.5
$region0: #{inception_branch_factorization1_forward.5}
  #allocation0 [shape = 'u32[]', space=smem, size = 0x4, offset = 0x4, fixed_abs, tag = 'smem constant byte address 0x4 - core index']
  #allocation1 [shape = 'u32[72,128]{1,0:T(1,128)}', space=vmem, size = 0x9000, scoped, tag = 'internal scratch']
  %s0 = inlined_call_operand.vmem [shape: bf16[8,9,9,128], index: 0, kind: input, shape index: {}]
  %s1 = inlined_call_operand.vmem [shape: bf16[9,128,128], index: 1, kind: input, shape index: {}]
  %s2 = inlined_call_operand.vmem [shape: f32[1,128], index: 2, kind: input, shape index: {}]
  %s3 = inlined_call_operand.vmem [shape: f32[1,128], index: 3, kind: input, shape index: {}]
  %s4 = inlined_call_operand.vmem [shape: f32[2,8,8,128], index: 4, kind: output, shape index: {}]
  %s5 = sld [smem:[#allocation0]]
  $region49: #{inception_branch_factorization1_forward.5} parent=0
    _
  %s7 = ssub.s32 1, %s5
  %s8 = scalar_select 0, %s7, %s5
  loop: start=0, step=1, limit=4
  $region2: #{inception_branch_factorization1_forward.5} parent=0 // loop_pre_header
    _
  $region3: #{inception_branch_factorization1_forward.5} parent=0 // loop_header
    %s10 = sphi 0, %s14
    %p11 = scmp.ge.s32.totalorder %s10, 4
    %s20 = sphi 0, %s22
    %s23 = sphi 0, %s20
    %s24 = sphi 0, %s23
    %s40 = sphi 0, %s24
    %s44 = sphi 0, %s44
    %s46 = sphi 0, %s44
    %s47 = sphi 0, %s46
    %s61 = sphi 0, %s47
    %s65 = sphi 0, %s65
    %s67 = sphi 0, %s65
    %s68 = sphi 0, %s67
    %s82 = sphi 0, %s68
    %s86 = sphi 0, %s86
    %s88 = sphi 0, %s86
    %s89 = sphi 0, %s88
    %s103 = sphi 0, %s89
    %s109 = sphi 0, %s111
    %s112 = sphi 0, %s109
    %s113 = sphi 0, %s112
    %s129 = sphi 0, %s113
  $region4: #{inception_branch_factorization1_forward.5} parent=0 // loop_header_branch
    %13 = sbr.rel (%p11) target = $region8
  $region5: #{inception_branch_factorization1_forward.5} parent=0 // loop_body
    %s15 = ssub.s32 %s10, 1
    %s16 = ssub.s32 %s10, 2
    %s17 = sadd.s32 %s10, 1
    %s18 = ssub.s32 %s10, %s17
    %p19 = scmp.eq.s32.totalorder %s18, 0
    %s21 = sadd.s32 %s20, 1
    %s22 = scalar_select %p19, %s20, %s21
    %p25 = pneg %p19
    %p26 = scmp.eq.s32.totalorder %s10, 1
    %p27 = por %p25, %p26
    %p28 = scmp.ne.s32.totalorder %s20, %s23
    %p29 = scmp.eq.s32.totalorder %s10, 0
    %p30 = por %p28, %p29
    %p31 = scmp.ne.s32.totalorder %s20, %s23
    %p32 = scmp.eq.s32.totalorder %s15, 1
    %p33 = por %p31, %p32
    %p34 = scmp.ne.s32.totalorder %s23, %s24
    %p35 = scmp.eq.s32.totalorder %s15, 0
    %p36 = por %p34, %p35
    %p37 = scmp.ne.s32.totalorder %s23, %s24
    %p38 = scmp.eq.s32.totalorder %s16, 1
    %p39 = por %p37, %p38
    %p41 = scmp.ne.s32.totalorder %s24, %s40
    %p42 = scmp.eq.s32.totalorder %s16, 0
    %p43 = por %p41, %p42
    %s45 = sadd.s32 %s44, 1
    %p48 = scmp.eq.s32.totalorder %s10, 1
    %p49 = scmp.ne.s32.totalorder %s44, %s46
    %p50 = scmp.eq.s32.totalorder %s10, 0
    %p51 = por %p49, %p50
    %p52 = scmp.ne.s32.totalorder %s44, %s46
    %p53 = scmp.eq.s32.totalorder %s15, 1
    %p54 = por %p52, %p53
    %p55 = scmp.ne.s32.totalorder %s46, %s47
    %p56 = scmp.eq.s32.totalorder %s15, 0
    %p57 = por %p55, %p56
    %p58 = scmp.ne.s32.totalorder %s46, %s47
    %p59 = scmp.eq.s32.totalorder %s16, 1
    %p60 = por %p58, %p59
    %p62 = scmp.ne.s32.totalorder %s47, %s61
    %p63 = scmp.eq.s32.totalorder %s16, 0
    %p64 = por %p62, %p63
    %s66 = sadd.s32 %s65, 1
    %p69 = scmp.eq.s32.totalorder %s10, 1
    %p70 = scmp.ne.s32.totalorder %s65, %s67
    %p71 = scmp.eq.s32.totalorder %s10, 0
    %p72 = por %p70, %p71
    %p73 = scmp.ne.s32.totalorder %s65, %s67
    %p74 = scmp.eq.s32.totalorder %s15, 1
    %p75 = por %p73, %p74
    %p76 = scmp.ne.s32.totalorder %s67, %s68
    %p77 = scmp.eq.s32.totalorder %s15, 0
    %p78 = por %p76, %p77
    %p79 = scmp.ne.s32.totalorder %s67, %s68
    %p80 = scmp.eq.s32.totalorder %s16, 1
    %p81 = por %p79, %p80
    %p83 = scmp.ne.s32.totalorder %s68, %s82
    %p84 = scmp.eq.s32.totalorder %s16, 0
    %p85 = por %p83, %p84
    %s87 = sadd.s32 %s86, 1
    %p90 = scmp.eq.s32.totalorder %s10, 1
    %p91 = scmp.ne.s32.totalorder %s86, %s88
    %p92 = scmp.eq.s32.totalorder %s10, 0
    %p93 = por %p91, %p92
    %p94 = scmp.ne.s32.totalorder %s86, %s88
    %p95 = scmp.eq.s32.totalorder %s15, 1
    %p96 = por %p94, %p95
    %p97 = scmp.ne.s32.totalorder %s88, %s89
    %p98 = scmp.eq.s32.totalorder %s15, 0
    %p99 = por %p97, %p98
    %p100 = scmp.ne.s32.totalorder %s88, %s89
    %p101 = scmp.eq.s32.totalorder %s16, 1
    %p102 = por %p100, %p101
    %p104 = scmp.ne.s32.totalorder %s89, %s103
    %p105 = scmp.eq.s32.totalorder %s16, 0
    %p106 = por %p104, %p105
    %s107 = ssub.s32 %s10, %s17
    %p108 = scmp.eq.s32.totalorder %s107, 0
    %s110 = sadd.s32 %s109, 1
    %s111 = scalar_select %p108, %s109, %s110
    %p114 = pneg %p108
    %p115 = scmp.eq.s32.totalorder %s10, 1
    %p116 = por %p114, %p115
    %p117 = scmp.ne.s32.totalorder %s109, %s112
    %p118 = scmp.eq.s32.totalorder %s10, 0
    %p119 = por %p117, %p118
    %p120 = scmp.ne.s32.totalorder %s109, %s112
    %p121 = scmp.eq.s32.totalorder %s15, 1
    %p122 = por %p120, %p121
    %p123 = scmp.ne.s32.totalorder %s112, %s113
    %p124 = scmp.eq.s32.totalorder %s15, 0
    %p125 = por %p123, %p124
    %p126 = scmp.ne.s32.totalorder %s112, %s113
    %p127 = scmp.eq.s32.totalorder %s16, 1
    %p128 = por %p126, %p127
    %p130 = scmp.ne.s32.totalorder %s113, %s129
    %p131 = scmp.eq.s32.totalorder %s16, 0
    %p132 = por %p130, %p131
    %p133 = scmp.le.s32.totalorder 1, %s10
    %p134 = scmp.lt.s32.totalorder %s10, 3
    %p135 = pnand %p133, %p134
    %p136 = pneg %p135
    // Predicated region
    $region9: #{inception_branch_factorization1_forward.5} parent=5 // pred_check
      _
    $region10: #{inception_branch_factorization1_forward.5} parent=5 // pred_check_branch
      %138 = sbr.rel (%p135) target = $region12
    $region11: #{inception_branch_factorization1_forward.5} parent=5 // pred_region
      %s139 = ssub.s32 %s10, 1
      // Predicated region
      $region13: #{inception_branch_factorization1_forward.5} parent=11 // pred_check
        %p140 = pneg %p57
      $region14: #{inception_branch_factorization1_forward.5} parent=11 // pred_check_branch
        %142 = sbr.rel (%p140) target = $region16
      $region15: #{inception_branch_factorization1_forward.5} parent=11 // pred_region
        _
      $region16: #{inception_branch_factorization1_forward.5} parent=11 // pred_fallthru
        _
      // Predicated region
      $region17: #{inception_branch_factorization1_forward.5} parent=11 // pred_check
        %p143 = pneg %p78
      $region18: #{inception_branch_factorization1_forward.5} parent=11 // pred_check_branch
        %145 = sbr.rel (%p143) target = $region20
      $region19: #{inception_branch_factorization1_forward.5} parent=11 // pred_region
        _
      $region20: #{inception_branch_factorization1_forward.5} parent=11 // pred_fallthru
        _
      // Predicated region
      $region21: #{inception_branch_factorization1_forward.5} parent=11 // pred_check
        %p146 = pneg %p99
      $region22: #{inception_branch_factorization1_forward.5} parent=11 // pred_check_branch
        %148 = sbr.rel (%p146) target = $region24
      $region23: #{inception_branch_factorization1_forward.5} parent=11 // pred_region
        _
      $region24: #{inception_branch_factorization1_forward.5} parent=11 // pred_fallthru
        _
    $region12: #{inception_branch_factorization1_forward.5} parent=5 // pred_fallthru
      _
    %p149 = scmp.lt.s32.totalorder %s10, 2
    // Predicated region
    $region25: #{inception_branch_factorization1_forward.5} parent=5 // pred_check
      %p150 = pneg %p149
    $region26: #{inception_branch_factorization1_forward.5} parent=5 // pred_check_branch
      %152 = sbr.rel (%p150) target = $region28
    $region27: #{inception_branch_factorization1_forward.5} parent=5 // pred_region
      // Predicated region
      $region29: #{inception_branch_factorization1_forward.5} parent=27 // pred_check
        %p153 = pneg %p30
      $region30: #{inception_branch_factorization1_forward.5} parent=27 // pred_check_branch
        %155 = sbr.rel (%p153) target = $region32
      $region31: #{inception_branch_factorization1_forward.5} parent=27 // pred_region
        %s156 = smul.u32 4, %s10
        %p157 = scmp.lt.s32.totalorder %s156, 7
        %s158 = scalar_select %p157, %s156, 7
        %s159 = smul.addr %s158, 18
        %s160 = smul.addr %s159, 4
        %s161 = scalar_lea.vmem %s0, %s160
        %s162 = smul.u32 4, %s10
      $region32: #{inception_branch_factorization1_forward.5} parent=27 // pred_fallthru
        _
    $region28: #{inception_branch_factorization1_forward.5} parent=5 // pred_fallthru
      _
    %p163 = scmp.le.s32.totalorder 1, %s10
    %p164 = scmp.lt.s32.totalorder %s10, 3
    %p165 = pnand %p163, %p164
    %p166 = pneg %p165
    // Predicated region
    $region33: #{inception_branch_factorization1_forward.5} parent=5 // pred_check
      _
    $region34: #{inception_branch_factorization1_forward.5} parent=5 // pred_check_branch
      %168 = sbr.rel (%p165) target = $region36
    $region35: #{inception_branch_factorization1_forward.5} parent=5 // pred_region
      %s169 = ssub.s32 %s10, 1
      %s170 = smul.u32 4, %s15
      %p171 = scmp.lt.s32.totalorder %s170, 7
      %s172 = scalar_select %p171, %s170, 7
      %s173 = smul.addr %s172, 18
      %s174 = smul.addr %s173, 4
      %s175 = scalar_lea.vmem %s0, %s174
      %p176 = pneg %p36
      %p177 = pneg %p33
      %p178 = pneg %p57
      %p179 = pneg %p54
      %p180 = pneg %p78
      %p181 = pneg %p75
      %p182 = pneg %p99
      %p183 = pneg %p96
      %p184 = pneg %p125
      %p185 = pneg %p122
      %p186 = scmp.lt.s32.totalorder %s15, 1
      %s187 = scalar_select %p186, %s15, 1
      %s188 = smul.addr %s187, 8
      %s189 = smul.addr %s188, 8
      %s190 = scalar_lea.vmem %s4, %s189
      %s191 = smul.u32 4, %s15
      %p192 = scmp.lt.s32.totalorder %s191, 7
      %s193 = scalar_select %p192, %s191, 7
      %s194 = smul.addr %s193, 18
      %s195 = smul.addr %s194, 4
      %s196 = scalar_lea.vmem %s0, %s195
      %s197 = smul.u32 4, %s15
      %p198 = scmp.lt.s32.totalorder %s15, 1
      %s199 = scalar_select %p198, %s15, 1
      %s200 = smul.addr %s199, 8
      %s201 = smul.addr %s200, 8
      %s202 = scalar_lea.vmem %s4, %s201
      %v203 = vld [vmem:[%s196] sm:$0xf]
      %v204 = vld [vmem:[%s196 + $0x8] sm:$0xf]
      %v205 = vld [vmem:[%s196 + $0x10] sm:$0xf]
      %v206 = vld [vmem:[%s196 + $0x18] sm:$0xf]
      %v207 = vld [vmem:[%s196 + $0x20] sm:$0xf]
      %v208 = vld [vmem:[%s196 + $0x28] sm:$0xf]
      %v209 = vld [vmem:[%s196 + $0x30] sm:$0xf]
      %v210 = vld [vmem:[%s196 + $0x38] sm:$0xf]
      %v211 = vld [vmem:[%s1] sm:$0xf]
      %v212 = vld [vmem:[%s1 + $0x4] sm:$0xf]
      %v213 = vld [vmem:[%s1 + $0x8] sm:$0xf]
      %v214 = vld [vmem:[%s1 + $0xc] sm:$0xf]
      %v215 = vld [vmem:[%s1 + $0x10] sm:$0xf]
      %v216 = vld [vmem:[%s1 + $0x14] sm:$0xf]
      %v217 = vld [vmem:[%s1 + $0x18] sm:$0xf]
      %v218 = vld [vmem:[%s1 + $0x1c] sm:$0xf]
      %v219 = vld [vmem:[%s1 + $0x20] sm:$0xf]
      %v220 = vld [vmem:[%s1 + $0x24] sm:$0xf]
      %v221 = vld [vmem:[%s1 + $0x28] sm:$0xf]
      %v222 = vld [vmem:[%s1 + $0x2c] sm:$0xf]
      %v223 = vld [vmem:[%s1 + $0x30] sm:$0xf]
      %v224 = vld [vmem:[%s1 + $0x34] sm:$0xf]
      %v225 = vld [vmem:[%s1 + $0x38] sm:$0xf]
      %v226 = vld [vmem:[%s1 + $0x3c] sm:$0xf]
      %s227 = scalar_lea.vmem %s196, 72
      %v228 = vld [vmem:[%s227] sm:$0xf]
      %v229 = vld [vmem:[%s227 + $0x8] sm:$0xf]
      %v230 = vld [vmem:[%s227 + $0x10] sm:$0xf]
      %v231 = vld [vmem:[%s227 + $0x18] sm:$0xf]
      %v232 = vld [vmem:[%s227 + $0x20] sm:$0xf]
      %v233 = vld [vmem:[%s227 + $0x28] sm:$0xf]
      %v234 = vld [vmem:[%s227 + $0x30] sm:$0xf]
      %v235 = vld [vmem:[%s227 + $0x38] sm:$0xf]
      %s236 = scalar_lea.vmem %s1, 64
      %v237 = vld [vmem:[%s236] sm:$0xf]
      %v238 = vld [vmem:[%s236 + $0x4] sm:$0xf]
      %v239 = vld [vmem:[%s236 + $0x8] sm:$0xf]
      %v240 = vld [vmem:[%s236 + $0xc] sm:$0xf]
      %v241 = vld [vmem:[%s236 + $0x10] sm:$0xf]
      %v242 = vld [vmem:[%s236 + $0x14] sm:$0xf]
      %v243 = vld [vmem:[%s236 + $0x18] sm:$0xf]
      %v244 = vld [vmem:[%s236 + $0x1c] sm:$0xf]
      %v245 = vld [vmem:[%s236 + $0x20] sm:$0xf]
      %v246 = vld [vmem:[%s236 + $0x24] sm:$0xf]
      %v247 = vld [vmem:[%s236 + $0x28] sm:$0xf]
      %v248 = vld [vmem:[%s236 + $0x2c] sm:$0xf]
      %v249 = vld [vmem:[%s236 + $0x30] sm:$0xf]
      %v250 = vld [vmem:[%s236 + $0x34] sm:$0xf]
      %v251 = vld [vmem:[%s236 + $0x38] sm:$0xf]
      %v252 = vld [vmem:[%s236 + $0x3c] sm:$0xf]
      %v261 = vunpack.c.l.b16 %v228
      %v262 = vunpack.c.l.b16 %v229
      %v263 = vunpack.c.l.b16 %v230
      %v264 = vunpack.c.l.b16 %v231
      %v265 = vunpack.c.l.b16 %v232
      %v266 = vunpack.c.l.b16 %v233
      %v267 = vunpack.c.l.b16 %v234
      %v268 = vunpack.c.l.b16 %v235
      %v269 = vpack.c.b16 %v262, %v261
      %v270 = vpack.c.b16 %v264, %v263
      %v271 = vpack.c.b16 %v266, %v265
      %v272 = vpack.c.b16 %v268, %v267
      %v293 = vunpack.c.l.b16 %v237
      %v294 = vunpack.c.l.b16 %v238
      %v295 = vunpack.c.l.b16 %v239
      %v296 = vunpack.c.l.b16 %v240
      %v297 = vunpack.c.l.b16 %v241
      %v298 = vunpack.c.l.b16 %v242
      %v299 = vunpack.c.l.b16 %v243
      %v300 = vunpack.c.l.b16 %v244
      %v301 = vunpack.c.l.b16 %v245
      %v302 = vunpack.c.l.b16 %v246
      %v303 = vunpack.c.l.b16 %v247
      %v304 = vunpack.c.l.b16 %v248
      %v305 = vunpack.c.l.b16 %v249
      %v306 = vunpack.c.l.b16 %v250
      %v307 = vunpack.c.l.b16 %v251
      %v308 = vunpack.c.l.b16 %v252
      %v309 = vpack.c.b16 %v294, %v293
      %v310 = vpack.c.b16 %v296, %v295
      %v311 = vpack.c.b16 %v298, %v297
      %v312 = vpack.c.b16 %v300, %v299
      %v313 = vpack.c.b16 %v302, %v301
      %v314 = vpack.c.b16 %v304, %v303
      %v315 = vpack.c.b16 %v306, %v305
      %v316 = vpack.c.b16 %v308, %v307
      %325 = vmatpush.bf16.msra.mxu0 %v316
      %326 = vmatpush.bf16.msra.mxu0 %v315
      %327 = vmatpush.bf16.msra.mxu0 %v314
      %328 = vmatpush.bf16.msra.mxu0 %v313
      %329 = vmatpush.bf16.msra.mxu0 %v312
      %330 = vmatpush.bf16.msra.mxu0 %v311
      %331 = vmatpush.bf16.msra.mxu0 %v310
      %332 = vmatpush.bf16.msra.mxu0 %v309
      %333 = vmatmul.bf16.gmra.mxu0 %v269
      %v334 = vpop.f32.mrf.mxu0
      %v335 = vadd.f32 0.0, %v334
      %v336 = vpop.f32.mrf.mxu0
      %v337 = vadd.f32 0.0, %v336
      %338 = vmatmul.bf16.gmra.mxu0 %v270
      %v339 = vpop.f32.mrf.mxu0
      %v340 = vadd.f32 0.0, %v339
      %v341 = vpop.f32.mrf.mxu0
      %v342 = vadd.f32 0.0, %v341
      %343 = vmatmul.bf16.gmra.mxu0 %v271
      %v344 = vpop.f32.mrf.mxu0
      %v345 = vadd.f32 0.0, %v344
      %v346 = vpop.f32.mrf.mxu0
      %v347 = vadd.f32 0.0, %v346
      %348 = vmatmul.bf16.gmra.mxu0 %v272
      %v349 = vpop.f32.mrf.mxu0
      %v350 = vadd.f32 0.0, %v349
      %v351 = vpop.f32.mrf.mxu0
      %v352 = vadd.f32 0.0, %v351
      %353 = vdwg.mxu0
      %v362 = vunpack.c.l.b16 %v203
      %v363 = vunpack.c.l.b16 %v204
      %v364 = vunpack.c.l.b16 %v205
      %v365 = vunpack.c.l.b16 %v206
      %v366 = vunpack.c.l.b16 %v207
      %v367 = vunpack.c.l.b16 %v208
      %v368 = vunpack.c.l.b16 %v209
      %v369 = vunpack.c.l.b16 %v210
      %v370 = vpack.c.b16 %v363, %v362
      %v371 = vpack.c.b16 %v365, %v364
      %v372 = vpack.c.b16 %v367, %v366
      %v373 = vpack.c.b16 %v369, %v368
      %v394 = vunpack.c.l.b16 %v211
      %v395 = vunpack.c.l.b16 %v212
      %v396 = vunpack.c.l.b16 %v213
      %v397 = vunpack.c.l.b16 %v214
      %v398 = vunpack.c.l.b16 %v215
      %v399 = vunpack.c.l.b16 %v216
      %v400 = vunpack.c.l.b16 %v217
      %v401 = vunpack.c.l.b16 %v218
      %v402 = vunpack.c.l.b16 %v219
      %v403 = vunpack.c.l.b16 %v220
      %v404 = vunpack.c.l.b16 %v221
      %v405 = vunpack.c.l.b16 %v222
      %v406 = vunpack.c.l.b16 %v223
      %v407 = vunpack.c.l.b16 %v224
      %v408 = vunpack.c.l.b16 %v225
      %v409 = vunpack.c.l.b16 %v226
      %v410 = vpack.c.b16 %v395, %v394
      %v411 = vpack.c.b16 %v397, %v396
      %v412 = vpack.c.b16 %v399, %v398
      %v413 = vpack.c.b16 %v401, %v400
      %v414 = vpack.c.b16 %v403, %v402
      %v415 = vpack.c.b16 %v405, %v404
      %v416 = vpack.c.b16 %v407, %v406
      %v417 = vpack.c.b16 %v409, %v408
      %426 = vmatpush.bf16.msra.mxu0 %v417
      %427 = vmatpush.bf16.msra.mxu0 %v416
      %428 = vmatpush.bf16.msra.mxu0 %v415
      %429 = vmatpush.bf16.msra.mxu0 %v414
      %430 = vmatpush.bf16.msra.mxu0 %v413
      %431 = vmatpush.bf16.msra.mxu0 %v412
      %432 = vmatpush.bf16.msra.mxu0 %v411
      %433 = vmatpush.bf16.msra.mxu0 %v410
      %434 = vmatmul.bf16.gmra.mxu0 %v370
      %v435 = vpop.f32.mrf.mxu0
      %v436 = vadd.f32 %v335, %v435
      %v437 = vpop.f32.mrf.mxu0
      %v438 = vadd.f32 %v337, %v437
      %439 = vmatmul.bf16.gmra.mxu0 %v371
      %v440 = vpop.f32.mrf.mxu0
      %v441 = vadd.f32 %v340, %v440
      %v442 = vpop.f32.mrf.mxu0
      %v443 = vadd.f32 %v342, %v442
      %444 = vmatmul.bf16.gmra.mxu0 %v372
      %v445 = vpop.f32.mrf.mxu0
      %v446 = vadd.f32 %v345, %v445
      %v447 = vpop.f32.mrf.mxu0
      %v448 = vadd.f32 %v347, %v447
      %449 = vmatmul.bf16.gmra.mxu0 %v373
      %v450 = vpop.f32.mrf.mxu0
      %v451 = vadd.f32 %v350, %v450
      %v452 = vpop.f32.mrf.mxu0
      %v453 = vadd.f32 %v352, %v452
      %454 = vdwg.mxu0
      %v455 = vld [vmem:[%s196] sm:$0xf]
      %v456 = vld [vmem:[%s196 + $0x4] sm:$0x1]
      %v457 = vld [vmem:[%s196 + $0x8] sm:$0xf]
      %v458 = vld [vmem:[%s196 + $0xc] sm:$0x1]
      %v459 = vld [vmem:[%s196 + $0x10] sm:$0xf]
      %v460 = vld [vmem:[%s196 + $0x14] sm:$0x1]
      %v461 = vld [vmem:[%s196 + $0x18] sm:$0xf]
      %v462 = vld [vmem:[%s196 + $0x1c] sm:$0x1]
      %v463 = vld [vmem:[%s196 + $0x20] sm:$0xf]
      %v464 = vld [vmem:[%s196 + $0x24] sm:$0x1]
      %v465 = vld [vmem:[%s196 + $0x28] sm:$0xf]
      %v466 = vld [vmem:[%s196 + $0x2c] sm:$0x1]
      %v467 = vld [vmem:[%s196 + $0x30] sm:$0xf]
      %v468 = vld [vmem:[%s196 + $0x34] sm:$0x1]
      %v469 = vld [vmem:[%s196 + $0x38] sm:$0xf]
      %v470 = vld [vmem:[%s196 + $0x3c] sm:$0x1]
      %vm471 = vsmask.f32 3328
      %vm472 = vsmask.f32 7440
      %vm473 = vmor %vm471, %vm472
      %v475 = vshrl.u32 %v455, 16
      %v477 = vrot.slane %v475, 4
      %v478 = vshll.u32 %v455, 16
      %v480 = vrot.slane %v478, 5
      %v481 = vor.u32 %v477, %v480
      %v482 = vrot.slane %v481, 4
      %v484 = vshll.u32 %v456, 16
      %v486 = vrot.slane %v484, 5
      %v487 = vsel %vm473, %v482, %v486
      %v489 = vshrl.u32 %v457, 16
      %v491 = vrot.slane %v489, 4
      %v492 = vshll.u32 %v457, 16
      %v494 = vrot.slane %v492, 5
      %v495 = vor.u32 %v491, %v494
      %v496 = vrot.slane %v495, 4
      %v498 = vshll.u32 %v458, 16
      %v500 = vrot.slane %v498, 5
      %v501 = vsel %vm473, %v496, %v500
      %v503 = vshrl.u32 %v459, 16
      %v505 = vrot.slane %v503, 4
      %v506 = vshll.u32 %v459, 16
      %v508 = vrot.slane %v506, 5
      %v509 = vor.u32 %v505, %v508
      %v510 = vrot.slane %v509, 4
      %v512 = vshll.u32 %v460, 16
      %v514 = vrot.slane %v512, 5
      %v515 = vsel %vm473, %v510, %v514
      %v517 = vshrl.u32 %v461, 16
      %v519 = vrot.slane %v517, 4
      %v520 = vshll.u32 %v461, 16
      %v522 = vrot.slane %v520, 5
      %v523 = vor.u32 %v519, %v522
      %v524 = vrot.slane %v523, 4
      %v526 = vshll.u32 %v462, 16
      %v528 = vrot.slane %v526, 5
      %v529 = vsel %vm473, %v524, %v528
      %v531 = vshrl.u32 %v463, 16
      %v533 = vrot.slane %v531, 4
      %v534 = vshll.u32 %v463, 16
      %v536 = vrot.slane %v534, 5
      %v537 = vor.u32 %v533, %v536
      %v538 = vrot.slane %v537, 4
      %v540 = vshll.u32 %v464, 16
      %v542 = vrot.slane %v540, 5
      %v543 = vsel %vm473, %v538, %v542
      %v545 = vshrl.u32 %v465, 16
      %v547 = vrot.slane %v545, 4
      %v548 = vshll.u32 %v465, 16
      %v550 = vrot.slane %v548, 5
      %v551 = vor.u32 %v547, %v550
      %v552 = vrot.slane %v551, 4
      %v554 = vshll.u32 %v466, 16
      %v556 = vrot.slane %v554, 5
      %v557 = vsel %vm473, %v552, %v556
      %v559 = vshrl.u32 %v467, 16
      %v561 = vrot.slane %v559, 4
      %v562 = vshll.u32 %v467, 16
      %v564 = vrot.slane %v562, 5
      %v565 = vor.u32 %v561, %v564
      %v566 = vrot.slane %v565, 4
      %v568 = vshll.u32 %v468, 16
      %v570 = vrot.slane %v568, 5
      %v571 = vsel %vm473, %v566, %v570
      %v573 = vshrl.u32 %v469, 16
      %v575 = vrot.slane %v573, 4
      %v576 = vshll.u32 %v469, 16
      %v578 = vrot.slane %v576, 5
      %v579 = vor.u32 %v575, %v578
      %v580 = vrot.slane %v579, 4
      %v582 = vshll.u32 %v470, 16
      %v584 = vrot.slane %v582, 5
      %v585 = vsel %vm473, %v580, %v584
      %s586 = scalar_lea.vmem %s1, 128
      %v587 = vld [vmem:[%s586] sm:$0xf]
      %v588 = vld [vmem:[%s586 + $0x4] sm:$0xf]
      %v589 = vld [vmem:[%s586 + $0x8] sm:$0xf]
      %v590 = vld [vmem:[%s586 + $0xc] sm:$0xf]
      %v591 = vld [vmem:[%s586 + $0x10] sm:$0xf]
      %v592 = vld [vmem:[%s586 + $0x14] sm:$0xf]
      %v593 = vld [vmem:[%s586 + $0x18] sm:$0xf]
      %v594 = vld [vmem:[%s586 + $0x1c] sm:$0xf]
      %v595 = vld [vmem:[%s586 + $0x20] sm:$0xf]
      %v596 = vld [vmem:[%s586 + $0x24] sm:$0xf]
      %v597 = vld [vmem:[%s586 + $0x28] sm:$0xf]
      %v598 = vld [vmem:[%s586 + $0x2c] sm:$0xf]
      %v599 = vld [vmem:[%s586 + $0x30] sm:$0xf]
      %v600 = vld [vmem:[%s586 + $0x34] sm:$0xf]
      %v601 = vld [vmem:[%s586 + $0x38] sm:$0xf]
      %v602 = vld [vmem:[%s586 + $0x3c] sm:$0xf]
      %v603 = vunpack.c.l.b16 %v487
      %v604 = vunpack.c.l.b16 %v501
      %v605 = vunpack.c.l.b16 %v515
      %v606 = vunpack.c.l.b16 %v529
      %v607 = vunpack.c.l.b16 %v543
      %v608 = vunpack.c.l.b16 %v557
      %v609 = vunpack.c.l.b16 %v571
      %v610 = vunpack.c.l.b16 %v585
      %v611 = vpack.c.b16 %v604, %v603
      %v612 = vpack.c.b16 %v606, %v605
      %v613 = vpack.c.b16 %v608, %v607
      %v614 = vpack.c.b16 %v610, %v609
      %v635 = vunpack.c.l.b16 %v587
      %v636 = vunpack.c.l.b16 %v588
      %v637 = vunpack.c.l.b16 %v589
      %v638 = vunpack.c.l.b16 %v590
      %v639 = vunpack.c.l.b16 %v591
      %v640 = vunpack.c.l.b16 %v592
      %v641 = vunpack.c.l.b16 %v593
      %v642 = vunpack.c.l.b16 %v594
      %v643 = vunpack.c.l.b16 %v595
      %v644 = vunpack.c.l.b16 %v596
      %v645 = vunpack.c.l.b16 %v597
      %v646 = vunpack.c.l.b16 %v598
      %v647 = vunpack.c.l.b16 %v599
      %v648 = vunpack.c.l.b16 %v600
      %v649 = vunpack.c.l.b16 %v601
      %v650 = vunpack.c.l.b16 %v602
      %v651 = vpack.c.b16 %v636, %v635
      %v652 = vpack.c.b16 %v638, %v637
      %v653 = vpack.c.b16 %v640, %v639
      %v654 = vpack.c.b16 %v642, %v641
      %v655 = vpack.c.b16 %v644, %v643
      %v656 = vpack.c.b16 %v646, %v645
      %v657 = vpack.c.b16 %v648, %v647
      %v658 = vpack.c.b16 %v650, %v649
      %667 = vmatpush.bf16.msra.mxu0 %v658
      %668 = vmatpush.bf16.msra.mxu0 %v657
      %669 = vmatpush.bf16.msra.mxu0 %v656
      %670 = vmatpush.bf16.msra.mxu0 %v655
      %671 = vmatpush.bf16.msra.mxu0 %v654
      %672 = vmatpush.bf16.msra.mxu0 %v653
      %673 = vmatpush.bf16.msra.mxu0 %v652
      %674 = vmatpush.bf16.msra.mxu0 %v651
      %675 = vmatmul.bf16.gmra.mxu0 %v611
      %v676 = vpop.f32.mrf.mxu0
      %v677 = vadd.f32 0.0, %v676
      %v678 = vpop.f32.mrf.mxu0
      %v679 = vadd.f32 0.0, %v678
      %680 = vmatmul.bf16.gmra.mxu0 %v612
      %v681 = vpop.f32.mrf.mxu0
      %v682 = vadd.f32 0.0, %v681
      %v683 = vpop.f32.mrf.mxu0
      %v684 = vadd.f32 0.0, %v683
      %685 = vmatmul.bf16.gmra.mxu0 %v613
      %v686 = vpop.f32.mrf.mxu0
      %v687 = vadd.f32 0.0, %v686
      %v688 = vpop.f32.mrf.mxu0
      %v689 = vadd.f32 0.0, %v688
      %690 = vmatmul.bf16.gmra.mxu0 %v614
      %v691 = vpop.f32.mrf.mxu0
      %v692 = vadd.f32 0.0, %v691
      %v693 = vpop.f32.mrf.mxu0
      %v694 = vadd.f32 0.0, %v693
      %695 = vdwg.mxu0
      %v696 = vadd.f32 %v436, %v677
      %v697 = vadd.f32 %v438, %v679
      %v698 = vadd.f32 %v441, %v682
      %v699 = vadd.f32 %v443, %v684
      %v700 = vadd.f32 %v446, %v687
      %v701 = vadd.f32 %v448, %v689
      %v702 = vadd.f32 %v451, %v692
      %v703 = vadd.f32 %v453, %v694
      %s704 = scalar_lea.vmem %s196, 144
      %v705 = vld [vmem:[%s704] sm:$0xf]
      %v706 = vld [vmem:[%s704 + $0x8] sm:$0xf]
      %v707 = vld [vmem:[%s704 + $0x10] sm:$0xf]
      %v708 = vld [vmem:[%s704 + $0x18] sm:$0xf]
      %v709 = vld [vmem:[%s704 + $0x20] sm:$0xf]
      %v710 = vld [vmem:[%s704 + $0x28] sm:$0xf]
      %v711 = vld [vmem:[%s704 + $0x30] sm:$0xf]
      %v712 = vld [vmem:[%s704 + $0x38] sm:$0xf]
      %s713 = scalar_lea.vmem %s1, 192
      %v714 = vld [vmem:[%s713] sm:$0xf]
      %v715 = vld [vmem:[%s713 + $0x4] sm:$0xf]
      %v716 = vld [vmem:[%s713 + $0x8] sm:$0xf]
      %v717 = vld [vmem:[%s713 + $0xc] sm:$0xf]
      %v718 = vld [vmem:[%s713 + $0x10] sm:$0xf]
      %v719 = vld [vmem:[%s713 + $0x14] sm:$0xf]
      %v720 = vld [vmem:[%s713 + $0x18] sm:$0xf]
      %v721 = vld [vmem:[%s713 + $0x1c] sm:$0xf]
      %v722 = vld [vmem:[%s713 + $0x20] sm:$0xf]
      %v723 = vld [vmem:[%s713 + $0x24] sm:$0xf]
      %v724 = vld [vmem:[%s713 + $0x28] sm:$0xf]
      %v725 = vld [vmem:[%s713 + $0x2c] sm:$0xf]
      %v726 = vld [vmem:[%s713 + $0x30] sm:$0xf]
      %v727 = vld [vmem:[%s713 + $0x34] sm:$0xf]
      %v728 = vld [vmem:[%s713 + $0x38] sm:$0xf]
      %v729 = vld [vmem:[%s713 + $0x3c] sm:$0xf]
      %v738 = vunpack.c.l.b16 %v705
      %v739 = vunpack.c.l.b16 %v706
      %v740 = vunpack.c.l.b16 %v707
      %v741 = vunpack.c.l.b16 %v708
      %v742 = vunpack.c.l.b16 %v709
      %v743 = vunpack.c.l.b16 %v710
      %v744 = vunpack.c.l.b16 %v711
      %v745 = vunpack.c.l.b16 %v712
      %v746 = vpack.c.b16 %v739, %v738
      %v747 = vpack.c.b16 %v741, %v740
      %v748 = vpack.c.b16 %v743, %v742
      %v749 = vpack.c.b16 %v745, %v744
      %v770 = vunpack.c.l.b16 %v714
      %v771 = vunpack.c.l.b16 %v715
      %v772 = vunpack.c.l.b16 %v716
      %v773 = vunpack.c.l.b16 %v717
      %v774 = vunpack.c.l.b16 %v718
      %v775 = vunpack.c.l.b16 %v719
      %v776 = vunpack.c.l.b16 %v720
      %v777 = vunpack.c.l.b16 %v721
      %v778 = vunpack.c.l.b16 %v722
      %v779 = vunpack.c.l.b16 %v723
      %v780 = vunpack.c.l.b16 %v724
      %v781 = vunpack.c.l.b16 %v725
      %v782 = vunpack.c.l.b16 %v726
      %v783 = vunpack.c.l.b16 %v727
      %v784 = vunpack.c.l.b16 %v728
      %v785 = vunpack.c.l.b16 %v729
      %v786 = vpack.c.b16 %v771, %v770
      %v787 = vpack.c.b16 %v773, %v772
      %v788 = vpack.c.b16 %v775, %v774
      %v789 = vpack.c.b16 %v777, %v776
      %v790 = vpack.c.b16 %v779, %v778
      %v791 = vpack.c.b16 %v781, %v780
      %v792 = vpack.c.b16 %v783, %v782
      %v793 = vpack.c.b16 %v785, %v784
      %802 = vmatpush.bf16.msra.mxu0 %v793
      %803 = vmatpush.bf16.msra.mxu0 %v792
      %804 = vmatpush.bf16.msra.mxu0 %v791
      %805 = vmatpush.bf16.msra.mxu0 %v790
      %806 = vmatpush.bf16.msra.mxu0 %v789
      %807 = vmatpush.bf16.msra.mxu0 %v788
      %808 = vmatpush.bf16.msra.mxu0 %v787
      %809 = vmatpush.bf16.msra.mxu0 %v786
      %810 = vmatmul.bf16.gmra.mxu0 %v746
      %v811 = vpop.f32.mrf.mxu0
      %v812 = vadd.f32 0.0, %v811
      %v813 = vpop.f32.mrf.mxu0
      %v814 = vadd.f32 0.0, %v813
      %815 = vmatmul.bf16.gmra.mxu0 %v747
      %v816 = vpop.f32.mrf.mxu0
      %v817 = vadd.f32 0.0, %v816
      %v818 = vpop.f32.mrf.mxu0
      %v819 = vadd.f32 0.0, %v818
      %820 = vmatmul.bf16.gmra.mxu0 %v748
      %v821 = vpop.f32.mrf.mxu0
      %v822 = vadd.f32 0.0, %v821
      %v823 = vpop.f32.mrf.mxu0
      %v824 = vadd.f32 0.0, %v823
      %825 = vmatmul.bf16.gmra.mxu0 %v749
      %v826 = vpop.f32.mrf.mxu0
      %v827 = vadd.f32 0.0, %v826
      %v828 = vpop.f32.mrf.mxu0
      %v829 = vadd.f32 0.0, %v828
      %830 = vdwg.mxu0
      %v831 = vadd.f32 %v696, %v812
      %v832 = vadd.f32 %v697, %v814
      %v833 = vadd.f32 %v698, %v817
      %v834 = vadd.f32 %v699, %v819
      %v835 = vadd.f32 %v700, %v822
      %v836 = vadd.f32 %v701, %v824
      %v837 = vadd.f32 %v702, %v827
      %v838 = vadd.f32 %v703, %v829
      %s839 = scalar_lea.vmem %s196, 216
      %v840 = vld [vmem:[%s839] sm:$0xf]
      %v841 = vld [vmem:[%s839 + $0x8] sm:$0xf]
      %v842 = vld [vmem:[%s839 + $0x10] sm:$0xf]
      %v843 = vld [vmem:[%s839 + $0x18] sm:$0xf]
      %v844 = vld [vmem:[%s839 + $0x20] sm:$0xf]
      %v845 = vld [vmem:[%s839 + $0x28] sm:$0xf]
      %v846 = vld [vmem:[%s839 + $0x30] sm:$0xf]
      %v847 = vld [vmem:[%s839 + $0x38] sm:$0xf]
      %s848 = scalar_lea.vmem %s1, 256
      %v849 = vld [vmem:[%s848] sm:$0xf]
      %v850 = vld [vmem:[%s848 + $0x4] sm:$0xf]
      %v851 = vld [vmem:[%s848 + $0x8] sm:$0xf]
      %v852 = vld [vmem:[%s848 + $0xc] sm:$0xf]
      %v853 = vld [vmem:[%s848 + $0x10] sm:$0xf]
      %v854 = vld [vmem:[%s848 + $0x14] sm:$0xf]
      %v855 = vld [vmem:[%s848 + $0x18] sm:$0xf]
      %v856 = vld [vmem:[%s848 + $0x1c] sm:$0xf]
      %v857 = vld [vmem:[%s848 + $0x20] sm:$0xf]
      %v858 = vld [vmem:[%s848 + $0x24] sm:$0xf]
      %v859 = vld [vmem:[%s848 + $0x28] sm:$0xf]
      %v860 = vld [vmem:[%s848 + $0x2c] sm:$0xf]
      %v861 = vld [vmem:[%s848 + $0x30] sm:$0xf]
      %v862 = vld [vmem:[%s848 + $0x34] sm:$0xf]
      %v863 = vld [vmem:[%s848 + $0x38] sm:$0xf]
      %v864 = vld [vmem:[%s848 + $0x3c] sm:$0xf]
      %v873 = vunpack.c.l.b16 %v840
      %v874 = vunpack.c.l.b16 %v841
      %v875 = vunpack.c.l.b16 %v842
      %v876 = vunpack.c.l.b16 %v843
      %v877 = vunpack.c.l.b16 %v844
      %v878 = vunpack.c.l.b16 %v845
      %v879 = vunpack.c.l.b16 %v846
      %v880 = vunpack.c.l.b16 %v847
      %v881 = vpack.c.b16 %v874, %v873
      %v882 = vpack.c.b16 %v876, %v875
      %v883 = vpack.c.b16 %v878, %v877
      %v884 = vpack.c.b16 %v880, %v879
      %v905 = vunpack.c.l.b16 %v849
      %v906 = vunpack.c.l.b16 %v850
      %v907 = vunpack.c.l.b16 %v851
      %v908 = vunpack.c.l.b16 %v852
      %v909 = vunpack.c.l.b16 %v853
      %v910 = vunpack.c.l.b16 %v854
      %v911 = vunpack.c.l.b16 %v855
      %v912 = vunpack.c.l.b16 %v856
      %v913 = vunpack.c.l.b16 %v857
      %v914 = vunpack.c.l.b16 %v858
      %v915 = vunpack.c.l.b16 %v859
      %v916 = vunpack.c.l.b16 %v860
      %v917 = vunpack.c.l.b16 %v861
      %v918 = vunpack.c.l.b16 %v862
      %v919 = vunpack.c.l.b16 %v863
      %v920 = vunpack.c.l.b16 %v864
      %v921 = vpack.c.b16 %v906, %v905
      %v922 = vpack.c.b16 %v908, %v907
      %v923 = vpack.c.b16 %v910, %v909
      %v924 = vpack.c.b16 %v912, %v911
      %v925 = vpack.c.b16 %v914, %v913
      %v926 = vpack.c.b16 %v916, %v915
      %v927 = vpack.c.b16 %v918, %v917
      %v928 = vpack.c.b16 %v920, %v919
      %937 = vmatpush.bf16.msra.mxu0 %v928
      %938 = vmatpush.bf16.msra.mxu0 %v927
      %939 = vmatpush.bf16.msra.mxu0 %v926
      %940 = vmatpush.bf16.msra.mxu0 %v925
      %941 = vmatpush.bf16.msra.mxu0 %v924
      %942 = vmatpush.bf16.msra.mxu0 %v923
      %943 = vmatpush.bf16.msra.mxu0 %v922
      %944 = vmatpush.bf16.msra.mxu0 %v921
      %945 = vmatmul.bf16.gmra.mxu0 %v881
      %v946 = vpop.f32.mrf.mxu0
      %v947 = vadd.f32 0.0, %v946
      %v948 = vpop.f32.mrf.mxu0
      %v949 = vadd.f32 0.0, %v948
      %950 = vmatmul.bf16.gmra.mxu0 %v882
      %v951 = vpop.f32.mrf.mxu0
      %v952 = vadd.f32 0.0, %v951
      %v953 = vpop.f32.mrf.mxu0
      %v954 = vadd.f32 0.0, %v953
      %955 = vmatmul.bf16.gmra.mxu0 %v883
      %v956 = vpop.f32.mrf.mxu0
      %v957 = vadd.f32 0.0, %v956
      %v958 = vpop.f32.mrf.mxu0
      %v959 = vadd.f32 0.0, %v958
      %960 = vmatmul.bf16.gmra.mxu0 %v884
      %v961 = vpop.f32.mrf.mxu0
      %v962 = vadd.f32 0.0, %v961
      %v963 = vpop.f32.mrf.mxu0
      %v964 = vadd.f32 0.0, %v963
      %965 = vdwg.mxu0
      %v966 = vadd.f32 %v831, %v947
      %v967 = vadd.f32 %v832, %v949
      %v968 = vadd.f32 %v833, %v952
      %v969 = vadd.f32 %v834, %v954
      %v970 = vadd.f32 %v835, %v957
      %v971 = vadd.f32 %v836, %v959
      %v972 = vadd.f32 %v837, %v962
      %v973 = vadd.f32 %v838, %v964
      %v974 = vld [vmem:[%s704] sm:$0xf]
      %v975 = vld [vmem:[%s704 + $0x4] sm:$0x1]
      %v976 = vld [vmem:[%s704 + $0x8] sm:$0xf]
      %v977 = vld [vmem:[%s704 + $0xc] sm:$0x1]
      %v978 = vld [vmem:[%s704 + $0x10] sm:$0xf]
      %v979 = vld [vmem:[%s704 + $0x14] sm:$0x1]
      %v980 = vld [vmem:[%s704 + $0x18] sm:$0xf]
      %v981 = vld [vmem:[%s704 + $0x1c] sm:$0x1]
      %v982 = vld [vmem:[%s704 + $0x20] sm:$0xf]
      %v983 = vld [vmem:[%s704 + $0x24] sm:$0x1]
      %v984 = vld [vmem:[%s704 + $0x28] sm:$0xf]
      %v985 = vld [vmem:[%s704 + $0x2c] sm:$0x1]
      %v986 = vld [vmem:[%s704 + $0x30] sm:$0xf]
      %v987 = vld [vmem:[%s704 + $0x34] sm:$0x1]
      %v988 = vld [vmem:[%s704 + $0x38] sm:$0xf]
      %v989 = vld [vmem:[%s704 + $0x3c] sm:$0x1]
      %v991 = vshrl.u32 %v974, 16
      %v993 = vrot.slane %v991, 4
      %v994 = vshll.u32 %v974, 16
      %v996 = vrot.slane %v994, 5
      %v997 = vor.u32 %v993, %v996
      %v998 = vrot.slane %v997, 4
      %v1000 = vshll.u32 %v975, 16
      %v1002 = vrot.slane %v1000, 5
      %v1003 = vsel %vm473, %v998, %v1002
      %v1005 = vshrl.u32 %v976, 16
      %v1007 = vrot.slane %v1005, 4
      %v1008 = vshll.u32 %v976, 16
      %v1010 = vrot.slane %v1008, 5
      %v1011 = vor.u32 %v1007, %v1010
      %v1012 = vrot.slane %v1011, 4
      %v1014 = vshll.u32 %v977, 16
      %v1016 = vrot.slane %v1014, 5
      %v1017 = vsel %vm473, %v1012, %v1016
      %v1019 = vshrl.u32 %v978, 16
      %v1021 = vrot.slane %v1019, 4
      %v1022 = vshll.u32 %v978, 16
      %v1024 = vrot.slane %v1022, 5
      %v1025 = vor.u32 %v1021, %v1024
      %v1026 = vrot.slane %v1025, 4
      %v1028 = vshll.u32 %v979, 16
      %v1030 = vrot.slane %v1028, 5
      %v1031 = vsel %vm473, %v1026, %v1030
      %v1033 = vshrl.u32 %v980, 16
      %v1035 = vrot.slane %v1033, 4
      %v1036 = vshll.u32 %v980, 16
      %v1038 = vrot.slane %v1036, 5
      %v1039 = vor.u32 %v1035, %v1038
      %v1040 = vrot.slane %v1039, 4
      %v1042 = vshll.u32 %v981, 16
      %v1044 = vrot.slane %v1042, 5
      %v1045 = vsel %vm473, %v1040, %v1044
      %v1047 = vshrl.u32 %v982, 16
      %v1049 = vrot.slane %v1047, 4
      %v1050 = vshll.u32 %v982, 16
      %v1052 = vrot.slane %v1050, 5
      %v1053 = vor.u32 %v1049, %v1052
      %v1054 = vrot.slane %v1053, 4
      %v1056 = vshll.u32 %v983, 16
      %v1058 = vrot.slane %v1056, 5
      %v1059 = vsel %vm473, %v1054, %v1058
      %v1061 = vshrl.u32 %v984, 16
      %v1063 = vrot.slane %v1061, 4
      %v1064 = vshll.u32 %v984, 16
      %v1066 = vrot.slane %v1064, 5
      %v1067 = vor.u32 %v1063, %v1066
      %v1068 = vrot.slane %v1067, 4
      %v1070 = vshll.u32 %v985, 16
      %v1072 = vrot.slane %v1070, 5
      %v1073 = vsel %vm473, %v1068, %v1072
      %v1075 = vshrl.u32 %v986, 16
      %v1077 = vrot.slane %v1075, 4
      %v1078 = vshll.u32 %v986, 16
      %v1080 = vrot.slane %v1078, 5
      %v1081 = vor.u32 %v1077, %v1080
      %v1082 = vrot.slane %v1081, 4
      %v1084 = vshll.u32 %v987, 16
      %v1086 = vrot.slane %v1084, 5
      %v1087 = vsel %vm473, %v1082, %v1086
      %v1089 = vshrl.u32 %v988, 16
      %v1091 = vrot.slane %v1089, 4
      %v1092 = vshll.u32 %v988, 16
      %v1094 = vrot.slane %v1092, 5
      %v1095 = vor.u32 %v1091, %v1094
      %v1096 = vrot.slane %v1095, 4
      %v1098 = vshll.u32 %v989, 16
      %v1100 = vrot.slane %v1098, 5
      %v1101 = vsel %vm473, %v1096, %v1100
      %s1102 = scalar_lea.vmem %s1, 320
      %v1103 = vld [vmem:[%s1102] sm:$0xf]
      %v1104 = vld [vmem:[%s1102 + $0x4] sm:$0xf]
      %v1105 = vld [vmem:[%s1102 + $0x8] sm:$0xf]
      %v1106 = vld [vmem:[%s1102 + $0xc] sm:$0xf]
      %v1107 = vld [vmem:[%s1102 + $0x10] sm:$0xf]
      %v1108 = vld [vmem:[%s1102 + $0x14] sm:$0xf]
      %v1109 = vld [vmem:[%s1102 + $0x18] sm:$0xf]
      %v1110 = vld [vmem:[%s1102 + $0x1c] sm:$0xf]
      %v1111 = vld [vmem:[%s1102 + $0x20] sm:$0xf]
      %v1112 = vld [vmem:[%s1102 + $0x24] sm:$0xf]
      %v1113 = vld [vmem:[%s1102 + $0x28] sm:$0xf]
      %v1114 = vld [vmem:[%s1102 + $0x2c] sm:$0xf]
      %v1115 = vld [vmem:[%s1102 + $0x30] sm:$0xf]
      %v1116 = vld [vmem:[%s1102 + $0x34] sm:$0xf]
      %v1117 = vld [vmem:[%s1102 + $0x38] sm:$0xf]
      %v1118 = vld [vmem:[%s1102 + $0x3c] sm:$0xf]
      %v1119 = vunpack.c.l.b16 %v1003
      %v1120 = vunpack.c.l.b16 %v1017
      %v1121 = vunpack.c.l.b16 %v1031
      %v1122 = vunpack.c.l.b16 %v1045
      %v1123 = vunpack.c.l.b16 %v1059
      %v1124 = vunpack.c.l.b16 %v1073
      %v1125 = vunpack.c.l.b16 %v1087
      %v1126 = vunpack.c.l.b16 %v1101
      %v1127 = vpack.c.b16 %v1120, %v1119
      %v1128 = vpack.c.b16 %v1122, %v1121
      %v1129 = vpack.c.b16 %v1124, %v1123
      %v1130 = vpack.c.b16 %v1126, %v1125
      %v1151 = vunpack.c.l.b16 %v1103
      %v1152 = vunpack.c.l.b16 %v1104
      %v1153 = vunpack.c.l.b16 %v1105
      %v1154 = vunpack.c.l.b16 %v1106
      %v1155 = vunpack.c.l.b16 %v1107
      %v1156 = vunpack.c.l.b16 %v1108
      %v1157 = vunpack.c.l.b16 %v1109
      %v1158 = vunpack.c.l.b16 %v1110
      %v1159 = vunpack.c.l.b16 %v1111
      %v1160 = vunpack.c.l.b16 %v1112
      %v1161 = vunpack.c.l.b16 %v1113
      %v1162 = vunpack.c.l.b16 %v1114
      %v1163 = vunpack.c.l.b16 %v1115
      %v1164 = vunpack.c.l.b16 %v1116
      %v1165 = vunpack.c.l.b16 %v1117
      %v1166 = vunpack.c.l.b16 %v1118
      %v1167 = vpack.c.b16 %v1152, %v1151
      %v1168 = vpack.c.b16 %v1154, %v1153
      %v1169 = vpack.c.b16 %v1156, %v1155
      %v1170 = vpack.c.b16 %v1158, %v1157
      %v1171 = vpack.c.b16 %v1160, %v1159
      %v1172 = vpack.c.b16 %v1162, %v1161
      %v1173 = vpack.c.b16 %v1164, %v1163
      %v1174 = vpack.c.b16 %v1166, %v1165
      %1183 = vmatpush.bf16.msra.mxu0 %v1174
      %1184 = vmatpush.bf16.msra.mxu0 %v1173
      %1185 = vmatpush.bf16.msra.mxu0 %v1172
      %1186 = vmatpush.bf16.msra.mxu0 %v1171
      %1187 = vmatpush.bf16.msra.mxu0 %v1170
      %1188 = vmatpush.bf16.msra.mxu0 %v1169
      %1189 = vmatpush.bf16.msra.mxu0 %v1168
      %1190 = vmatpush.bf16.msra.mxu0 %v1167
      %1191 = vmatmul.bf16.gmra.mxu0 %v1127
      %v1192 = vpop.f32.mrf.mxu0
      %v1193 = vadd.f32 0.0, %v1192
      %v1194 = vpop.f32.mrf.mxu0
      %v1195 = vadd.f32 0.0, %v1194
      %1196 = vmatmul.bf16.gmra.mxu0 %v1128
      %v1197 = vpop.f32.mrf.mxu0
      %v1198 = vadd.f32 0.0, %v1197
      %v1199 = vpop.f32.mrf.mxu0
      %v1200 = vadd.f32 0.0, %v1199
      %1201 = vmatmul.bf16.gmra.mxu0 %v1129
      %v1202 = vpop.f32.mrf.mxu0
      %v1203 = vadd.f32 0.0, %v1202
      %v1204 = vpop.f32.mrf.mxu0
      %v1205 = vadd.f32 0.0, %v1204
      %1206 = vmatmul.bf16.gmra.mxu0 %v1130
      %v1207 = vpop.f32.mrf.mxu0
      %v1208 = vadd.f32 0.0, %v1207
      %v1209 = vpop.f32.mrf.mxu0
      %v1210 = vadd.f32 0.0, %v1209
      %1211 = vdwg.mxu0
      %v1212 = vadd.f32 %v966, %v1193
      %v1213 = vadd.f32 %v967, %v1195
      %v1214 = vadd.f32 %v968, %v1198
      %v1215 = vadd.f32 %v969, %v1200
      %v1216 = vadd.f32 %v970, %v1203
      %v1217 = vadd.f32 %v971, %v1205
      %v1218 = vadd.f32 %v972, %v1208
      %v1219 = vadd.f32 %v973, %v1210
      %s1220 = scalar_lea.vmem %s196, 8
      %v1221 = vld [vmem:[%s1220] sm:$0xf]
      %v1222 = vld [vmem:[%s1220 + $0x8] sm:$0xf]
      %v1223 = vld [vmem:[%s1220 + $0x10] sm:$0xf]
      %v1224 = vld [vmem:[%s1220 + $0x18] sm:$0xf]
      %v1225 = vld [vmem:[%s1220 + $0x20] sm:$0xf]
      %v1226 = vld [vmem:[%s1220 + $0x28] sm:$0xf]
      %v1227 = vld [vmem:[%s1220 + $0x30] sm:$0xf]
      %v1228 = vld [vmem:[%s1220 + $0x38] sm:$0xf]
      %s1229 = scalar_lea.vmem %s1, 384
      %v1230 = vld [vmem:[%s1229] sm:$0xf]
      %v1231 = vld [vmem:[%s1229 + $0x4] sm:$0xf]
      %v1232 = vld [vmem:[%s1229 + $0x8] sm:$0xf]
      %v1233 = vld [vmem:[%s1229 + $0xc] sm:$0xf]
      %v1234 = vld [vmem:[%s1229 + $0x10] sm:$0xf]
      %v1235 = vld [vmem:[%s1229 + $0x14] sm:$0xf]
      %v1236 = vld [vmem:[%s1229 + $0x18] sm:$0xf]
      %v1237 = vld [vmem:[%s1229 + $0x1c] sm:$0xf]
      %v1238 = vld [vmem:[%s1229 + $0x20] sm:$0xf]
      %v1239 = vld [vmem:[%s1229 + $0x24] sm:$0xf]
      %v1240 = vld [vmem:[%s1229 + $0x28] sm:$0xf]
      %v1241 = vld [vmem:[%s1229 + $0x2c] sm:$0xf]
      %v1242 = vld [vmem:[%s1229 + $0x30] sm:$0xf]
      %v1243 = vld [vmem:[%s1229 + $0x34] sm:$0xf]
      %v1244 = vld [vmem:[%s1229 + $0x38] sm:$0xf]
      %v1245 = vld [vmem:[%s1229 + $0x3c] sm:$0xf]
      %v1254 = vunpack.c.l.b16 %v1221
      %v1255 = vunpack.c.l.b16 %v1222
      %v1256 = vunpack.c.l.b16 %v1223
      %v1257 = vunpack.c.l.b16 %v1224
      %v1258 = vunpack.c.l.b16 %v1225
      %v1259 = vunpack.c.l.b16 %v1226
      %v1260 = vunpack.c.l.b16 %v1227
      %v1261 = vunpack.c.l.b16 %v1228
      %v1262 = vpack.c.b16 %v1255, %v1254
      %v1263 = vpack.c.b16 %v1257, %v1256
      %v1264 = vpack.c.b16 %v1259, %v1258
      %v1265 = vpack.c.b16 %v1261, %v1260
      %v1286 = vunpack.c.l.b16 %v1230
      %v1287 = vunpack.c.l.b16 %v1231
      %v1288 = vunpack.c.l.b16 %v1232
      %v1289 = vunpack.c.l.b16 %v1233
      %v1290 = vunpack.c.l.b16 %v1234
      %v1291 = vunpack.c.l.b16 %v1235
      %v1292 = vunpack.c.l.b16 %v1236
      %v1293 = vunpack.c.l.b16 %v1237
      %v1294 = vunpack.c.l.b16 %v1238
      %v1295 = vunpack.c.l.b16 %v1239
      %v1296 = vunpack.c.l.b16 %v1240
      %v1297 = vunpack.c.l.b16 %v1241
      %v1298 = vunpack.c.l.b16 %v1242
      %v1299 = vunpack.c.l.b16 %v1243
      %v1300 = vunpack.c.l.b16 %v1244
      %v1301 = vunpack.c.l.b16 %v1245
      %v1302 = vpack.c.b16 %v1287, %v1286
      %v1303 = vpack.c.b16 %v1289, %v1288
      %v1304 = vpack.c.b16 %v1291, %v1290
      %v1305 = vpack.c.b16 %v1293, %v1292
      %v1306 = vpack.c.b16 %v1295, %v1294
      %v1307 = vpack.c.b16 %v1297, %v1296
      %v1308 = vpack.c.b16 %v1299, %v1298
      %v1309 = vpack.c.b16 %v1301, %v1300
      %1318 = vmatpush.bf16.msra.mxu0 %v1309
      %1319 = vmatpush.bf16.msra.mxu0 %v1308
      %1320 = vmatpush.bf16.msra.mxu0 %v1307
      %1321 = vmatpush.bf16.msra.mxu0 %v1306
      %1322 = vmatpush.bf16.msra.mxu0 %v1305
      %1323 = vmatpush.bf16.msra.mxu0 %v1304
      %1324 = vmatpush.bf16.msra.mxu0 %v1303
      %1325 = vmatpush.bf16.msra.mxu0 %v1302
      %1326 = vmatmul.bf16.gmra.mxu0 %v1262
      %v1327 = vpop.f32.mrf.mxu0
      %v1328 = vadd.f32 0.0, %v1327
      %v1329 = vpop.f32.mrf.mxu0
      %v1330 = vadd.f32 0.0, %v1329
      %1331 = vmatmul.bf16.gmra.mxu0 %v1263
      %v1332 = vpop.f32.mrf.mxu0
      %v1333 = vadd.f32 0.0, %v1332
      %v1334 = vpop.f32.mrf.mxu0
      %v1335 = vadd.f32 0.0, %v1334
      %1336 = vmatmul.bf16.gmra.mxu0 %v1264
      %v1337 = vpop.f32.mrf.mxu0
      %v1338 = vadd.f32 0.0, %v1337
      %v1339 = vpop.f32.mrf.mxu0
      %v1340 = vadd.f32 0.0, %v1339
      %1341 = vmatmul.bf16.gmra.mxu0 %v1265
      %v1342 = vpop.f32.mrf.mxu0
      %v1343 = vadd.f32 0.0, %v1342
      %v1344 = vpop.f32.mrf.mxu0
      %v1345 = vadd.f32 0.0, %v1344
      %1346 = vdwg.mxu0
      %v1347 = vadd.f32 %v1212, %v1328
      %v1348 = vadd.f32 %v1213, %v1330
      %v1349 = vadd.f32 %v1214, %v1333
      %v1350 = vadd.f32 %v1215, %v1335
      %v1351 = vadd.f32 %v1216, %v1338
      %v1352 = vadd.f32 %v1217, %v1340
      %v1353 = vadd.f32 %v1218, %v1343
      %v1354 = vadd.f32 %v1219, %v1345
      %s1355 = scalar_lea.vmem %s196, 80
      %v1356 = vld [vmem:[%s1355] sm:$0xf]
      %v1357 = vld [vmem:[%s1355 + $0x8] sm:$0xf]
      %v1358 = vld [vmem:[%s1355 + $0x10] sm:$0xf]
      %v1359 = vld [vmem:[%s1355 + $0x18] sm:$0xf]
      %v1360 = vld [vmem:[%s1355 + $0x20] sm:$0xf]
      %v1361 = vld [vmem:[%s1355 + $0x28] sm:$0xf]
      %v1362 = vld [vmem:[%s1355 + $0x30] sm:$0xf]
      %v1363 = vld [vmem:[%s1355 + $0x38] sm:$0xf]
      %s1364 = scalar_lea.vmem %s1, 448
      %v1365 = vld [vmem:[%s1364] sm:$0xf]
      %v1366 = vld [vmem:[%s1364 + $0x4] sm:$0xf]
      %v1367 = vld [vmem:[%s1364 + $0x8] sm:$0xf]
      %v1368 = vld [vmem:[%s1364 + $0xc] sm:$0xf]
      %v1369 = vld [vmem:[%s1364 + $0x10] sm:$0xf]
      %v1370 = vld [vmem:[%s1364 + $0x14] sm:$0xf]
      %v1371 = vld [vmem:[%s1364 + $0x18] sm:$0xf]
      %v1372 = vld [vmem:[%s1364 + $0x1c] sm:$0xf]
      %v1373 = vld [vmem:[%s1364 + $0x20] sm:$0xf]
      %v1374 = vld [vmem:[%s1364 + $0x24] sm:$0xf]
      %v1375 = vld [vmem:[%s1364 + $0x28] sm:$0xf]
      %v1376 = vld [vmem:[%s1364 + $0x2c] sm:$0xf]
      %v1377 = vld [vmem:[%s1364 + $0x30] sm:$0xf]
      %v1378 = vld [vmem:[%s1364 + $0x34] sm:$0xf]
      %v1379 = vld [vmem:[%s1364 + $0x38] sm:$0xf]
      %v1380 = vld [vmem:[%s1364 + $0x3c] sm:$0xf]
      %v1389 = vunpack.c.l.b16 %v1356
      %v1390 = vunpack.c.l.b16 %v1357
      %v1391 = vunpack.c.l.b16 %v1358
      %v1392 = vunpack.c.l.b16 %v1359
      %v1393 = vunpack.c.l.b16 %v1360
      %v1394 = vunpack.c.l.b16 %v1361
      %v1395 = vunpack.c.l.b16 %v1362
      %v1396 = vunpack.c.l.b16 %v1363
      %v1397 = vpack.c.b16 %v1390, %v1389
      %v1398 = vpack.c.b16 %v1392, %v1391
      %v1399 = vpack.c.b16 %v1394, %v1393
      %v1400 = vpack.c.b16 %v1396, %v1395
      %v1421 = vunpack.c.l.b16 %v1365
      %v1422 = vunpack.c.l.b16 %v1366
      %v1423 = vunpack.c.l.b16 %v1367
      %v1424 = vunpack.c.l.b16 %v1368
      %v1425 = vunpack.c.l.b16 %v1369
      %v1426 = vunpack.c.l.b16 %v1370
      %v1427 = vunpack.c.l.b16 %v1371
      %v1428 = vunpack.c.l.b16 %v1372
      %v1429 = vunpack.c.l.b16 %v1373
      %v1430 = vunpack.c.l.b16 %v1374
      %v1431 = vunpack.c.l.b16 %v1375
      %v1432 = vunpack.c.l.b16 %v1376
      %v1433 = vunpack.c.l.b16 %v1377
      %v1434 = vunpack.c.l.b16 %v1378
      %v1435 = vunpack.c.l.b16 %v1379
      %v1436 = vunpack.c.l.b16 %v1380
      %v1437 = vpack.c.b16 %v1422, %v1421
      %v1438 = vpack.c.b16 %v1424, %v1423
      %v1439 = vpack.c.b16 %v1426, %v1425
      %v1440 = vpack.c.b16 %v1428, %v1427
      %v1441 = vpack.c.b16 %v1430, %v1429
      %v1442 = vpack.c.b16 %v1432, %v1431
      %v1443 = vpack.c.b16 %v1434, %v1433
      %v1444 = vpack.c.b16 %v1436, %v1435
      %1453 = vmatpush.bf16.msra.mxu0 %v1444
      %1454 = vmatpush.bf16.msra.mxu0 %v1443
      %1455 = vmatpush.bf16.msra.mxu0 %v1442
      %1456 = vmatpush.bf16.msra.mxu0 %v1441
      %1457 = vmatpush.bf16.msra.mxu0 %v1440
      %1458 = vmatpush.bf16.msra.mxu0 %v1439
      %1459 = vmatpush.bf16.msra.mxu0 %v1438
      %1460 = vmatpush.bf16.msra.mxu0 %v1437
      %1461 = vmatmul.bf16.gmra.mxu0 %v1397
      %v1462 = vpop.f32.mrf.mxu0
      %v1463 = vadd.f32 0.0, %v1462
      %v1464 = vpop.f32.mrf.mxu0
      %v1465 = vadd.f32 0.0, %v1464
      %1466 = vmatmul.bf16.gmra.mxu0 %v1398
      %v1467 = vpop.f32.mrf.mxu0
      %v1468 = vadd.f32 0.0, %v1467
      %v1469 = vpop.f32.mrf.mxu0
      %v1470 = vadd.f32 0.0, %v1469
      %1471 = vmatmul.bf16.gmra.mxu0 %v1399
      %v1472 = vpop.f32.mrf.mxu0
      %v1473 = vadd.f32 0.0, %v1472
      %v1474 = vpop.f32.mrf.mxu0
      %v1475 = vadd.f32 0.0, %v1474
      %1476 = vmatmul.bf16.gmra.mxu0 %v1400
      %v1477 = vpop.f32.mrf.mxu0
      %v1478 = vadd.f32 0.0, %v1477
      %v1479 = vpop.f32.mrf.mxu0
      %v1480 = vadd.f32 0.0, %v1479
      %1481 = vdwg.mxu0
      %v1482 = vadd.f32 %v1347, %v1463
      %v1483 = vadd.f32 %v1348, %v1465
      %v1484 = vadd.f32 %v1349, %v1468
      %v1485 = vadd.f32 %v1350, %v1470
      %v1486 = vadd.f32 %v1351, %v1473
      %v1487 = vadd.f32 %v1352, %v1475
      %v1488 = vadd.f32 %v1353, %v1478
      %v1489 = vadd.f32 %v1354, %v1480
      %v1490 = vld [vmem:[%s1220] sm:$0xf]
      %v1491 = vld [vmem:[%s1220 + $0x4] sm:$0x1]
      %v1492 = vld [vmem:[%s1220 + $0x8] sm:$0xf]
      %v1493 = vld [vmem:[%s1220 + $0xc] sm:$0x1]
      %v1494 = vld [vmem:[%s1220 + $0x10] sm:$0xf]
      %v1495 = vld [vmem:[%s1220 + $0x14] sm:$0x1]
      %v1496 = vld [vmem:[%s1220 + $0x18] sm:$0xf]
      %v1497 = vld [vmem:[%s1220 + $0x1c] sm:$0x1]
      %v1498 = vld [vmem:[%s1220 + $0x20] sm:$0xf]
      %v1499 = vld [vmem:[%s1220 + $0x24] sm:$0x1]
      %v1500 = vld [vmem:[%s1220 + $0x28] sm:$0xf]
      %v1501 = vld [vmem:[%s1220 + $0x2c] sm:$0x1]
      %v1502 = vld [vmem:[%s1220 + $0x30] sm:$0xf]
      %v1503 = vld [vmem:[%s1220 + $0x34] sm:$0x1]
      %v1504 = vld [vmem:[%s1220 + $0x38] sm:$0xf]
      %v1505 = vld [vmem:[%s1220 + $0x3c] sm:$0x1]
      %v1507 = vshrl.u32 %v1490, 16
      %v1509 = vrot.slane %v1507, 4
      %v1510 = vshll.u32 %v1490, 16
      %v1512 = vrot.slane %v1510, 5
      %v1513 = vor.u32 %v1509, %v1512
      %v1514 = vrot.slane %v1513, 4
      %v1516 = vshll.u32 %v1491, 16
      %v1518 = vrot.slane %v1516, 5
      %v1519 = vsel %vm473, %v1514, %v1518
      %v1521 = vshrl.u32 %v1492, 16
      %v1523 = vrot.slane %v1521, 4
      %v1524 = vshll.u32 %v1492, 16
      %v1526 = vrot.slane %v1524, 5
      %v1527 = vor.u32 %v1523, %v1526
      %v1528 = vrot.slane %v1527, 4
      %v1530 = vshll.u32 %v1493, 16
      %v1532 = vrot.slane %v1530, 5
      %v1533 = vsel %vm473, %v1528, %v1532
      %v1535 = vshrl.u32 %v1494, 16
      %v1537 = vrot.slane %v1535, 4
      %v1538 = vshll.u32 %v1494, 16
      %v1540 = vrot.slane %v1538, 5
      %v1541 = vor.u32 %v1537, %v1540
      %v1542 = vrot.slane %v1541, 4
      %v1544 = vshll.u32 %v1495, 16
      %v1546 = vrot.slane %v1544, 5
      %v1547 = vsel %vm473, %v1542, %v1546
      %v1549 = vshrl.u32 %v1496, 16
      %v1551 = vrot.slane %v1549, 4
      %v1552 = vshll.u32 %v1496, 16
      %v1554 = vrot.slane %v1552, 5
      %v1555 = vor.u32 %v1551, %v1554
      %v1556 = vrot.slane %v1555, 4
      %v1558 = vshll.u32 %v1497, 16
      %v1560 = vrot.slane %v1558, 5
      %v1561 = vsel %vm473, %v1556, %v1560
      %v1563 = vshrl.u32 %v1498, 16
      %v1565 = vrot.slane %v1563, 4
      %v1566 = vshll.u32 %v1498, 16
      %v1568 = vrot.slane %v1566, 5
      %v1569 = vor.u32 %v1565, %v1568
      %v1570 = vrot.slane %v1569, 4
      %v1572 = vshll.u32 %v1499, 16
      %v1574 = vrot.slane %v1572, 5
      %v1575 = vsel %vm473, %v1570, %v1574
      %v1577 = vshrl.u32 %v1500, 16
      %v1579 = vrot.slane %v1577, 4
      %v1580 = vshll.u32 %v1500, 16
      %v1582 = vrot.slane %v1580, 5
      %v1583 = vor.u32 %v1579, %v1582
      %v1584 = vrot.slane %v1583, 4
      %v1586 = vshll.u32 %v1501, 16
      %v1588 = vrot.slane %v1586, 5
      %v1589 = vsel %vm473, %v1584, %v1588
      %v1591 = vshrl.u32 %v1502, 16
      %v1593 = vrot.slane %v1591, 4
      %v1594 = vshll.u32 %v1502, 16
      %v1596 = vrot.slane %v1594, 5
      %v1597 = vor.u32 %v1593, %v1596
      %v1598 = vrot.slane %v1597, 4
      %v1600 = vshll.u32 %v1503, 16
      %v1602 = vrot.slane %v1600, 5
      %v1603 = vsel %vm473, %v1598, %v1602
      %v1605 = vshrl.u32 %v1504, 16
      %v1607 = vrot.slane %v1605, 4
      %v1608 = vshll.u32 %v1504, 16
      %v1610 = vrot.slane %v1608, 5
      %v1611 = vor.u32 %v1607, %v1610
      %v1612 = vrot.slane %v1611, 4
      %v1614 = vshll.u32 %v1505, 16
      %v1616 = vrot.slane %v1614, 5
      %v1617 = vsel %vm473, %v1612, %v1616
      %s1618 = scalar_lea.vmem %s1, 512
      %v1619 = vld [vmem:[%s1618] sm:$0xf]
      %v1620 = vld [vmem:[%s1618 + $0x4] sm:$0xf]
      %v1621 = vld [vmem:[%s1618 + $0x8] sm:$0xf]
      %v1622 = vld [vmem:[%s1618 + $0xc] sm:$0xf]
      %v1623 = vld [vmem:[%s1618 + $0x10] sm:$0xf]
      %v1624 = vld [vmem:[%s1618 + $0x14] sm:$0xf]
      %v1625 = vld [vmem:[%s1618 + $0x18] sm:$0xf]
      %v1626 = vld [vmem:[%s1618 + $0x1c] sm:$0xf]
      %v1627 = vld [vmem:[%s1618 + $0x20] sm:$0xf]
      %v1628 = vld [vmem:[%s1618 + $0x24] sm:$0xf]
      %v1629 = vld [vmem:[%s1618 + $0x28] sm:$0xf]
      %v1630 = vld [vmem:[%s1618 + $0x2c] sm:$0xf]
      %v1631 = vld [vmem:[%s1618 + $0x30] sm:$0xf]
      %v1632 = vld [vmem:[%s1618 + $0x34] sm:$0xf]
      %v1633 = vld [vmem:[%s1618 + $0x38] sm:$0xf]
      %v1634 = vld [vmem:[%s1618 + $0x3c] sm:$0xf]
      %v1635 = vunpack.c.l.b16 %v1519
      %v1636 = vunpack.c.l.b16 %v1533
      %v1637 = vunpack.c.l.b16 %v1547
      %v1638 = vunpack.c.l.b16 %v1561
      %v1639 = vunpack.c.l.b16 %v1575
      %v1640 = vunpack.c.l.b16 %v1589
      %v1641 = vunpack.c.l.b16 %v1603
      %v1642 = vunpack.c.l.b16 %v1617
      %v1643 = vpack.c.b16 %v1636, %v1635
      %v1644 = vpack.c.b16 %v1638, %v1637
      %v1645 = vpack.c.b16 %v1640, %v1639
      %v1646 = vpack.c.b16 %v1642, %v1641
      %v1667 = vunpack.c.l.b16 %v1619
      %v1668 = vunpack.c.l.b16 %v1620
      %v1669 = vunpack.c.l.b16 %v1621
      %v1670 = vunpack.c.l.b16 %v1622
      %v1671 = vunpack.c.l.b16 %v1623
      %v1672 = vunpack.c.l.b16 %v1624
      %v1673 = vunpack.c.l.b16 %v1625
      %v1674 = vunpack.c.l.b16 %v1626
      %v1675 = vunpack.c.l.b16 %v1627
      %v1676 = vunpack.c.l.b16 %v1628
      %v1677 = vunpack.c.l.b16 %v1629
      %v1678 = vunpack.c.l.b16 %v1630
      %v1679 = vunpack.c.l.b16 %v1631
      %v1680 = vunpack.c.l.b16 %v1632
      %v1681 = vunpack.c.l.b16 %v1633
      %v1682 = vunpack.c.l.b16 %v1634
      %v1683 = vpack.c.b16 %v1668, %v1667
      %v1684 = vpack.c.b16 %v1670, %v1669
      %v1685 = vpack.c.b16 %v1672, %v1671
      %v1686 = vpack.c.b16 %v1674, %v1673
      %v1687 = vpack.c.b16 %v1676, %v1675
      %v1688 = vpack.c.b16 %v1678, %v1677
      %v1689 = vpack.c.b16 %v1680, %v1679
      %v1690 = vpack.c.b16 %v1682, %v1681
      %1699 = vmatpush.bf16.msra.mxu0 %v1690
      %1700 = vmatpush.bf16.msra.mxu0 %v1689
      %1701 = vmatpush.bf16.msra.mxu0 %v1688
      %1702 = vmatpush.bf16.msra.mxu0 %v1687
      %1703 = vmatpush.bf16.msra.mxu0 %v1686
      %1704 = vmatpush.bf16.msra.mxu0 %v1685
      %1705 = vmatpush.bf16.msra.mxu0 %v1684
      %1706 = vmatpush.bf16.msra.mxu0 %v1683
      %1707 = vmatmul.bf16.gmra.mxu0 %v1643
      %v1708 = vpop.f32.mrf.mxu0
      %v1709 = vadd.f32 0.0, %v1708
      %v1710 = vpop.f32.mrf.mxu0
      %v1711 = vadd.f32 0.0, %v1710
      %1712 = vmatmul.bf16.gmra.mxu0 %v1644
      %v1713 = vpop.f32.mrf.mxu0
      %v1714 = vadd.f32 0.0, %v1713
      %v1715 = vpop.f32.mrf.mxu0
      %v1716 = vadd.f32 0.0, %v1715
      %1717 = vmatmul.bf16.gmra.mxu0 %v1645
      %v1718 = vpop.f32.mrf.mxu0
      %v1719 = vadd.f32 0.0, %v1718
      %v1720 = vpop.f32.mrf.mxu0
      %v1721 = vadd.f32 0.0, %v1720
      %1722 = vmatmul.bf16.gmra.mxu0 %v1646
      %v1723 = vpop.f32.mrf.mxu0
      %v1724 = vadd.f32 0.0, %v1723
      %v1725 = vpop.f32.mrf.mxu0
      %v1726 = vadd.f32 0.0, %v1725
      %1727 = vdwg.mxu0
      %v1728 = vadd.f32 %v1482, %v1709
      %v1729 = vadd.f32 %v1483, %v1711
      %v1730 = vadd.f32 %v1484, %v1714
      %v1731 = vadd.f32 %v1485, %v1716
      %v1732 = vadd.f32 %v1486, %v1719
      %v1733 = vadd.f32 %v1487, %v1721
      %v1734 = vadd.f32 %v1488, %v1724
      %v1735 = vadd.f32 %v1489, %v1726
      %v1736 = vld [vmem:[%s2] sm:$0x1]
      %v1738 = vperm.slane %v1736, 0
      %v1740 = vmul.f32 %v1728, %v1738
      %v1741 = vmul.f32 %v1729, %v1738
      %v1742 = vmul.f32 %v1730, %v1738
      %v1743 = vmul.f32 %v1731, %v1738
      %v1744 = vmul.f32 %v1732, %v1738
      %v1745 = vmul.f32 %v1733, %v1738
      %v1746 = vmul.f32 %v1734, %v1738
      %v1747 = vmul.f32 %v1735, %v1738
      %v1748 = vld [vmem:[%s3] sm:$0x1]
      %v1750 = vperm.slane %v1748, 0
      %v1752 = vadd.f32 %v1740, %v1750
      %v1753 = vadd.f32 %v1741, %v1750
      %v1754 = vadd.f32 %v1742, %v1750
      %v1755 = vadd.f32 %v1743, %v1750
      %v1756 = vadd.f32 %v1744, %v1750
      %v1757 = vadd.f32 %v1745, %v1750
      %v1758 = vadd.f32 %v1746, %v1750
      %v1759 = vadd.f32 %v1747, %v1750
      %v1760 = vmax.f32 %v1752, 0.0
      %v1761 = vmax.f32 %v1753, 0.0
      %v1762 = vmax.f32 %v1754, 0.0
      %v1763 = vmax.f32 %v1755, 0.0
      %v1764 = vmax.f32 %v1756, 0.0
      %v1765 = vmax.f32 %v1757, 0.0
      %v1766 = vmax.f32 %v1758, 0.0
      %v1767 = vmax.f32 %v1759, 0.0
      %1768 = vst [vmem:[%s202] sm:$0xff] %v1760
      %1769 = vst [vmem:[%s202 + $0x8] sm:$0xff] %v1761
      %1770 = vst [vmem:[%s202 + $0x10] sm:$0xff] %v1762
      %1771 = vst [vmem:[%s202 + $0x18] sm:$0xff] %v1763
      %1772 = vst [vmem:[%s202 + $0x20] sm:$0xff] %v1764
      %1773 = vst [vmem:[%s202 + $0x28] sm:$0xff] %v1765
      %1774 = vst [vmem:[%s202 + $0x30] sm:$0xff] %v1766
      %1775 = vst [vmem:[%s202 + $0x38] sm:$0xff] %v1767
      %p1776 = scmp.lt.s32.totalorder %s15, 1
      %s1777 = scalar_select %p1776, %s15, 1
      %s1778 = smul.addr %s1777, 8
      %s1779 = smul.addr %s1778, 8
      %s1780 = scalar_lea.vmem %s4, %s1779
      // Predicated region
      $region37: #{inception_branch_factorization1_forward.5} parent=35 // pred_check
        %p1781 = pneg %p122
      $region38: #{inception_branch_factorization1_forward.5} parent=35 // pred_check_branch
        %1783 = sbr.rel (%p1781) target = $region40
      $region39: #{inception_branch_factorization1_forward.5} parent=35 // pred_region
        _
      $region40: #{inception_branch_factorization1_forward.5} parent=35 // pred_fallthru
        _
    $region36: #{inception_branch_factorization1_forward.5} parent=5 // pred_fallthru
      _
    %p1784 = scmp.le.s32.totalorder 2, %s10
    // Predicated region
    $region41: #{inception_branch_factorization1_forward.5} parent=5 // pred_check
      %p1785 = pneg %p1784
    $region42: #{inception_branch_factorization1_forward.5} parent=5 // pred_check_branch
      %1787 = sbr.rel (%p1785) target = $region44
    $region43: #{inception_branch_factorization1_forward.5} parent=5 // pred_region
      %s1788 = ssub.s32 %s10, 2
      // Predicated region
      $region45: #{inception_branch_factorization1_forward.5} parent=43 // pred_check
        %p1789 = pneg %p128
      $region46: #{inception_branch_factorization1_forward.5} parent=43 // pred_check_branch
        %1791 = sbr.rel (%p1789) target = $region48
      $region47: #{inception_branch_factorization1_forward.5} parent=43 // pred_region
        %p1792 = scmp.lt.s32.totalorder %s16, 1
        %s1793 = scalar_select %p1792, %s16, 1
        %s1794 = smul.addr %s1793, 8
        %s1795 = smul.addr %s1794, 8
        %s1796 = scalar_lea.vmem %s4, %s1795
      $region48: #{inception_branch_factorization1_forward.5} parent=43 // pred_fallthru
        _
    $region44: #{inception_branch_factorization1_forward.5} parent=5 // pred_fallthru
      _
  $region6: #{inception_branch_factorization1_forward.5} parent=0 // loop_footer
    %s14 = sadd.s32 1, %s10
  $region7: #{inception_branch_factorization1_forward.5} parent=0 // loop_footer_branch
    %9 = sbr.rel target = $region3
  $region8: #{inception_branch_factorization1_forward.5} parent=0 // loop_exit
    _

// kernel: inception_branch_factorization1_forward.4
$region0: #{inception_branch_factorization1_forward.4}
  #allocation0 [shape = 'u32[]', space=smem, size = 0x4, offset = 0x4, fixed_abs, tag = 'smem constant byte address 0x4 - core index']
  #allocation1 [shape = 'u32[72,128]{1,0:T(1,128)}', space=vmem, size = 0x9000, scoped, tag = 'internal scratch']
  %s0 = inlined_call_operand.vmem [shape: bf16[2,18,18,128], index: 0, kind: input, shape index: {}]
  %s1 = inlined_call_operand.vmem [shape: bf16[9,128,128], index: 1, kind: input, shape index: {}]
  %s2 = inlined_call_operand.vmem [shape: f32[1,128], index: 2, kind: input, shape index: {}]
  %s3 = inlined_call_operand.vmem [shape: f32[1,128], index: 3, kind: input, shape index: {}]
  %s4 = inlined_call_operand.vmem [shape: bf16[2,16,16,128], index: 4, kind: output, shape index: {}]
  %s5 = sld [smem:[#allocation0]]
  $region49: #{inception_branch_factorization1_forward.4} parent=0
    _
  %s7 = ssub.s32 1, %s5
  %s8 = scalar_select 0, %s7, %s5
  loop: start=0, step=1, limit=4
  $region2: #{inception_branch_factorization1_forward.4} parent=0 // loop_pre_header
    _
  $region3: #{inception_branch_factorization1_forward.4} parent=0 // loop_header
    %s10 = sphi 0, %s14
    %p11 = scmp.ge.s32.totalorder %s10, 4
    %s20 = sphi 0, %s22
    %s23 = sphi 0, %s20
    %s24 = sphi 0, %s23
    %s40 = sphi 0, %s24
    %s44 = sphi 0, %s44
    %s46 = sphi 0, %s44
    %s47 = sphi 0, %s46
    %s61 = sphi 0, %s47
    %s65 = sphi 0, %s65
    %s67 = sphi 0, %s65
    %s68 = sphi 0, %s67
    %s82 = sphi 0, %s68
    %s86 = sphi 0, %s86
    %s88 = sphi 0, %s86
    %s89 = sphi 0, %s88
    %s103 = sphi 0, %s89
    %s109 = sphi 0, %s111
    %s112 = sphi 0, %s109
    %s113 = sphi 0, %s112
    %s129 = sphi 0, %s113
  $region4: #{inception_branch_factorization1_forward.4} parent=0 // loop_header_branch
    %13 = sbr.rel (%p11) target = $region8
  $region5: #{inception_branch_factorization1_forward.4} parent=0 // loop_body
    %s15 = ssub.s32 %s10, 1
    %s16 = ssub.s32 %s10, 2
    %s17 = sadd.s32 %s10, 1
    %s18 = ssub.s32 %s10, %s17
    %p19 = scmp.eq.s32.totalorder %s18, 0
    %s21 = sadd.s32 %s20, 1
    %s22 = scalar_select %p19, %s20, %s21
    %p25 = pneg %p19
    %p26 = scmp.eq.s32.totalorder %s10, 1
    %p27 = por %p25, %p26
    %p28 = scmp.ne.s32.totalorder %s20, %s23
    %p29 = scmp.eq.s32.totalorder %s10, 0
    %p30 = por %p28, %p29
    %p31 = scmp.ne.s32.totalorder %s20, %s23
    %p32 = scmp.eq.s32.totalorder %s15, 1
    %p33 = por %p31, %p32
    %p34 = scmp.ne.s32.totalorder %s23, %s24
    %p35 = scmp.eq.s32.totalorder %s15, 0
    %p36 = por %p34, %p35
    %p37 = scmp.ne.s32.totalorder %s23, %s24
    %p38 = scmp.eq.s32.totalorder %s16, 1
    %p39 = por %p37, %p38
    %p41 = scmp.ne.s32.totalorder %s24, %s40
    %p42 = scmp.eq.s32.totalorder %s16, 0
    %p43 = por %p41, %p42
    %s45 = sadd.s32 %s44, 1
    %p48 = scmp.eq.s32.totalorder %s10, 1
    %p49 = scmp.ne.s32.totalorder %s44, %s46
    %p50 = scmp.eq.s32.totalorder %s10, 0
    %p51 = por %p49, %p50
    %p52 = scmp.ne.s32.totalorder %s44, %s46
    %p53 = scmp.eq.s32.totalorder %s15, 1
    %p54 = por %p52, %p53
    %p55 = scmp.ne.s32.totalorder %s46, %s47
    %p56 = scmp.eq.s32.totalorder %s15, 0
    %p57 = por %p55, %p56
    %p58 = scmp.ne.s32.totalorder %s46, %s47
    %p59 = scmp.eq.s32.totalorder %s16, 1
    %p60 = por %p58, %p59
    %p62 = scmp.ne.s32.totalorder %s47, %s61
    %p63 = scmp.eq.s32.totalorder %s16, 0
    %p64 = por %p62, %p63
    %s66 = sadd.s32 %s65, 1
    %p69 = scmp.eq.s32.totalorder %s10, 1
    %p70 = scmp.ne.s32.totalorder %s65, %s67
    %p71 = scmp.eq.s32.totalorder %s10, 0
    %p72 = por %p70, %p71
    %p73 = scmp.ne.s32.totalorder %s65, %s67
    %p74 = scmp.eq.s32.totalorder %s15, 1
    %p75 = por %p73, %p74
    %p76 = scmp.ne.s32.totalorder %s67, %s68
    %p77 = scmp.eq.s32.totalorder %s15, 0
    %p78 = por %p76, %p77
    %p79 = scmp.ne.s32.totalorder %s67, %s68
    %p80 = scmp.eq.s32.totalorder %s16, 1
    %p81 = por %p79, %p80
    %p83 = scmp.ne.s32.totalorder %s68, %s82
    %p84 = scmp.eq.s32.totalorder %s16, 0
    %p85 = por %p83, %p84
    %s87 = sadd.s32 %s86, 1
    %p90 = scmp.eq.s32.totalorder %s10, 1
    %p91 = scmp.ne.s32.totalorder %s86, %s88
    %p92 = scmp.eq.s32.totalorder %s10, 0
    %p93 = por %p91, %p92
    %p94 = scmp.ne.s32.totalorder %s86, %s88
    %p95 = scmp.eq.s32.totalorder %s15, 1
    %p96 = por %p94, %p95
    %p97 = scmp.ne.s32.totalorder %s88, %s89
    %p98 = scmp.eq.s32.totalorder %s15, 0
    %p99 = por %p97, %p98
    %p100 = scmp.ne.s32.totalorder %s88, %s89
    %p101 = scmp.eq.s32.totalorder %s16, 1
    %p102 = por %p100, %p101
    %p104 = scmp.ne.s32.totalorder %s89, %s103
    %p105 = scmp.eq.s32.totalorder %s16, 0
    %p106 = por %p104, %p105
    %s107 = ssub.s32 %s10, %s17
    %p108 = scmp.eq.s32.totalorder %s107, 0
    %s110 = sadd.s32 %s109, 1
    %s111 = scalar_select %p108, %s109, %s110
    %p114 = pneg %p108
    %p115 = scmp.eq.s32.totalorder %s10, 1
    %p116 = por %p114, %p115
    %p117 = scmp.ne.s32.totalorder %s109, %s112
    %p118 = scmp.eq.s32.totalorder %s10, 0
    %p119 = por %p117, %p118
    %p120 = scmp.ne.s32.totalorder %s109, %s112
    %p121 = scmp.eq.s32.totalorder %s15, 1
    %p122 = por %p120, %p121
    %p123 = scmp.ne.s32.totalorder %s112, %s113
    %p124 = scmp.eq.s32.totalorder %s15, 0
    %p125 = por %p123, %p124
    %p126 = scmp.ne.s32.totalorder %s112, %s113
    %p127 = scmp.eq.s32.totalorder %s16, 1
    %p128 = por %p126, %p127
    %p130 = scmp.ne.s32.totalorder %s113, %s129
    %p131 = scmp.eq.s32.totalorder %s16, 0
    %p132 = por %p130, %p131
    %p133 = scmp.le.s32.totalorder 1, %s10
    %p134 = scmp.lt.s32.totalorder %s10, 3
    %p135 = pnand %p133, %p134
    %p136 = pneg %p135
    // Predicated region
    $region9: #{inception_branch_factorization1_forward.4} parent=5 // pred_check
      _
    $region10: #{inception_branch_factorization1_forward.4} parent=5 // pred_check_branch
      %138 = sbr.rel (%p135) target = $region12
    $region11: #{inception_branch_factorization1_forward.4} parent=5 // pred_region
      %s139 = ssub.s32 %s10, 1
      // Predicated region
      $region13: #{inception_branch_factorization1_forward.4} parent=11 // pred_check
        %p140 = pneg %p57
      $region14: #{inception_branch_factorization1_forward.4} parent=11 // pred_check_branch
        %142 = sbr.rel (%p140) target = $region16
      $region15: #{inception_branch_factorization1_forward.4} parent=11 // pred_region
        _
      $region16: #{inception_branch_factorization1_forward.4} parent=11 // pred_fallthru
        _
      // Predicated region
      $region17: #{inception_branch_factorization1_forward.4} parent=11 // pred_check
        %p143 = pneg %p78
      $region18: #{inception_branch_factorization1_forward.4} parent=11 // pred_check_branch
        %145 = sbr.rel (%p143) target = $region20
      $region19: #{inception_branch_factorization1_forward.4} parent=11 // pred_region
        _
      $region20: #{inception_branch_factorization1_forward.4} parent=11 // pred_fallthru
        _
      // Predicated region
      $region21: #{inception_branch_factorization1_forward.4} parent=11 // pred_check
        %p146 = pneg %p99
      $region22: #{inception_branch_factorization1_forward.4} parent=11 // pred_check_branch
        %148 = sbr.rel (%p146) target = $region24
      $region23: #{inception_branch_factorization1_forward.4} parent=11 // pred_region
        _
      $region24: #{inception_branch_factorization1_forward.4} parent=11 // pred_fallthru
        _
    $region12: #{inception_branch_factorization1_forward.4} parent=5 // pred_fallthru
      _
    %p149 = scmp.lt.s32.totalorder %s10, 2
    // Predicated region
    $region25: #{inception_branch_factorization1_forward.4} parent=5 // pred_check
      %p150 = pneg %p149
    $region26: #{inception_branch_factorization1_forward.4} parent=5 // pred_check_branch
      %152 = sbr.rel (%p150) target = $region28
    $region27: #{inception_branch_factorization1_forward.4} parent=5 // pred_region
      // Predicated region
      $region29: #{inception_branch_factorization1_forward.4} parent=27 // pred_check
        %p153 = pneg %p30
      $region30: #{inception_branch_factorization1_forward.4} parent=27 // pred_check_branch
        %155 = sbr.rel (%p153) target = $region32
      $region31: #{inception_branch_factorization1_forward.4} parent=27 // pred_region
        %p156 = scmp.lt.s32.totalorder %s10, 1
        %s157 = scalar_select %p156, %s10, 1
        %s158 = smul.addr %s157, 54
        %s159 = smul.addr %s158, 4
        %s160 = scalar_lea.vmem %s0, %s159
      $region32: #{inception_branch_factorization1_forward.4} parent=27 // pred_fallthru
        _
    $region28: #{inception_branch_factorization1_forward.4} parent=5 // pred_fallthru
      _
    %p161 = scmp.le.s32.totalorder 1, %s10
    %p162 = scmp.lt.s32.totalorder %s10, 3
    %p163 = pnand %p161, %p162
    %p164 = pneg %p163
    // Predicated region
    $region33: #{inception_branch_factorization1_forward.4} parent=5 // pred_check
      _
    $region34: #{inception_branch_factorization1_forward.4} parent=5 // pred_check_branch
      %166 = sbr.rel (%p163) target = $region36
    $region35: #{inception_branch_factorization1_forward.4} parent=5 // pred_region
      %s167 = ssub.s32 %s10, 1
      %p168 = scmp.lt.s32.totalorder %s15, 1
      %s169 = scalar_select %p168, %s15, 1
      %s170 = smul.addr %s169, 54
      %s171 = smul.addr %s170, 4
      %s172 = scalar_lea.vmem %s0, %s171
      %p173 = pneg %p36
      %p174 = pneg %p33
      %p175 = pneg %p57
      %p176 = pneg %p54
      %p177 = pneg %p78
      %p178 = pneg %p75
      %p179 = pneg %p99
      %p180 = pneg %p96
      %p181 = pneg %p125
      %p182 = pneg %p122
      %p183 = scmp.lt.s32.totalorder %s15, 1
      %s184 = scalar_select %p183, %s15, 1
      %s185 = smul.addr %s184, 32
      %s186 = smul.addr %s185, 4
      %s187 = scalar_lea.vmem %s4, %s186
      %p188 = scmp.lt.s32.totalorder %s15, 1
      %s189 = scalar_select %p188, %s15, 1
      %s190 = smul.addr %s189, 54
      %s191 = smul.addr %s190, 4
      %s192 = scalar_lea.vmem %s0, %s191
      %p193 = scmp.lt.s32.totalorder %s15, 1
      %s194 = scalar_select %p193, %s15, 1
      %s195 = smul.addr %s194, 32
      %s196 = smul.addr %s195, 4
      %s197 = scalar_lea.vmem %s4, %s196
      %v198 = vld [vmem:[%s192] sm:$0xf]
      %v199 = vld [vmem:[%s192 + $0x4] sm:$0xf]
      %v200 = vld [vmem:[%s192 + $0xc] sm:$0xf]
      %v201 = vld [vmem:[%s192 + $0x10] sm:$0xf]
      %v202 = vld [vmem:[%s192 + $0x18] sm:$0xf]
      %v203 = vld [vmem:[%s192 + $0x1c] sm:$0xf]
      %v204 = vld [vmem:[%s192 + $0x24] sm:$0xf]
      %v205 = vld [vmem:[%s192 + $0x28] sm:$0xf]
      %v206 = vld [vmem:[%s192 + $0x30] sm:$0xf]
      %v207 = vld [vmem:[%s192 + $0x34] sm:$0xf]
      %v208 = vld [vmem:[%s192 + $0x3c] sm:$0xf]
      %v209 = vld [vmem:[%s192 + $0x40] sm:$0xf]
      %v210 = vld [vmem:[%s192 + $0x48] sm:$0xf]
      %v211 = vld [vmem:[%s192 + $0x4c] sm:$0xf]
      %v212 = vld [vmem:[%s192 + $0x54] sm:$0xf]
      %v213 = vld [vmem:[%s192 + $0x58] sm:$0xf]
      %v214 = vld [vmem:[%s192 + $0x60] sm:$0xf]
      %v215 = vld [vmem:[%s192 + $0x64] sm:$0xf]
      %v216 = vld [vmem:[%s192 + $0x6c] sm:$0xf]
      %v217 = vld [vmem:[%s192 + $0x70] sm:$0xf]
      %v218 = vld [vmem:[%s192 + $0x78] sm:$0xf]
      %v219 = vld [vmem:[%s192 + $0x7c] sm:$0xf]
      %v220 = vld [vmem:[%s192 + $0x84] sm:$0xf]
      %v221 = vld [vmem:[%s192 + $0x88] sm:$0xf]
      %v222 = vld [vmem:[%s192 + $0x90] sm:$0xf]
      %v223 = vld [vmem:[%s192 + $0x94] sm:$0xf]
      %v224 = vld [vmem:[%s192 + $0x9c] sm:$0xf]
      %v225 = vld [vmem:[%s192 + $0xa0] sm:$0xf]
      %v226 = vld [vmem:[%s192 + $0xa8] sm:$0xf]
      %v227 = vld [vmem:[%s192 + $0xac] sm:$0xf]
      %v228 = vld [vmem:[%s192 + $0xb4] sm:$0xf]
      %v229 = vld [vmem:[%s192 + $0xb8] sm:$0xf]
      %v230 = vld [vmem:[%s1] sm:$0xf]
      %v231 = vld [vmem:[%s1 + $0x4] sm:$0xf]
      %v232 = vld [vmem:[%s1 + $0x8] sm:$0xf]
      %v233 = vld [vmem:[%s1 + $0xc] sm:$0xf]
      %v234 = vld [vmem:[%s1 + $0x10] sm:$0xf]
      %v235 = vld [vmem:[%s1 + $0x14] sm:$0xf]
      %v236 = vld [vmem:[%s1 + $0x18] sm:$0xf]
      %v237 = vld [vmem:[%s1 + $0x1c] sm:$0xf]
      %v238 = vld [vmem:[%s1 + $0x20] sm:$0xf]
      %v239 = vld [vmem:[%s1 + $0x24] sm:$0xf]
      %v240 = vld [vmem:[%s1 + $0x28] sm:$0xf]
      %v241 = vld [vmem:[%s1 + $0x2c] sm:$0xf]
      %v242 = vld [vmem:[%s1 + $0x30] sm:$0xf]
      %v243 = vld [vmem:[%s1 + $0x34] sm:$0xf]
      %v244 = vld [vmem:[%s1 + $0x38] sm:$0xf]
      %v245 = vld [vmem:[%s1 + $0x3c] sm:$0xf]
      %v246 = vld [vmem:[%s192 + $0x8] sm:$0x1]
      %v247 = vld [vmem:[%s192 + $0x14] sm:$0x1]
      %v248 = vld [vmem:[%s192 + $0x20] sm:$0x1]
      %v249 = vld [vmem:[%s192 + $0x2c] sm:$0x1]
      %v250 = vld [vmem:[%s192 + $0x38] sm:$0x1]
      %v251 = vld [vmem:[%s192 + $0x44] sm:$0x1]
      %v252 = vld [vmem:[%s192 + $0x50] sm:$0x1]
      %v253 = vld [vmem:[%s192 + $0x5c] sm:$0x1]
      %v254 = vld [vmem:[%s192 + $0x68] sm:$0x1]
      %v255 = vld [vmem:[%s192 + $0x74] sm:$0x1]
      %v256 = vld [vmem:[%s192 + $0x80] sm:$0x1]
      %v257 = vld [vmem:[%s192 + $0x8c] sm:$0x1]
      %v258 = vld [vmem:[%s192 + $0x98] sm:$0x1]
      %v259 = vld [vmem:[%s192 + $0xa4] sm:$0x1]
      %v260 = vld [vmem:[%s192 + $0xb0] sm:$0x1]
      %v261 = vld [vmem:[%s192 + $0xbc] sm:$0x1]
      %vm262 = vsmask.f32 3328
      %vm263 = vsmask.f32 7440
      %vm264 = vmor %vm262, %vm263
      %v266 = vshrl.u32 %v198, 16
      %v268 = vrot.slane %v266, 4
      %v269 = vshll.u32 %v198, 16
      %v271 = vrot.slane %v269, 5
      %v272 = vor.u32 %v268, %v271
      %v273 = vrot.slane %v272, 4
      %v275 = vshll.u32 %v199, 16
      %v277 = vrot.slane %v275, 5
      %v278 = vsel %vm264, %v273, %v277
      %v279 = vshrl.u32 %v199, 16
      %v281 = vrot.slane %v279, 4
      %v282 = vor.u32 %v281, %v277
      %v283 = vrot.slane %v282, 4
      %v285 = vshll.u32 %v246, 16
      %v287 = vrot.slane %v285, 5
      %v288 = vsel %vm264, %v283, %v287
      %v290 = vshrl.u32 %v200, 16
      %v292 = vrot.slane %v290, 4
      %v293 = vshll.u32 %v200, 16
      %v295 = vrot.slane %v293, 5
      %v296 = vor.u32 %v292, %v295
      %v297 = vrot.slane %v296, 4
      %v299 = vshll.u32 %v201, 16
      %v301 = vrot.slane %v299, 5
      %v302 = vsel %vm264, %v297, %v301
      %v303 = vshrl.u32 %v201, 16
      %v305 = vrot.slane %v303, 4
      %v306 = vor.u32 %v305, %v301
      %v307 = vrot.slane %v306, 4
      %v309 = vshll.u32 %v247, 16
      %v311 = vrot.slane %v309, 5
      %v312 = vsel %vm264, %v307, %v311
      %v314 = vshrl.u32 %v202, 16
      %v316 = vrot.slane %v314, 4
      %v317 = vshll.u32 %v202, 16
      %v319 = vrot.slane %v317, 5
      %v320 = vor.u32 %v316, %v319
      %v321 = vrot.slane %v320, 4
      %v323 = vshll.u32 %v203, 16
      %v325 = vrot.slane %v323, 5
      %v326 = vsel %vm264, %v321, %v325
      %v327 = vshrl.u32 %v203, 16
      %v329 = vrot.slane %v327, 4
      %v330 = vor.u32 %v329, %v325
      %v331 = vrot.slane %v330, 4
      %v333 = vshll.u32 %v248, 16
      %v335 = vrot.slane %v333, 5
      %v336 = vsel %vm264, %v331, %v335
      %v338 = vshrl.u32 %v204, 16
      %v340 = vrot.slane %v338, 4
      %v341 = vshll.u32 %v204, 16
      %v343 = vrot.slane %v341, 5
      %v344 = vor.u32 %v340, %v343
      %v345 = vrot.slane %v344, 4
      %v347 = vshll.u32 %v205, 16
      %v349 = vrot.slane %v347, 5
      %v350 = vsel %vm264, %v345, %v349
      %v351 = vshrl.u32 %v205, 16
      %v353 = vrot.slane %v351, 4
      %v354 = vor.u32 %v353, %v349
      %v355 = vrot.slane %v354, 4
      %v357 = vshll.u32 %v249, 16
      %v359 = vrot.slane %v357, 5
      %v360 = vsel %vm264, %v355, %v359
      %v362 = vshrl.u32 %v206, 16
      %v364 = vrot.slane %v362, 4
      %v365 = vshll.u32 %v206, 16
      %v367 = vrot.slane %v365, 5
      %v368 = vor.u32 %v364, %v367
      %v369 = vrot.slane %v368, 4
      %v371 = vshll.u32 %v207, 16
      %v373 = vrot.slane %v371, 5
      %v374 = vsel %vm264, %v369, %v373
      %v375 = vshrl.u32 %v207, 16
      %v377 = vrot.slane %v375, 4
      %v378 = vor.u32 %v377, %v373
      %v379 = vrot.slane %v378, 4
      %v381 = vshll.u32 %v250, 16
      %v383 = vrot.slane %v381, 5
      %v384 = vsel %vm264, %v379, %v383
      %v386 = vshrl.u32 %v208, 16
      %v388 = vrot.slane %v386, 4
      %v389 = vshll.u32 %v208, 16
      %v391 = vrot.slane %v389, 5
      %v392 = vor.u32 %v388, %v391
      %v393 = vrot.slane %v392, 4
      %v395 = vshll.u32 %v209, 16
      %v397 = vrot.slane %v395, 5
      %v398 = vsel %vm264, %v393, %v397
      %v399 = vshrl.u32 %v209, 16
      %v401 = vrot.slane %v399, 4
      %v402 = vor.u32 %v401, %v397
      %v403 = vrot.slane %v402, 4
      %v405 = vshll.u32 %v251, 16
      %v407 = vrot.slane %v405, 5
      %v408 = vsel %vm264, %v403, %v407
      %v410 = vshrl.u32 %v210, 16
      %v412 = vrot.slane %v410, 4
      %v413 = vshll.u32 %v210, 16
      %v415 = vrot.slane %v413, 5
      %v416 = vor.u32 %v412, %v415
      %v417 = vrot.slane %v416, 4
      %v419 = vshll.u32 %v211, 16
      %v421 = vrot.slane %v419, 5
      %v422 = vsel %vm264, %v417, %v421
      %v423 = vshrl.u32 %v211, 16
      %v425 = vrot.slane %v423, 4
      %v426 = vor.u32 %v425, %v421
      %v427 = vrot.slane %v426, 4
      %v429 = vshll.u32 %v252, 16
      %v431 = vrot.slane %v429, 5
      %v432 = vsel %vm264, %v427, %v431
      %v434 = vshrl.u32 %v212, 16
      %v436 = vrot.slane %v434, 4
      %v437 = vshll.u32 %v212, 16
      %v439 = vrot.slane %v437, 5
      %v440 = vor.u32 %v436, %v439
      %v441 = vrot.slane %v440, 4
      %v443 = vshll.u32 %v213, 16
      %v445 = vrot.slane %v443, 5
      %v446 = vsel %vm264, %v441, %v445
      %v447 = vshrl.u32 %v213, 16
      %v449 = vrot.slane %v447, 4
      %v450 = vor.u32 %v449, %v445
      %v451 = vrot.slane %v450, 4
      %v453 = vshll.u32 %v253, 16
      %v455 = vrot.slane %v453, 5
      %v456 = vsel %vm264, %v451, %v455
      %v458 = vshrl.u32 %v214, 16
      %v460 = vrot.slane %v458, 4
      %v461 = vshll.u32 %v214, 16
      %v463 = vrot.slane %v461, 5
      %v464 = vor.u32 %v460, %v463
      %v465 = vrot.slane %v464, 4
      %v467 = vshll.u32 %v215, 16
      %v469 = vrot.slane %v467, 5
      %v470 = vsel %vm264, %v465, %v469
      %v471 = vshrl.u32 %v215, 16
      %v473 = vrot.slane %v471, 4
      %v474 = vor.u32 %v473, %v469
      %v475 = vrot.slane %v474, 4
      %v477 = vshll.u32 %v254, 16
      %v479 = vrot.slane %v477, 5
      %v480 = vsel %vm264, %v475, %v479
      %v482 = vshrl.u32 %v216, 16
      %v484 = vrot.slane %v482, 4
      %v485 = vshll.u32 %v216, 16
      %v487 = vrot.slane %v485, 5
      %v488 = vor.u32 %v484, %v487
      %v489 = vrot.slane %v488, 4
      %v491 = vshll.u32 %v217, 16
      %v493 = vrot.slane %v491, 5
      %v494 = vsel %vm264, %v489, %v493
      %v495 = vshrl.u32 %v217, 16
      %v497 = vrot.slane %v495, 4
      %v498 = vor.u32 %v497, %v493
      %v499 = vrot.slane %v498, 4
      %v501 = vshll.u32 %v255, 16
      %v503 = vrot.slane %v501, 5
      %v504 = vsel %vm264, %v499, %v503
      %v506 = vshrl.u32 %v218, 16
      %v508 = vrot.slane %v506, 4
      %v509 = vshll.u32 %v218, 16
      %v511 = vrot.slane %v509, 5
      %v512 = vor.u32 %v508, %v511
      %v513 = vrot.slane %v512, 4
      %v515 = vshll.u32 %v219, 16
      %v517 = vrot.slane %v515, 5
      %v518 = vsel %vm264, %v513, %v517
      %v519 = vshrl.u32 %v219, 16
      %v521 = vrot.slane %v519, 4
      %v522 = vor.u32 %v521, %v517
      %v523 = vrot.slane %v522, 4
      %v525 = vshll.u32 %v256, 16
      %v527 = vrot.slane %v525, 5
      %v528 = vsel %vm264, %v523, %v527
      %v530 = vshrl.u32 %v220, 16
      %v532 = vrot.slane %v530, 4
      %v533 = vshll.u32 %v220, 16
      %v535 = vrot.slane %v533, 5
      %v536 = vor.u32 %v532, %v535
      %v537 = vrot.slane %v536, 4
      %v539 = vshll.u32 %v221, 16
      %v541 = vrot.slane %v539, 5
      %v542 = vsel %vm264, %v537, %v541
      %v543 = vshrl.u32 %v221, 16
      %v545 = vrot.slane %v543, 4
      %v546 = vor.u32 %v545, %v541
      %v547 = vrot.slane %v546, 4
      %v549 = vshll.u32 %v257, 16
      %v551 = vrot.slane %v549, 5
      %v552 = vsel %vm264, %v547, %v551
      %v554 = vshrl.u32 %v222, 16
      %v556 = vrot.slane %v554, 4
      %v557 = vshll.u32 %v222, 16
      %v559 = vrot.slane %v557, 5
      %v560 = vor.u32 %v556, %v559
      %v561 = vrot.slane %v560, 4
      %v563 = vshll.u32 %v223, 16
      %v565 = vrot.slane %v563, 5
      %v566 = vsel %vm264, %v561, %v565
      %v567 = vshrl.u32 %v223, 16
      %v569 = vrot.slane %v567, 4
      %v570 = vor.u32 %v569, %v565
      %v571 = vrot.slane %v570, 4
      %v573 = vshll.u32 %v258, 16
      %v575 = vrot.slane %v573, 5
      %v576 = vsel %vm264, %v571, %v575
      %v578 = vshrl.u32 %v224, 16
      %v580 = vrot.slane %v578, 4
      %v581 = vshll.u32 %v224, 16
      %v583 = vrot.slane %v581, 5
      %v584 = vor.u32 %v580, %v583
      %v585 = vrot.slane %v584, 4
      %v587 = vshll.u32 %v225, 16
      %v589 = vrot.slane %v587, 5
      %v590 = vsel %vm264, %v585, %v589
      %v591 = vshrl.u32 %v225, 16
      %v593 = vrot.slane %v591, 4
      %v594 = vor.u32 %v593, %v589
      %v595 = vrot.slane %v594, 4
      %v597 = vshll.u32 %v259, 16
      %v599 = vrot.slane %v597, 5
      %v600 = vsel %vm264, %v595, %v599
      %v602 = vshrl.u32 %v226, 16
      %v604 = vrot.slane %v602, 4
      %v605 = vshll.u32 %v226, 16
      %v607 = vrot.slane %v605, 5
      %v608 = vor.u32 %v604, %v607
      %v609 = vrot.slane %v608, 4
      %v611 = vshll.u32 %v227, 16
      %v613 = vrot.slane %v611, 5
      %v614 = vsel %vm264, %v609, %v613
      %v615 = vshrl.u32 %v227, 16
      %v617 = vrot.slane %v615, 4
      %v618 = vor.u32 %v617, %v613
      %v619 = vrot.slane %v618, 4
      %v621 = vshll.u32 %v260, 16
      %v623 = vrot.slane %v621, 5
      %v624 = vsel %vm264, %v619, %v623
      %v626 = vshrl.u32 %v228, 16
      %v628 = vrot.slane %v626, 4
      %v629 = vshll.u32 %v228, 16
      %v631 = vrot.slane %v629, 5
      %v632 = vor.u32 %v628, %v631
      %v633 = vrot.slane %v632, 4
      %v635 = vshll.u32 %v229, 16
      %v637 = vrot.slane %v635, 5
      %v638 = vsel %vm264, %v633, %v637
      %v639 = vshrl.u32 %v229, 16
      %v641 = vrot.slane %v639, 4
      %v642 = vor.u32 %v641, %v637
      %v643 = vrot.slane %v642, 4
      %v645 = vshll.u32 %v261, 16
      %v647 = vrot.slane %v645, 5
      %v648 = vsel %vm264, %v643, %v647
      %s649 = scalar_lea.vmem %s1, 64
      %v650 = vld [vmem:[%s649] sm:$0xf]
      %v651 = vld [vmem:[%s649 + $0x4] sm:$0xf]
      %v652 = vld [vmem:[%s649 + $0x8] sm:$0xf]
      %v653 = vld [vmem:[%s649 + $0xc] sm:$0xf]
      %v654 = vld [vmem:[%s649 + $0x10] sm:$0xf]
      %v655 = vld [vmem:[%s649 + $0x14] sm:$0xf]
      %v656 = vld [vmem:[%s649 + $0x18] sm:$0xf]
      %v657 = vld [vmem:[%s649 + $0x1c] sm:$0xf]
      %v658 = vld [vmem:[%s649 + $0x20] sm:$0xf]
      %v659 = vld [vmem:[%s649 + $0x24] sm:$0xf]
      %v660 = vld [vmem:[%s649 + $0x28] sm:$0xf]
      %v661 = vld [vmem:[%s649 + $0x2c] sm:$0xf]
      %v662 = vld [vmem:[%s649 + $0x30] sm:$0xf]
      %v663 = vld [vmem:[%s649 + $0x34] sm:$0xf]
      %v664 = vld [vmem:[%s649 + $0x38] sm:$0xf]
      %v665 = vld [vmem:[%s649 + $0x3c] sm:$0xf]
      %v666 = vunpack.c.l.b16 %v278
      %v667 = vunpack.c.l.b16 %v288
      %v668 = vunpack.c.l.b16 %v302
      %v669 = vunpack.c.l.b16 %v312
      %v670 = vunpack.c.l.b16 %v326
      %v671 = vunpack.c.l.b16 %v336
      %v672 = vunpack.c.l.b16 %v350
      %v673 = vunpack.c.l.b16 %v360
      %v674 = vunpack.c.l.b16 %v374
      %v675 = vunpack.c.l.b16 %v384
      %v676 = vunpack.c.l.b16 %v398
      %v677 = vunpack.c.l.b16 %v408
      %v678 = vunpack.c.l.b16 %v422
      %v679 = vunpack.c.l.b16 %v432
      %v680 = vunpack.c.l.b16 %v446
      %v681 = vunpack.c.l.b16 %v456
      %v682 = vunpack.c.l.b16 %v470
      %v683 = vunpack.c.l.b16 %v480
      %v684 = vunpack.c.l.b16 %v494
      %v685 = vunpack.c.l.b16 %v504
      %v686 = vunpack.c.l.b16 %v518
      %v687 = vunpack.c.l.b16 %v528
      %v688 = vunpack.c.l.b16 %v542
      %v689 = vunpack.c.l.b16 %v552
      %v690 = vunpack.c.l.b16 %v566
      %v691 = vunpack.c.l.b16 %v576
      %v692 = vunpack.c.l.b16 %v590
      %v693 = vunpack.c.l.b16 %v600
      %v694 = vunpack.c.l.b16 %v614
      %v695 = vunpack.c.l.b16 %v624
      %v696 = vunpack.c.l.b16 %v638
      %v697 = vunpack.c.l.b16 %v648
      %v698 = vpack.c.b16 %v667, %v666
      %v699 = vpack.c.b16 %v669, %v668
      %v700 = vpack.c.b16 %v671, %v670
      %v701 = vpack.c.b16 %v673, %v672
      %v702 = vpack.c.b16 %v675, %v674
      %v703 = vpack.c.b16 %v677, %v676
      %v704 = vpack.c.b16 %v679, %v678
      %v705 = vpack.c.b16 %v681, %v680
      %v706 = vpack.c.b16 %v683, %v682
      %v707 = vpack.c.b16 %v685, %v684
      %v708 = vpack.c.b16 %v687, %v686
      %v709 = vpack.c.b16 %v689, %v688
      %v710 = vpack.c.b16 %v691, %v690
      %v711 = vpack.c.b16 %v693, %v692
      %v712 = vpack.c.b16 %v695, %v694
      %v713 = vpack.c.b16 %v697, %v696
      %v746 = vunpack.c.l.b16 %v650
      %v747 = vunpack.c.l.b16 %v651
      %v748 = vunpack.c.l.b16 %v652
      %v749 = vunpack.c.l.b16 %v653
      %v750 = vunpack.c.l.b16 %v654
      %v751 = vunpack.c.l.b16 %v655
      %v752 = vunpack.c.l.b16 %v656
      %v753 = vunpack.c.l.b16 %v657
      %v754 = vunpack.c.l.b16 %v658
      %v755 = vunpack.c.l.b16 %v659
      %v756 = vunpack.c.l.b16 %v660
      %v757 = vunpack.c.l.b16 %v661
      %v758 = vunpack.c.l.b16 %v662
      %v759 = vunpack.c.l.b16 %v663
      %v760 = vunpack.c.l.b16 %v664
      %v761 = vunpack.c.l.b16 %v665
      %v762 = vpack.c.b16 %v747, %v746
      %v763 = vpack.c.b16 %v749, %v748
      %v764 = vpack.c.b16 %v751, %v750
      %v765 = vpack.c.b16 %v753, %v752
      %v766 = vpack.c.b16 %v755, %v754
      %v767 = vpack.c.b16 %v757, %v756
      %v768 = vpack.c.b16 %v759, %v758
      %v769 = vpack.c.b16 %v761, %v760
      %778 = vmatpush.bf16.msra.mxu0 %v769
      %779 = vmatpush.bf16.msra.mxu0 %v768
      %780 = vmatpush.bf16.msra.mxu0 %v767
      %781 = vmatpush.bf16.msra.mxu0 %v766
      %782 = vmatpush.bf16.msra.mxu0 %v765
      %783 = vmatpush.bf16.msra.mxu0 %v764
      %784 = vmatpush.bf16.msra.mxu0 %v763
      %785 = vmatpush.bf16.msra.mxu0 %v762
      %786 = vmatmul.bf16.gmra.mxu0 %v698
      %v787 = vpop.f32.mrf.mxu0
      %v788 = vadd.f32 0.0, %v787
      %v789 = vpop.f32.mrf.mxu0
      %v790 = vadd.f32 0.0, %v789
      %791 = vmatmul.bf16.gmra.mxu0 %v699
      %v792 = vpop.f32.mrf.mxu0
      %v793 = vadd.f32 0.0, %v792
      %v794 = vpop.f32.mrf.mxu0
      %v795 = vadd.f32 0.0, %v794
      %796 = vmatmul.bf16.gmra.mxu0 %v700
      %v797 = vpop.f32.mrf.mxu0
      %v798 = vadd.f32 0.0, %v797
      %v799 = vpop.f32.mrf.mxu0
      %v800 = vadd.f32 0.0, %v799
      %801 = vmatmul.bf16.gmra.mxu0 %v701
      %v802 = vpop.f32.mrf.mxu0
      %v803 = vadd.f32 0.0, %v802
      %v804 = vpop.f32.mrf.mxu0
      %v805 = vadd.f32 0.0, %v804
      %806 = vmatmul.bf16.gmra.mxu0 %v702
      %v807 = vpop.f32.mrf.mxu0
      %v808 = vadd.f32 0.0, %v807
      %v809 = vpop.f32.mrf.mxu0
      %v810 = vadd.f32 0.0, %v809
      %811 = vmatmul.bf16.gmra.mxu0 %v703
      %v812 = vpop.f32.mrf.mxu0
      %v813 = vadd.f32 0.0, %v812
      %v814 = vpop.f32.mrf.mxu0
      %v815 = vadd.f32 0.0, %v814
      %816 = vmatmul.bf16.gmra.mxu0 %v704
      %v817 = vpop.f32.mrf.mxu0
      %v818 = vadd.f32 0.0, %v817
      %v819 = vpop.f32.mrf.mxu0
      %v820 = vadd.f32 0.0, %v819
      %821 = vmatmul.bf16.gmra.mxu0 %v705
      %v822 = vpop.f32.mrf.mxu0
      %v823 = vadd.f32 0.0, %v822
      %v824 = vpop.f32.mrf.mxu0
      %v825 = vadd.f32 0.0, %v824
      %826 = vmatmul.bf16.gmra.mxu0 %v706
      %v827 = vpop.f32.mrf.mxu0
      %v828 = vadd.f32 0.0, %v827
      %v829 = vpop.f32.mrf.mxu0
      %v830 = vadd.f32 0.0, %v829
      %831 = vmatmul.bf16.gmra.mxu0 %v707
      %v832 = vpop.f32.mrf.mxu0
      %v833 = vadd.f32 0.0, %v832
      %v834 = vpop.f32.mrf.mxu0
      %v835 = vadd.f32 0.0, %v834
      %836 = vmatmul.bf16.gmra.mxu0 %v708
      %v837 = vpop.f32.mrf.mxu0
      %v838 = vadd.f32 0.0, %v837
      %v839 = vpop.f32.mrf.mxu0
      %v840 = vadd.f32 0.0, %v839
      %841 = vmatmul.bf16.gmra.mxu0 %v709
      %v842 = vpop.f32.mrf.mxu0
      %v843 = vadd.f32 0.0, %v842
      %v844 = vpop.f32.mrf.mxu0
      %v845 = vadd.f32 0.0, %v844
      %846 = vmatmul.bf16.gmra.mxu0 %v710
      %v847 = vpop.f32.mrf.mxu0
      %v848 = vadd.f32 0.0, %v847
      %v849 = vpop.f32.mrf.mxu0
      %v850 = vadd.f32 0.0, %v849
      %851 = vmatmul.bf16.gmra.mxu0 %v711
      %v852 = vpop.f32.mrf.mxu0
      %v853 = vadd.f32 0.0, %v852
      %v854 = vpop.f32.mrf.mxu0
      %v855 = vadd.f32 0.0, %v854
      %856 = vmatmul.bf16.gmra.mxu0 %v712
      %v857 = vpop.f32.mrf.mxu0
      %v858 = vadd.f32 0.0, %v857
      %v859 = vpop.f32.mrf.mxu0
      %v860 = vadd.f32 0.0, %v859
      %861 = vmatmul.bf16.gmra.mxu0 %v713
      %v862 = vpop.f32.mrf.mxu0
      %v863 = vadd.f32 0.0, %v862
      %v864 = vpop.f32.mrf.mxu0
      %v865 = vadd.f32 0.0, %v864
      %866 = vdwg.mxu0
      %v899 = vunpack.c.l.b16 %v198
      %v900 = vunpack.c.l.b16 %v199
      %v901 = vunpack.c.l.b16 %v200
      %v902 = vunpack.c.l.b16 %v201
      %v903 = vunpack.c.l.b16 %v202
      %v904 = vunpack.c.l.b16 %v203
      %v905 = vunpack.c.l.b16 %v204
      %v906 = vunpack.c.l.b16 %v205
      %v907 = vunpack.c.l.b16 %v206
      %v908 = vunpack.c.l.b16 %v207
      %v909 = vunpack.c.l.b16 %v208
      %v910 = vunpack.c.l.b16 %v209
      %v911 = vunpack.c.l.b16 %v210
      %v912 = vunpack.c.l.b16 %v211
      %v913 = vunpack.c.l.b16 %v212
      %v914 = vunpack.c.l.b16 %v213
      %v915 = vunpack.c.l.b16 %v214
      %v916 = vunpack.c.l.b16 %v215
      %v917 = vunpack.c.l.b16 %v216
      %v918 = vunpack.c.l.b16 %v217
      %v919 = vunpack.c.l.b16 %v218
      %v920 = vunpack.c.l.b16 %v219
      %v921 = vunpack.c.l.b16 %v220
      %v922 = vunpack.c.l.b16 %v221
      %v923 = vunpack.c.l.b16 %v222
      %v924 = vunpack.c.l.b16 %v223
      %v925 = vunpack.c.l.b16 %v224
      %v926 = vunpack.c.l.b16 %v225
      %v927 = vunpack.c.l.b16 %v226
      %v928 = vunpack.c.l.b16 %v227
      %v929 = vunpack.c.l.b16 %v228
      %v930 = vunpack.c.l.b16 %v229
      %v931 = vpack.c.b16 %v900, %v899
      %v932 = vpack.c.b16 %v902, %v901
      %v933 = vpack.c.b16 %v904, %v903
      %v934 = vpack.c.b16 %v906, %v905
      %v935 = vpack.c.b16 %v908, %v907
      %v936 = vpack.c.b16 %v910, %v909
      %v937 = vpack.c.b16 %v912, %v911
      %v938 = vpack.c.b16 %v914, %v913
      %v939 = vpack.c.b16 %v916, %v915
      %v940 = vpack.c.b16 %v918, %v917
      %v941 = vpack.c.b16 %v920, %v919
      %v942 = vpack.c.b16 %v922, %v921
      %v943 = vpack.c.b16 %v924, %v923
      %v944 = vpack.c.b16 %v926, %v925
      %v945 = vpack.c.b16 %v928, %v927
      %v946 = vpack.c.b16 %v930, %v929
      %v979 = vunpack.c.l.b16 %v230
      %v980 = vunpack.c.l.b16 %v231
      %v981 = vunpack.c.l.b16 %v232
      %v982 = vunpack.c.l.b16 %v233
      %v983 = vunpack.c.l.b16 %v234
      %v984 = vunpack.c.l.b16 %v235
      %v985 = vunpack.c.l.b16 %v236
      %v986 = vunpack.c.l.b16 %v237
      %v987 = vunpack.c.l.b16 %v238
      %v988 = vunpack.c.l.b16 %v239
      %v989 = vunpack.c.l.b16 %v240
      %v990 = vunpack.c.l.b16 %v241
      %v991 = vunpack.c.l.b16 %v242
      %v992 = vunpack.c.l.b16 %v243
      %v993 = vunpack.c.l.b16 %v244
      %v994 = vunpack.c.l.b16 %v245
      %v995 = vpack.c.b16 %v980, %v979
      %v996 = vpack.c.b16 %v982, %v981
      %v997 = vpack.c.b16 %v984, %v983
      %v998 = vpack.c.b16 %v986, %v985
      %v999 = vpack.c.b16 %v988, %v987
      %v1000 = vpack.c.b16 %v990, %v989
      %v1001 = vpack.c.b16 %v992, %v991
      %v1002 = vpack.c.b16 %v994, %v993
      %1011 = vmatpush.bf16.msra.mxu0 %v1002
      %1012 = vmatpush.bf16.msra.mxu0 %v1001
      %1013 = vmatpush.bf16.msra.mxu0 %v1000
      %1014 = vmatpush.bf16.msra.mxu0 %v999
      %1015 = vmatpush.bf16.msra.mxu0 %v998
      %1016 = vmatpush.bf16.msra.mxu0 %v997
      %1017 = vmatpush.bf16.msra.mxu0 %v996
      %1018 = vmatpush.bf16.msra.mxu0 %v995
      %1019 = vmatmul.bf16.gmra.mxu0 %v931
      %v1020 = vpop.f32.mrf.mxu0
      %v1021 = vadd.f32 %v788, %v1020
      %v1022 = vpop.f32.mrf.mxu0
      %v1023 = vadd.f32 %v790, %v1022
      %1024 = vmatmul.bf16.gmra.mxu0 %v932
      %v1025 = vpop.f32.mrf.mxu0
      %v1026 = vadd.f32 %v793, %v1025
      %v1027 = vpop.f32.mrf.mxu0
      %v1028 = vadd.f32 %v795, %v1027
      %1029 = vmatmul.bf16.gmra.mxu0 %v933
      %v1030 = vpop.f32.mrf.mxu0
      %v1031 = vadd.f32 %v798, %v1030
      %v1032 = vpop.f32.mrf.mxu0
      %v1033 = vadd.f32 %v800, %v1032
      %1034 = vmatmul.bf16.gmra.mxu0 %v934
      %v1035 = vpop.f32.mrf.mxu0
      %v1036 = vadd.f32 %v803, %v1035
      %v1037 = vpop.f32.mrf.mxu0
      %v1038 = vadd.f32 %v805, %v1037
      %1039 = vmatmul.bf16.gmra.mxu0 %v935
      %v1040 = vpop.f32.mrf.mxu0
      %v1041 = vadd.f32 %v808, %v1040
      %v1042 = vpop.f32.mrf.mxu0
      %v1043 = vadd.f32 %v810, %v1042
      %1044 = vmatmul.bf16.gmra.mxu0 %v936
      %v1045 = vpop.f32.mrf.mxu0
      %v1046 = vadd.f32 %v813, %v1045
      %v1047 = vpop.f32.mrf.mxu0
      %v1048 = vadd.f32 %v815, %v1047
      %1049 = vmatmul.bf16.gmra.mxu0 %v937
      %v1050 = vpop.f32.mrf.mxu0
      %v1051 = vadd.f32 %v818, %v1050
      %v1052 = vpop.f32.mrf.mxu0
      %v1053 = vadd.f32 %v820, %v1052
      %1054 = vmatmul.bf16.gmra.mxu0 %v938
      %v1055 = vpop.f32.mrf.mxu0
      %v1056 = vadd.f32 %v823, %v1055
      %v1057 = vpop.f32.mrf.mxu0
      %v1058 = vadd.f32 %v825, %v1057
      %1059 = vmatmul.bf16.gmra.mxu0 %v939
      %v1060 = vpop.f32.mrf.mxu0
      %v1061 = vadd.f32 %v828, %v1060
      %v1062 = vpop.f32.mrf.mxu0
      %v1063 = vadd.f32 %v830, %v1062
      %1064 = vmatmul.bf16.gmra.mxu0 %v940
      %v1065 = vpop.f32.mrf.mxu0
      %v1066 = vadd.f32 %v833, %v1065
      %v1067 = vpop.f32.mrf.mxu0
      %v1068 = vadd.f32 %v835, %v1067
      %1069 = vmatmul.bf16.gmra.mxu0 %v941
      %v1070 = vpop.f32.mrf.mxu0
      %v1071 = vadd.f32 %v838, %v1070
      %v1072 = vpop.f32.mrf.mxu0
      %v1073 = vadd.f32 %v840, %v1072
      %1074 = vmatmul.bf16.gmra.mxu0 %v942
      %v1075 = vpop.f32.mrf.mxu0
      %v1076 = vadd.f32 %v843, %v1075
      %v1077 = vpop.f32.mrf.mxu0
      %v1078 = vadd.f32 %v845, %v1077
      %1079 = vmatmul.bf16.gmra.mxu0 %v943
      %v1080 = vpop.f32.mrf.mxu0
      %v1081 = vadd.f32 %v848, %v1080
      %v1082 = vpop.f32.mrf.mxu0
      %v1083 = vadd.f32 %v850, %v1082
      %1084 = vmatmul.bf16.gmra.mxu0 %v944
      %v1085 = vpop.f32.mrf.mxu0
      %v1086 = vadd.f32 %v853, %v1085
      %v1087 = vpop.f32.mrf.mxu0
      %v1088 = vadd.f32 %v855, %v1087
      %1089 = vmatmul.bf16.gmra.mxu0 %v945
      %v1090 = vpop.f32.mrf.mxu0
      %v1091 = vadd.f32 %v858, %v1090
      %v1092 = vpop.f32.mrf.mxu0
      %v1093 = vadd.f32 %v860, %v1092
      %1094 = vmatmul.bf16.gmra.mxu0 %v946
      %v1095 = vpop.f32.mrf.mxu0
      %v1096 = vadd.f32 %v863, %v1095
      %v1097 = vpop.f32.mrf.mxu0
      %v1098 = vadd.f32 %v865, %v1097
      %1099 = vdwg.mxu0
      %v1100 = vld [vmem:[%s192] sm:$0xe]
      %v1101 = vld [vmem:[%s192 + $0xc] sm:$0xe]
      %v1102 = vld [vmem:[%s192 + $0x18] sm:$0xe]
      %v1103 = vld [vmem:[%s192 + $0x24] sm:$0xe]
      %v1104 = vld [vmem:[%s192 + $0x30] sm:$0xe]
      %v1105 = vld [vmem:[%s192 + $0x3c] sm:$0xe]
      %v1106 = vld [vmem:[%s192 + $0x48] sm:$0xe]
      %v1107 = vld [vmem:[%s192 + $0x54] sm:$0xe]
      %v1108 = vld [vmem:[%s192 + $0x60] sm:$0xe]
      %v1109 = vld [vmem:[%s192 + $0x6c] sm:$0xe]
      %v1110 = vld [vmem:[%s192 + $0x78] sm:$0xe]
      %v1111 = vld [vmem:[%s192 + $0x84] sm:$0xe]
      %v1112 = vld [vmem:[%s192 + $0x90] sm:$0xe]
      %v1113 = vld [vmem:[%s192 + $0x9c] sm:$0xe]
      %v1114 = vld [vmem:[%s192 + $0xa8] sm:$0xe]
      %v1115 = vld [vmem:[%s192 + $0xb4] sm:$0xe]
      %vm1148 = vcmask 1042432
      %vm1149 = vcmask 1046532
      %vm1150 = vmor %vm1148, %vm1149
      %v1151 = vrot.slane %v1100, 5
      %v1152 = vrot.slane %v1151, 4
      %v1153 = vrot.slane %v199, 5
      %v1154 = vsel %vm1150, %v1152, %v1153
      %v1155 = vrot.slane %v1153, 4
      %v1156 = vrot.slane %v246, 5
      %v1157 = vsel %vm1150, %v1155, %v1156
      %v1158 = vrot.slane %v1101, 5
      %v1159 = vrot.slane %v1158, 4
      %v1160 = vrot.slane %v201, 5
      %v1161 = vsel %vm1150, %v1159, %v1160
      %v1162 = vrot.slane %v1160, 4
      %v1163 = vrot.slane %v247, 5
      %v1164 = vsel %vm1150, %v1162, %v1163
      %v1165 = vrot.slane %v1102, 5
      %v1166 = vrot.slane %v1165, 4
      %v1167 = vrot.slane %v203, 5
      %v1168 = vsel %vm1150, %v1166, %v1167
      %v1169 = vrot.slane %v1167, 4
      %v1170 = vrot.slane %v248, 5
      %v1171 = vsel %vm1150, %v1169, %v1170
      %v1172 = vrot.slane %v1103, 5
      %v1173 = vrot.slane %v1172, 4
      %v1174 = vrot.slane %v205, 5
      %v1175 = vsel %vm1150, %v1173, %v1174
      %v1176 = vrot.slane %v1174, 4
      %v1177 = vrot.slane %v249, 5
      %v1178 = vsel %vm1150, %v1176, %v1177
      %v1179 = vrot.slane %v1104, 5
      %v1180 = vrot.slane %v1179, 4
      %v1181 = vrot.slane %v207, 5
      %v1182 = vsel %vm1150, %v1180, %v1181
      %v1183 = vrot.slane %v1181, 4
      %v1184 = vrot.slane %v250, 5
      %v1185 = vsel %vm1150, %v1183, %v1184
      %v1186 = vrot.slane %v1105, 5
      %v1187 = vrot.slane %v1186, 4
      %v1188 = vrot.slane %v209, 5
      %v1189 = vsel %vm1150, %v1187, %v1188
      %v1190 = vrot.slane %v1188, 4
      %v1191 = vrot.slane %v251, 5
      %v1192 = vsel %vm1150, %v1190, %v1191
      %v1193 = vrot.slane %v1106, 5
      %v1194 = vrot.slane %v1193, 4
      %v1195 = vrot.slane %v211, 5
      %v1196 = vsel %vm1150, %v1194, %v1195
      %v1197 = vrot.slane %v1195, 4
      %v1198 = vrot.slane %v252, 5
      %v1199 = vsel %vm1150, %v1197, %v1198
      %v1200 = vrot.slane %v1107, 5
      %v1201 = vrot.slane %v1200, 4
      %v1202 = vrot.slane %v213, 5
      %v1203 = vsel %vm1150, %v1201, %v1202
      %v1204 = vrot.slane %v1202, 4
      %v1205 = vrot.slane %v253, 5
      %v1206 = vsel %vm1150, %v1204, %v1205
      %v1207 = vrot.slane %v1108, 5
      %v1208 = vrot.slane %v1207, 4
      %v1209 = vrot.slane %v215, 5
      %v1210 = vsel %vm1150, %v1208, %v1209
      %v1211 = vrot.slane %v1209, 4
      %v1212 = vrot.slane %v254, 5
      %v1213 = vsel %vm1150, %v1211, %v1212
      %v1214 = vrot.slane %v1109, 5
      %v1215 = vrot.slane %v1214, 4
      %v1216 = vrot.slane %v217, 5
      %v1217 = vsel %vm1150, %v1215, %v1216
      %v1218 = vrot.slane %v1216, 4
      %v1219 = vrot.slane %v255, 5
      %v1220 = vsel %vm1150, %v1218, %v1219
      %v1221 = vrot.slane %v1110, 5
      %v1222 = vrot.slane %v1221, 4
      %v1223 = vrot.slane %v219, 5
      %v1224 = vsel %vm1150, %v1222, %v1223
      %v1225 = vrot.slane %v1223, 4
      %v1226 = vrot.slane %v256, 5
      %v1227 = vsel %vm1150, %v1225, %v1226
      %v1228 = vrot.slane %v1111, 5
      %v1229 = vrot.slane %v1228, 4
      %v1230 = vrot.slane %v221, 5
      %v1231 = vsel %vm1150, %v1229, %v1230
      %v1232 = vrot.slane %v1230, 4
      %v1233 = vrot.slane %v257, 5
      %v1234 = vsel %vm1150, %v1232, %v1233
      %v1235 = vrot.slane %v1112, 5
      %v1236 = vrot.slane %v1235, 4
      %v1237 = vrot.slane %v223, 5
      %v1238 = vsel %vm1150, %v1236, %v1237
      %v1239 = vrot.slane %v1237, 4
      %v1240 = vrot.slane %v258, 5
      %v1241 = vsel %vm1150, %v1239, %v1240
      %v1242 = vrot.slane %v1113, 5
      %v1243 = vrot.slane %v1242, 4
      %v1244 = vrot.slane %v225, 5
      %v1245 = vsel %vm1150, %v1243, %v1244
      %v1246 = vrot.slane %v1244, 4
      %v1247 = vrot.slane %v259, 5
      %v1248 = vsel %vm1150, %v1246, %v1247
      %v1249 = vrot.slane %v1114, 5
      %v1250 = vrot.slane %v1249, 4
      %v1251 = vrot.slane %v227, 5
      %v1252 = vsel %vm1150, %v1250, %v1251
      %v1253 = vrot.slane %v1251, 4
      %v1254 = vrot.slane %v260, 5
      %v1255 = vsel %vm1150, %v1253, %v1254
      %v1256 = vrot.slane %v1115, 5
      %v1257 = vrot.slane %v1256, 4
      %v1258 = vrot.slane %v229, 5
      %v1259 = vsel %vm1150, %v1257, %v1258
      %v1260 = vrot.slane %v1258, 4
      %v1261 = vrot.slane %v261, 5
      %v1262 = vsel %vm1150, %v1260, %v1261
      %s1263 = scalar_lea.vmem %s1, 128
      %v1264 = vld [vmem:[%s1263] sm:$0xf]
      %v1265 = vld [vmem:[%s1263 + $0x4] sm:$0xf]
      %v1266 = vld [vmem:[%s1263 + $0x8] sm:$0xf]
      %v1267 = vld [vmem:[%s1263 + $0xc] sm:$0xf]
      %v1268 = vld [vmem:[%s1263 + $0x10] sm:$0xf]
      %v1269 = vld [vmem:[%s1263 + $0x14] sm:$0xf]
      %v1270 = vld [vmem:[%s1263 + $0x18] sm:$0xf]
      %v1271 = vld [vmem:[%s1263 + $0x1c] sm:$0xf]
      %v1272 = vld [vmem:[%s1263 + $0x20] sm:$0xf]
      %v1273 = vld [vmem:[%s1263 + $0x24] sm:$0xf]
      %v1274 = vld [vmem:[%s1263 + $0x28] sm:$0xf]
      %v1275 = vld [vmem:[%s1263 + $0x2c] sm:$0xf]
      %v1276 = vld [vmem:[%s1263 + $0x30] sm:$0xf]
      %v1277 = vld [vmem:[%s1263 + $0x34] sm:$0xf]
      %v1278 = vld [vmem:[%s1263 + $0x38] sm:$0xf]
      %v1279 = vld [vmem:[%s1263 + $0x3c] sm:$0xf]
      %v1280 = vunpack.c.l.b16 %v1154
      %v1281 = vunpack.c.l.b16 %v1157
      %v1282 = vunpack.c.l.b16 %v1161
      %v1283 = vunpack.c.l.b16 %v1164
      %v1284 = vunpack.c.l.b16 %v1168
      %v1285 = vunpack.c.l.b16 %v1171
      %v1286 = vunpack.c.l.b16 %v1175
      %v1287 = vunpack.c.l.b16 %v1178
      %v1288 = vunpack.c.l.b16 %v1182
      %v1289 = vunpack.c.l.b16 %v1185
      %v1290 = vunpack.c.l.b16 %v1189
      %v1291 = vunpack.c.l.b16 %v1192
      %v1292 = vunpack.c.l.b16 %v1196
      %v1293 = vunpack.c.l.b16 %v1199
      %v1294 = vunpack.c.l.b16 %v1203
      %v1295 = vunpack.c.l.b16 %v1206
      %v1296 = vunpack.c.l.b16 %v1210
      %v1297 = vunpack.c.l.b16 %v1213
      %v1298 = vunpack.c.l.b16 %v1217
      %v1299 = vunpack.c.l.b16 %v1220
      %v1300 = vunpack.c.l.b16 %v1224
      %v1301 = vunpack.c.l.b16 %v1227
      %v1302 = vunpack.c.l.b16 %v1231
      %v1303 = vunpack.c.l.b16 %v1234
      %v1304 = vunpack.c.l.b16 %v1238
      %v1305 = vunpack.c.l.b16 %v1241
      %v1306 = vunpack.c.l.b16 %v1245
      %v1307 = vunpack.c.l.b16 %v1248
      %v1308 = vunpack.c.l.b16 %v1252
      %v1309 = vunpack.c.l.b16 %v1255
      %v1310 = vunpack.c.l.b16 %v1259
      %v1311 = vunpack.c.l.b16 %v1262
      %v1312 = vpack.c.b16 %v1281, %v1280
      %v1313 = vpack.c.b16 %v1283, %v1282
      %v1314 = vpack.c.b16 %v1285, %v1284
      %v1315 = vpack.c.b16 %v1287, %v1286
      %v1316 = vpack.c.b16 %v1289, %v1288
      %v1317 = vpack.c.b16 %v1291, %v1290
      %v1318 = vpack.c.b16 %v1293, %v1292
      %v1319 = vpack.c.b16 %v1295, %v1294
      %v1320 = vpack.c.b16 %v1297, %v1296
      %v1321 = vpack.c.b16 %v1299, %v1298
      %v1322 = vpack.c.b16 %v1301, %v1300
      %v1323 = vpack.c.b16 %v1303, %v1302
      %v1324 = vpack.c.b16 %v1305, %v1304
      %v1325 = vpack.c.b16 %v1307, %v1306
      %v1326 = vpack.c.b16 %v1309, %v1308
      %v1327 = vpack.c.b16 %v1311, %v1310
      %v1360 = vunpack.c.l.b16 %v1264
      %v1361 = vunpack.c.l.b16 %v1265
      %v1362 = vunpack.c.l.b16 %v1266
      %v1363 = vunpack.c.l.b16 %v1267
      %v1364 = vunpack.c.l.b16 %v1268
      %v1365 = vunpack.c.l.b16 %v1269
      %v1366 = vunpack.c.l.b16 %v1270
      %v1367 = vunpack.c.l.b16 %v1271
      %v1368 = vunpack.c.l.b16 %v1272
      %v1369 = vunpack.c.l.b16 %v1273
      %v1370 = vunpack.c.l.b16 %v1274
      %v1371 = vunpack.c.l.b16 %v1275
      %v1372 = vunpack.c.l.b16 %v1276
      %v1373 = vunpack.c.l.b16 %v1277
      %v1374 = vunpack.c.l.b16 %v1278
      %v1375 = vunpack.c.l.b16 %v1279
      %v1376 = vpack.c.b16 %v1361, %v1360
      %v1377 = vpack.c.b16 %v1363, %v1362
      %v1378 = vpack.c.b16 %v1365, %v1364
      %v1379 = vpack.c.b16 %v1367, %v1366
      %v1380 = vpack.c.b16 %v1369, %v1368
      %v1381 = vpack.c.b16 %v1371, %v1370
      %v1382 = vpack.c.b16 %v1373, %v1372
      %v1383 = vpack.c.b16 %v1375, %v1374
      %1392 = vmatpush.bf16.msra.mxu0 %v1383
      %1393 = vmatpush.bf16.msra.mxu0 %v1382
      %1394 = vmatpush.bf16.msra.mxu0 %v1381
      %1395 = vmatpush.bf16.msra.mxu0 %v1380
      %1396 = vmatpush.bf16.msra.mxu0 %v1379
      %1397 = vmatpush.bf16.msra.mxu0 %v1378
      %1398 = vmatpush.bf16.msra.mxu0 %v1377
      %1399 = vmatpush.bf16.msra.mxu0 %v1376
      %1400 = vmatmul.bf16.gmra.mxu0 %v1312
      %v1401 = vpop.f32.mrf.mxu0
      %v1402 = vadd.f32 0.0, %v1401
      %v1403 = vpop.f32.mrf.mxu0
      %v1404 = vadd.f32 0.0, %v1403
      %1405 = vmatmul.bf16.gmra.mxu0 %v1313
      %v1406 = vpop.f32.mrf.mxu0
      %v1407 = vadd.f32 0.0, %v1406
      %v1408 = vpop.f32.mrf.mxu0
      %v1409 = vadd.f32 0.0, %v1408
      %1410 = vmatmul.bf16.gmra.mxu0 %v1314
      %v1411 = vpop.f32.mrf.mxu0
      %v1412 = vadd.f32 0.0, %v1411
      %v1413 = vpop.f32.mrf.mxu0
      %v1414 = vadd.f32 0.0, %v1413
      %1415 = vmatmul.bf16.gmra.mxu0 %v1315
      %v1416 = vpop.f32.mrf.mxu0
      %v1417 = vadd.f32 0.0, %v1416
      %v1418 = vpop.f32.mrf.mxu0
      %v1419 = vadd.f32 0.0, %v1418
      %1420 = vmatmul.bf16.gmra.mxu0 %v1316
      %v1421 = vpop.f32.mrf.mxu0
      %v1422 = vadd.f32 0.0, %v1421
      %v1423 = vpop.f32.mrf.mxu0
      %v1424 = vadd.f32 0.0, %v1423
      %1425 = vmatmul.bf16.gmra.mxu0 %v1317
      %v1426 = vpop.f32.mrf.mxu0
      %v1427 = vadd.f32 0.0, %v1426
      %v1428 = vpop.f32.mrf.mxu0
      %v1429 = vadd.f32 0.0, %v1428
      %1430 = vmatmul.bf16.gmra.mxu0 %v1318
      %v1431 = vpop.f32.mrf.mxu0
      %v1432 = vadd.f32 0.0, %v1431
      %v1433 = vpop.f32.mrf.mxu0
      %v1434 = vadd.f32 0.0, %v1433
      %1435 = vmatmul.bf16.gmra.mxu0 %v1319
      %v1436 = vpop.f32.mrf.mxu0
      %v1437 = vadd.f32 0.0, %v1436
      %v1438 = vpop.f32.mrf.mxu0
      %v1439 = vadd.f32 0.0, %v1438
      %1440 = vmatmul.bf16.gmra.mxu0 %v1320
      %v1441 = vpop.f32.mrf.mxu0
      %v1442 = vadd.f32 0.0, %v1441
      %v1443 = vpop.f32.mrf.mxu0
      %v1444 = vadd.f32 0.0, %v1443
      %1445 = vmatmul.bf16.gmra.mxu0 %v1321
      %v1446 = vpop.f32.mrf.mxu0
      %v1447 = vadd.f32 0.0, %v1446
      %v1448 = vpop.f32.mrf.mxu0
      %v1449 = vadd.f32 0.0, %v1448
      %1450 = vmatmul.bf16.gmra.mxu0 %v1322
      %v1451 = vpop.f32.mrf.mxu0
      %v1452 = vadd.f32 0.0, %v1451
      %v1453 = vpop.f32.mrf.mxu0
      %v1454 = vadd.f32 0.0, %v1453
      %1455 = vmatmul.bf16.gmra.mxu0 %v1323
      %v1456 = vpop.f32.mrf.mxu0
      %v1457 = vadd.f32 0.0, %v1456
      %v1458 = vpop.f32.mrf.mxu0
      %v1459 = vadd.f32 0.0, %v1458
      %1460 = vmatmul.bf16.gmra.mxu0 %v1324
      %v1461 = vpop.f32.mrf.mxu0
      %v1462 = vadd.f32 0.0, %v1461
      %v1463 = vpop.f32.mrf.mxu0
      %v1464 = vadd.f32 0.0, %v1463
      %1465 = vmatmul.bf16.gmra.mxu0 %v1325
      %v1466 = vpop.f32.mrf.mxu0
      %v1467 = vadd.f32 0.0, %v1466
      %v1468 = vpop.f32.mrf.mxu0
      %v1469 = vadd.f32 0.0, %v1468
      %1470 = vmatmul.bf16.gmra.mxu0 %v1326
      %v1471 = vpop.f32.mrf.mxu0
      %v1472 = vadd.f32 0.0, %v1471
      %v1473 = vpop.f32.mrf.mxu0
      %v1474 = vadd.f32 0.0, %v1473
      %1475 = vmatmul.bf16.gmra.mxu0 %v1327
      %v1476 = vpop.f32.mrf.mxu0
      %v1477 = vadd.f32 0.0, %v1476
      %v1478 = vpop.f32.mrf.mxu0
      %v1479 = vadd.f32 0.0, %v1478
      %1480 = vdwg.mxu0
      %v1481 = vadd.f32 %v1021, %v1402
      %v1482 = vadd.f32 %v1023, %v1404
      %v1483 = vadd.f32 %v1026, %v1407
      %v1484 = vadd.f32 %v1028, %v1409
      %v1485 = vadd.f32 %v1031, %v1412
      %v1486 = vadd.f32 %v1033, %v1414
      %v1487 = vadd.f32 %v1036, %v1417
      %v1488 = vadd.f32 %v1038, %v1419
      %v1489 = vadd.f32 %v1041, %v1422
      %v1490 = vadd.f32 %v1043, %v1424
      %v1491 = vadd.f32 %v1046, %v1427
      %v1492 = vadd.f32 %v1048, %v1429
      %v1493 = vadd.f32 %v1051, %v1432
      %v1494 = vadd.f32 %v1053, %v1434
      %v1495 = vadd.f32 %v1056, %v1437
      %v1496 = vadd.f32 %v1058, %v1439
      %v1497 = vadd.f32 %v1061, %v1442
      %v1498 = vadd.f32 %v1063, %v1444
      %v1499 = vadd.f32 %v1066, %v1447
      %v1500 = vadd.f32 %v1068, %v1449
      %v1501 = vadd.f32 %v1071, %v1452
      %v1502 = vadd.f32 %v1073, %v1454
      %v1503 = vadd.f32 %v1076, %v1457
      %v1504 = vadd.f32 %v1078, %v1459
      %v1505 = vadd.f32 %v1081, %v1462
      %v1506 = vadd.f32 %v1083, %v1464
      %v1507 = vadd.f32 %v1086, %v1467
      %v1508 = vadd.f32 %v1088, %v1469
      %v1509 = vadd.f32 %v1091, %v1472
      %v1510 = vadd.f32 %v1093, %v1474
      %v1511 = vadd.f32 %v1096, %v1477
      %v1512 = vadd.f32 %v1098, %v1479
      %s1513 = scalar_lea.vmem %s192, 12
      %v1514 = vld [vmem:[%s1513] sm:$0xf]
      %v1515 = vld [vmem:[%s1513 + $0x4] sm:$0xf]
      %v1516 = vld [vmem:[%s1513 + $0xc] sm:$0xf]
      %v1517 = vld [vmem:[%s1513 + $0x10] sm:$0xf]
      %v1518 = vld [vmem:[%s1513 + $0x18] sm:$0xf]
      %v1519 = vld [vmem:[%s1513 + $0x1c] sm:$0xf]
      %v1520 = vld [vmem:[%s1513 + $0x24] sm:$0xf]
      %v1521 = vld [vmem:[%s1513 + $0x28] sm:$0xf]
      %v1522 = vld [vmem:[%s1513 + $0x30] sm:$0xf]
      %v1523 = vld [vmem:[%s1513 + $0x34] sm:$0xf]
      %v1524 = vld [vmem:[%s1513 + $0x3c] sm:$0xf]
      %v1525 = vld [vmem:[%s1513 + $0x40] sm:$0xf]
      %v1526 = vld [vmem:[%s1513 + $0x48] sm:$0xf]
      %v1527 = vld [vmem:[%s1513 + $0x4c] sm:$0xf]
      %v1528 = vld [vmem:[%s1513 + $0x54] sm:$0xf]
      %v1529 = vld [vmem:[%s1513 + $0x58] sm:$0xf]
      %v1530 = vld [vmem:[%s1513 + $0x60] sm:$0xf]
      %v1531 = vld [vmem:[%s1513 + $0x64] sm:$0xf]
      %v1532 = vld [vmem:[%s1513 + $0x6c] sm:$0xf]
      %v1533 = vld [vmem:[%s1513 + $0x70] sm:$0xf]
      %v1534 = vld [vmem:[%s1513 + $0x78] sm:$0xf]
      %v1535 = vld [vmem:[%s1513 + $0x7c] sm:$0xf]
      %v1536 = vld [vmem:[%s1513 + $0x84] sm:$0xf]
      %v1537 = vld [vmem:[%s1513 + $0x88] sm:$0xf]
      %v1538 = vld [vmem:[%s1513 + $0x90] sm:$0xf]
      %v1539 = vld [vmem:[%s1513 + $0x94] sm:$0xf]
      %v1540 = vld [vmem:[%s1513 + $0x9c] sm:$0xf]
      %v1541 = vld [vmem:[%s1513 + $0xa0] sm:$0xf]
      %v1542 = vld [vmem:[%s1513 + $0xa8] sm:$0xf]
      %v1543 = vld [vmem:[%s1513 + $0xac] sm:$0xf]
      %v1544 = vld [vmem:[%s1513 + $0xb4] sm:$0xf]
      %v1545 = vld [vmem:[%s1513 + $0xb8] sm:$0xf]
      %s1546 = scalar_lea.vmem %s1, 192
      %v1547 = vld [vmem:[%s1546] sm:$0xf]
      %v1548 = vld [vmem:[%s1546 + $0x4] sm:$0xf]
      %v1549 = vld [vmem:[%s1546 + $0x8] sm:$0xf]
      %v1550 = vld [vmem:[%s1546 + $0xc] sm:$0xf]
      %v1551 = vld [vmem:[%s1546 + $0x10] sm:$0xf]
      %v1552 = vld [vmem:[%s1546 + $0x14] sm:$0xf]
      %v1553 = vld [vmem:[%s1546 + $0x18] sm:$0xf]
      %v1554 = vld [vmem:[%s1546 + $0x1c] sm:$0xf]
      %v1555 = vld [vmem:[%s1546 + $0x20] sm:$0xf]
      %v1556 = vld [vmem:[%s1546 + $0x24] sm:$0xf]
      %v1557 = vld [vmem:[%s1546 + $0x28] sm:$0xf]
      %v1558 = vld [vmem:[%s1546 + $0x2c] sm:$0xf]
      %v1559 = vld [vmem:[%s1546 + $0x30] sm:$0xf]
      %v1560 = vld [vmem:[%s1546 + $0x34] sm:$0xf]
      %v1561 = vld [vmem:[%s1546 + $0x38] sm:$0xf]
      %v1562 = vld [vmem:[%s1546 + $0x3c] sm:$0xf]
      %v1595 = vunpack.c.l.b16 %v1514
      %v1596 = vunpack.c.l.b16 %v1515
      %v1597 = vunpack.c.l.b16 %v1516
      %v1598 = vunpack.c.l.b16 %v1517
      %v1599 = vunpack.c.l.b16 %v1518
      %v1600 = vunpack.c.l.b16 %v1519
      %v1601 = vunpack.c.l.b16 %v1520
      %v1602 = vunpack.c.l.b16 %v1521
      %v1603 = vunpack.c.l.b16 %v1522
      %v1604 = vunpack.c.l.b16 %v1523
      %v1605 = vunpack.c.l.b16 %v1524
      %v1606 = vunpack.c.l.b16 %v1525
      %v1607 = vunpack.c.l.b16 %v1526
      %v1608 = vunpack.c.l.b16 %v1527
      %v1609 = vunpack.c.l.b16 %v1528
      %v1610 = vunpack.c.l.b16 %v1529
      %v1611 = vunpack.c.l.b16 %v1530
      %v1612 = vunpack.c.l.b16 %v1531
      %v1613 = vunpack.c.l.b16 %v1532
      %v1614 = vunpack.c.l.b16 %v1533
      %v1615 = vunpack.c.l.b16 %v1534
      %v1616 = vunpack.c.l.b16 %v1535
      %v1617 = vunpack.c.l.b16 %v1536
      %v1618 = vunpack.c.l.b16 %v1537
      %v1619 = vunpack.c.l.b16 %v1538
      %v1620 = vunpack.c.l.b16 %v1539
      %v1621 = vunpack.c.l.b16 %v1540
      %v1622 = vunpack.c.l.b16 %v1541
      %v1623 = vunpack.c.l.b16 %v1542
      %v1624 = vunpack.c.l.b16 %v1543
      %v1625 = vunpack.c.l.b16 %v1544
      %v1626 = vunpack.c.l.b16 %v1545
      %v1627 = vpack.c.b16 %v1596, %v1595
      %v1628 = vpack.c.b16 %v1598, %v1597
      %v1629 = vpack.c.b16 %v1600, %v1599
      %v1630 = vpack.c.b16 %v1602, %v1601
      %v1631 = vpack.c.b16 %v1604, %v1603
      %v1632 = vpack.c.b16 %v1606, %v1605
      %v1633 = vpack.c.b16 %v1608, %v1607
      %v1634 = vpack.c.b16 %v1610, %v1609
      %v1635 = vpack.c.b16 %v1612, %v1611
      %v1636 = vpack.c.b16 %v1614, %v1613
      %v1637 = vpack.c.b16 %v1616, %v1615
      %v1638 = vpack.c.b16 %v1618, %v1617
      %v1639 = vpack.c.b16 %v1620, %v1619
      %v1640 = vpack.c.b16 %v1622, %v1621
      %v1641 = vpack.c.b16 %v1624, %v1623
      %v1642 = vpack.c.b16 %v1626, %v1625
      %v1675 = vunpack.c.l.b16 %v1547
      %v1676 = vunpack.c.l.b16 %v1548
      %v1677 = vunpack.c.l.b16 %v1549
      %v1678 = vunpack.c.l.b16 %v1550
      %v1679 = vunpack.c.l.b16 %v1551
      %v1680 = vunpack.c.l.b16 %v1552
      %v1681 = vunpack.c.l.b16 %v1553
      %v1682 = vunpack.c.l.b16 %v1554
      %v1683 = vunpack.c.l.b16 %v1555
      %v1684 = vunpack.c.l.b16 %v1556
      %v1685 = vunpack.c.l.b16 %v1557
      %v1686 = vunpack.c.l.b16 %v1558
      %v1687 = vunpack.c.l.b16 %v1559
      %v1688 = vunpack.c.l.b16 %v1560
      %v1689 = vunpack.c.l.b16 %v1561
      %v1690 = vunpack.c.l.b16 %v1562
      %v1691 = vpack.c.b16 %v1676, %v1675
      %v1692 = vpack.c.b16 %v1678, %v1677
      %v1693 = vpack.c.b16 %v1680, %v1679
      %v1694 = vpack.c.b16 %v1682, %v1681
      %v1695 = vpack.c.b16 %v1684, %v1683
      %v1696 = vpack.c.b16 %v1686, %v1685
      %v1697 = vpack.c.b16 %v1688, %v1687
      %v1698 = vpack.c.b16 %v1690, %v1689
      %1707 = vmatpush.bf16.msra.mxu0 %v1698
      %1708 = vmatpush.bf16.msra.mxu0 %v1697
      %1709 = vmatpush.bf16.msra.mxu0 %v1696
      %1710 = vmatpush.bf16.msra.mxu0 %v1695
      %1711 = vmatpush.bf16.msra.mxu0 %v1694
      %1712 = vmatpush.bf16.msra.mxu0 %v1693
      %1713 = vmatpush.bf16.msra.mxu0 %v1692
      %1714 = vmatpush.bf16.msra.mxu0 %v1691
      %1715 = vmatmul.bf16.gmra.mxu0 %v1627
      %v1716 = vpop.f32.mrf.mxu0
      %v1717 = vadd.f32 0.0, %v1716
      %v1718 = vpop.f32.mrf.mxu0
      %v1719 = vadd.f32 0.0, %v1718
      %1720 = vmatmul.bf16.gmra.mxu0 %v1628
      %v1721 = vpop.f32.mrf.mxu0
      %v1722 = vadd.f32 0.0, %v1721
      %v1723 = vpop.f32.mrf.mxu0
      %v1724 = vadd.f32 0.0, %v1723
      %1725 = vmatmul.bf16.gmra.mxu0 %v1629
      %v1726 = vpop.f32.mrf.mxu0
      %v1727 = vadd.f32 0.0, %v1726
      %v1728 = vpop.f32.mrf.mxu0
      %v1729 = vadd.f32 0.0, %v1728
      %1730 = vmatmul.bf16.gmra.mxu0 %v1630
      %v1731 = vpop.f32.mrf.mxu0
      %v1732 = vadd.f32 0.0, %v1731
      %v1733 = vpop.f32.mrf.mxu0
      %v1734 = vadd.f32 0.0, %v1733
      %1735 = vmatmul.bf16.gmra.mxu0 %v1631
      %v1736 = vpop.f32.mrf.mxu0
      %v1737 = vadd.f32 0.0, %v1736
      %v1738 = vpop.f32.mrf.mxu0
      %v1739 = vadd.f32 0.0, %v1738
      %1740 = vmatmul.bf16.gmra.mxu0 %v1632
      %v1741 = vpop.f32.mrf.mxu0
      %v1742 = vadd.f32 0.0, %v1741
      %v1743 = vpop.f32.mrf.mxu0
      %v1744 = vadd.f32 0.0, %v1743
      %1745 = vmatmul.bf16.gmra.mxu0 %v1633
      %v1746 = vpop.f32.mrf.mxu0
      %v1747 = vadd.f32 0.0, %v1746
      %v1748 = vpop.f32.mrf.mxu0
      %v1749 = vadd.f32 0.0, %v1748
      %1750 = vmatmul.bf16.gmra.mxu0 %v1634
      %v1751 = vpop.f32.mrf.mxu0
      %v1752 = vadd.f32 0.0, %v1751
      %v1753 = vpop.f32.mrf.mxu0
      %v1754 = vadd.f32 0.0, %v1753
      %1755 = vmatmul.bf16.gmra.mxu0 %v1635
      %v1756 = vpop.f32.mrf.mxu0
      %v1757 = vadd.f32 0.0, %v1756
      %v1758 = vpop.f32.mrf.mxu0
      %v1759 = vadd.f32 0.0, %v1758
      %1760 = vmatmul.bf16.gmra.mxu0 %v1636
      %v1761 = vpop.f32.mrf.mxu0
      %v1762 = vadd.f32 0.0, %v1761
      %v1763 = vpop.f32.mrf.mxu0
      %v1764 = vadd.f32 0.0, %v1763
      %1765 = vmatmul.bf16.gmra.mxu0 %v1637
      %v1766 = vpop.f32.mrf.mxu0
      %v1767 = vadd.f32 0.0, %v1766
      %v1768 = vpop.f32.mrf.mxu0
      %v1769 = vadd.f32 0.0, %v1768
      %1770 = vmatmul.bf16.gmra.mxu0 %v1638
      %v1771 = vpop.f32.mrf.mxu0
      %v1772 = vadd.f32 0.0, %v1771
      %v1773 = vpop.f32.mrf.mxu0
      %v1774 = vadd.f32 0.0, %v1773
      %1775 = vmatmul.bf16.gmra.mxu0 %v1639
      %v1776 = vpop.f32.mrf.mxu0
      %v1777 = vadd.f32 0.0, %v1776
      %v1778 = vpop.f32.mrf.mxu0
      %v1779 = vadd.f32 0.0, %v1778
      %1780 = vmatmul.bf16.gmra.mxu0 %v1640
      %v1781 = vpop.f32.mrf.mxu0
      %v1782 = vadd.f32 0.0, %v1781
      %v1783 = vpop.f32.mrf.mxu0
      %v1784 = vadd.f32 0.0, %v1783
      %1785 = vmatmul.bf16.gmra.mxu0 %v1641
      %v1786 = vpop.f32.mrf.mxu0
      %v1787 = vadd.f32 0.0, %v1786
      %v1788 = vpop.f32.mrf.mxu0
      %v1789 = vadd.f32 0.0, %v1788
      %1790 = vmatmul.bf16.gmra.mxu0 %v1642
      %v1791 = vpop.f32.mrf.mxu0
      %v1792 = vadd.f32 0.0, %v1791
      %v1793 = vpop.f32.mrf.mxu0
      %v1794 = vadd.f32 0.0, %v1793
      %1795 = vdwg.mxu0
      %v1796 = vadd.f32 %v1481, %v1717
      %v1797 = vadd.f32 %v1482, %v1719
      %v1798 = vadd.f32 %v1483, %v1722
      %v1799 = vadd.f32 %v1484, %v1724
      %v1800 = vadd.f32 %v1485, %v1727
      %v1801 = vadd.f32 %v1486, %v1729
      %v1802 = vadd.f32 %v1487, %v1732
      %v1803 = vadd.f32 %v1488, %v1734
      %v1804 = vadd.f32 %v1489, %v1737
      %v1805 = vadd.f32 %v1490, %v1739
      %v1806 = vadd.f32 %v1491, %v1742
      %v1807 = vadd.f32 %v1492, %v1744
      %v1808 = vadd.f32 %v1493, %v1747
      %v1809 = vadd.f32 %v1494, %v1749
      %v1810 = vadd.f32 %v1495, %v1752
      %v1811 = vadd.f32 %v1496, %v1754
      %v1812 = vadd.f32 %v1497, %v1757
      %v1813 = vadd.f32 %v1498, %v1759
      %v1814 = vadd.f32 %v1499, %v1762
      %v1815 = vadd.f32 %v1500, %v1764
      %v1816 = vadd.f32 %v1501, %v1767
      %v1817 = vadd.f32 %v1502, %v1769
      %v1818 = vadd.f32 %v1503, %v1772
      %v1819 = vadd.f32 %v1504, %v1774
      %v1820 = vadd.f32 %v1505, %v1777
      %v1821 = vadd.f32 %v1506, %v1779
      %v1822 = vadd.f32 %v1507, %v1782
      %v1823 = vadd.f32 %v1508, %v1784
      %v1824 = vadd.f32 %v1509, %v1787
      %v1825 = vadd.f32 %v1510, %v1789
      %v1826 = vadd.f32 %v1511, %v1792
      %v1827 = vadd.f32 %v1512, %v1794
      %v1828 = vld [vmem:[%s1513] sm:$0xf]
      %v1829 = vld [vmem:[%s1513 + $0x4] sm:$0xf]
      %v1830 = vld [vmem:[%s1513 + $0x8] sm:$0x1]
      %v1831 = vld [vmem:[%s1513 + $0xc] sm:$0xf]
      %v1832 = vld [vmem:[%s1513 + $0x10] sm:$0xf]
      %v1833 = vld [vmem:[%s1513 + $0x14] sm:$0x1]
      %v1834 = vld [vmem:[%s1513 + $0x18] sm:$0xf]
      %v1835 = vld [vmem:[%s1513 + $0x1c] sm:$0xf]
      %v1836 = vld [vmem:[%s1513 + $0x20] sm:$0x1]
      %v1837 = vld [vmem:[%s1513 + $0x24] sm:$0xf]
      %v1838 = vld [vmem:[%s1513 + $0x28] sm:$0xf]
      %v1839 = vld [vmem:[%s1513 + $0x2c] sm:$0x1]
      %v1840 = vld [vmem:[%s1513 + $0x30] sm:$0xf]
      %v1841 = vld [vmem:[%s1513 + $0x34] sm:$0xf]
      %v1842 = vld [vmem:[%s1513 + $0x38] sm:$0x1]
      %v1843 = vld [vmem:[%s1513 + $0x3c] sm:$0xf]
      %v1844 = vld [vmem:[%s1513 + $0x40] sm:$0xf]
      %v1845 = vld [vmem:[%s1513 + $0x44] sm:$0x1]
      %v1846 = vld [vmem:[%s1513 + $0x48] sm:$0xf]
      %v1847 = vld [vmem:[%s1513 + $0x4c] sm:$0xf]
      %v1848 = vld [vmem:[%s1513 + $0x50] sm:$0x1]
      %v1849 = vld [vmem:[%s1513 + $0x54] sm:$0xf]
      %v1850 = vld [vmem:[%s1513 + $0x58] sm:$0xf]
      %v1851 = vld [vmem:[%s1513 + $0x5c] sm:$0x1]
      %v1852 = vld [vmem:[%s1513 + $0x60] sm:$0xf]
      %v1853 = vld [vmem:[%s1513 + $0x64] sm:$0xf]
      %v1854 = vld [vmem:[%s1513 + $0x68] sm:$0x1]
      %v1855 = vld [vmem:[%s1513 + $0x6c] sm:$0xf]
      %v1856 = vld [vmem:[%s1513 + $0x70] sm:$0xf]
      %v1857 = vld [vmem:[%s1513 + $0x74] sm:$0x1]
      %v1858 = vld [vmem:[%s1513 + $0x78] sm:$0xf]
      %v1859 = vld [vmem:[%s1513 + $0x7c] sm:$0xf]
      %v1860 = vld [vmem:[%s1513 + $0x80] sm:$0x1]
      %v1861 = vld [vmem:[%s1513 + $0x84] sm:$0xf]
      %v1862 = vld [vmem:[%s1513 + $0x88] sm:$0xf]
      %v1863 = vld [vmem:[%s1513 + $0x8c] sm:$0x1]
      %v1864 = vld [vmem:[%s1513 + $0x90] sm:$0xf]
      %v1865 = vld [vmem:[%s1513 + $0x94] sm:$0xf]
      %v1866 = vld [vmem:[%s1513 + $0x98] sm:$0x1]
      %v1867 = vld [vmem:[%s1513 + $0x9c] sm:$0xf]
      %v1868 = vld [vmem:[%s1513 + $0xa0] sm:$0xf]
      %v1869 = vld [vmem:[%s1513 + $0xa4] sm:$0x1]
      %v1870 = vld [vmem:[%s1513 + $0xa8] sm:$0xf]
      %v1871 = vld [vmem:[%s1513 + $0xac] sm:$0xf]
      %v1872 = vld [vmem:[%s1513 + $0xb0] sm:$0x1]
      %v1873 = vld [vmem:[%s1513 + $0xb4] sm:$0xf]
      %v1874 = vld [vmem:[%s1513 + $0xb8] sm:$0xf]
      %v1875 = vld [vmem:[%s1513 + $0xbc] sm:$0x1]
      %v1877 = vshrl.u32 %v1828, 16
      %v1879 = vrot.slane %v1877, 4
      %v1880 = vshll.u32 %v1828, 16
      %v1882 = vrot.slane %v1880, 5
      %v1883 = vor.u32 %v1879, %v1882
      %v1884 = vrot.slane %v1883, 4
      %v1886 = vshll.u32 %v1829, 16
      %v1888 = vrot.slane %v1886, 5
      %v1889 = vsel %vm264, %v1884, %v1888
      %v1890 = vshrl.u32 %v1829, 16
      %v1892 = vrot.slane %v1890, 4
      %v1893 = vor.u32 %v1892, %v1888
      %v1894 = vrot.slane %v1893, 4
      %v1896 = vshll.u32 %v1830, 16
      %v1898 = vrot.slane %v1896, 5
      %v1899 = vsel %vm264, %v1894, %v1898
      %v1901 = vshrl.u32 %v1831, 16
      %v1903 = vrot.slane %v1901, 4
      %v1904 = vshll.u32 %v1831, 16
      %v1906 = vrot.slane %v1904, 5
      %v1907 = vor.u32 %v1903, %v1906
      %v1908 = vrot.slane %v1907, 4
      %v1910 = vshll.u32 %v1832, 16
      %v1912 = vrot.slane %v1910, 5
      %v1913 = vsel %vm264, %v1908, %v1912
      %v1914 = vshrl.u32 %v1832, 16
      %v1916 = vrot.slane %v1914, 4
      %v1917 = vor.u32 %v1916, %v1912
      %v1918 = vrot.slane %v1917, 4
      %v1920 = vshll.u32 %v1833, 16
      %v1922 = vrot.slane %v1920, 5
      %v1923 = vsel %vm264, %v1918, %v1922
      %v1925 = vshrl.u32 %v1834, 16
      %v1927 = vrot.slane %v1925, 4
      %v1928 = vshll.u32 %v1834, 16
      %v1930 = vrot.slane %v1928, 5
      %v1931 = vor.u32 %v1927, %v1930
      %v1932 = vrot.slane %v1931, 4
      %v1934 = vshll.u32 %v1835, 16
      %v1936 = vrot.slane %v1934, 5
      %v1937 = vsel %vm264, %v1932, %v1936
      %v1938 = vshrl.u32 %v1835, 16
      %v1940 = vrot.slane %v1938, 4
      %v1941 = vor.u32 %v1940, %v1936
      %v1942 = vrot.slane %v1941, 4
      %v1944 = vshll.u32 %v1836, 16
      %v1946 = vrot.slane %v1944, 5
      %v1947 = vsel %vm264, %v1942, %v1946
      %v1949 = vshrl.u32 %v1837, 16
      %v1951 = vrot.slane %v1949, 4
      %v1952 = vshll.u32 %v1837, 16
      %v1954 = vrot.slane %v1952, 5
      %v1955 = vor.u32 %v1951, %v1954
      %v1956 = vrot.slane %v1955, 4
      %v1958 = vshll.u32 %v1838, 16
      %v1960 = vrot.slane %v1958, 5
      %v1961 = vsel %vm264, %v1956, %v1960
      %v1962 = vshrl.u32 %v1838, 16
      %v1964 = vrot.slane %v1962, 4
      %v1965 = vor.u32 %v1964, %v1960
      %v1966 = vrot.slane %v1965, 4
      %v1968 = vshll.u32 %v1839, 16
      %v1970 = vrot.slane %v1968, 5
      %v1971 = vsel %vm264, %v1966, %v1970
      %v1973 = vshrl.u32 %v1840, 16
      %v1975 = vrot.slane %v1973, 4
      %v1976 = vshll.u32 %v1840, 16
      %v1978 = vrot.slane %v1976, 5
      %v1979 = vor.u32 %v1975, %v1978
      %v1980 = vrot.slane %v1979, 4
      %v1982 = vshll.u32 %v1841, 16
      %v1984 = vrot.slane %v1982, 5
      %v1985 = vsel %vm264, %v1980, %v1984
      %v1986 = vshrl.u32 %v1841, 16
      %v1988 = vrot.slane %v1986, 4
      %v1989 = vor.u32 %v1988, %v1984
      %v1990 = vrot.slane %v1989, 4
      %v1992 = vshll.u32 %v1842, 16
      %v1994 = vrot.slane %v1992, 5
      %v1995 = vsel %vm264, %v1990, %v1994
      %v1997 = vshrl.u32 %v1843, 16
      %v1999 = vrot.slane %v1997, 4
      %v2000 = vshll.u32 %v1843, 16
      %v2002 = vrot.slane %v2000, 5
      %v2003 = vor.u32 %v1999, %v2002
      %v2004 = vrot.slane %v2003, 4
      %v2006 = vshll.u32 %v1844, 16
      %v2008 = vrot.slane %v2006, 5
      %v2009 = vsel %vm264, %v2004, %v2008
      %v2010 = vshrl.u32 %v1844, 16
      %v2012 = vrot.slane %v2010, 4
      %v2013 = vor.u32 %v2012, %v2008
      %v2014 = vrot.slane %v2013, 4
      %v2016 = vshll.u32 %v1845, 16
      %v2018 = vrot.slane %v2016, 5
      %v2019 = vsel %vm264, %v2014, %v2018
      %v2021 = vshrl.u32 %v1846, 16
      %v2023 = vrot.slane %v2021, 4
      %v2024 = vshll.u32 %v1846, 16
      %v2026 = vrot.slane %v2024, 5
      %v2027 = vor.u32 %v2023, %v2026
      %v2028 = vrot.slane %v2027, 4
      %v2030 = vshll.u32 %v1847, 16
      %v2032 = vrot.slane %v2030, 5
      %v2033 = vsel %vm264, %v2028, %v2032
      %v2034 = vshrl.u32 %v1847, 16
      %v2036 = vrot.slane %v2034, 4
      %v2037 = vor.u32 %v2036, %v2032
      %v2038 = vrot.slane %v2037, 4
      %v2040 = vshll.u32 %v1848, 16
      %v2042 = vrot.slane %v2040, 5
      %v2043 = vsel %vm264, %v2038, %v2042
      %v2045 = vshrl.u32 %v1849, 16
      %v2047 = vrot.slane %v2045, 4
      %v2048 = vshll.u32 %v1849, 16
      %v2050 = vrot.slane %v2048, 5
      %v2051 = vor.u32 %v2047, %v2050
      %v2052 = vrot.slane %v2051, 4
      %v2054 = vshll.u32 %v1850, 16
      %v2056 = vrot.slane %v2054, 5
      %v2057 = vsel %vm264, %v2052, %v2056
      %v2058 = vshrl.u32 %v1850, 16
      %v2060 = vrot.slane %v2058, 4
      %v2061 = vor.u32 %v2060, %v2056
      %v2062 = vrot.slane %v2061, 4
      %v2064 = vshll.u32 %v1851, 16
      %v2066 = vrot.slane %v2064, 5
      %v2067 = vsel %vm264, %v2062, %v2066
      %v2069 = vshrl.u32 %v1852, 16
      %v2071 = vrot.slane %v2069, 4
      %v2072 = vshll.u32 %v1852, 16
      %v2074 = vrot.slane %v2072, 5
      %v2075 = vor.u32 %v2071, %v2074
      %v2076 = vrot.slane %v2075, 4
      %v2078 = vshll.u32 %v1853, 16
      %v2080 = vrot.slane %v2078, 5
      %v2081 = vsel %vm264, %v2076, %v2080
      %v2082 = vshrl.u32 %v1853, 16
      %v2084 = vrot.slane %v2082, 4
      %v2085 = vor.u32 %v2084, %v2080
      %v2086 = vrot.slane %v2085, 4
      %v2088 = vshll.u32 %v1854, 16
      %v2090 = vrot.slane %v2088, 5
      %v2091 = vsel %vm264, %v2086, %v2090
      %v2093 = vshrl.u32 %v1855, 16
      %v2095 = vrot.slane %v2093, 4
      %v2096 = vshll.u32 %v1855, 16
      %v2098 = vrot.slane %v2096, 5
      %v2099 = vor.u32 %v2095, %v2098
      %v2100 = vrot.slane %v2099, 4
      %v2102 = vshll.u32 %v1856, 16
      %v2104 = vrot.slane %v2102, 5
      %v2105 = vsel %vm264, %v2100, %v2104
      %v2106 = vshrl.u32 %v1856, 16
      %v2108 = vrot.slane %v2106, 4
      %v2109 = vor.u32 %v2108, %v2104
      %v2110 = vrot.slane %v2109, 4
      %v2112 = vshll.u32 %v1857, 16
      %v2114 = vrot.slane %v2112, 5
      %v2115 = vsel %vm264, %v2110, %v2114
      %v2117 = vshrl.u32 %v1858, 16
      %v2119 = vrot.slane %v2117, 4
      %v2120 = vshll.u32 %v1858, 16
      %v2122 = vrot.slane %v2120, 5
      %v2123 = vor.u32 %v2119, %v2122
      %v2124 = vrot.slane %v2123, 4
      %v2126 = vshll.u32 %v1859, 16
      %v2128 = vrot.slane %v2126, 5
      %v2129 = vsel %vm264, %v2124, %v2128
      %v2130 = vshrl.u32 %v1859, 16
      %v2132 = vrot.slane %v2130, 4
      %v2133 = vor.u32 %v2132, %v2128
      %v2134 = vrot.slane %v2133, 4
      %v2136 = vshll.u32 %v1860, 16
      %v2138 = vrot.slane %v2136, 5
      %v2139 = vsel %vm264, %v2134, %v2138
      %v2141 = vshrl.u32 %v1861, 16
      %v2143 = vrot.slane %v2141, 4
      %v2144 = vshll.u32 %v1861, 16
      %v2146 = vrot.slane %v2144, 5
      %v2147 = vor.u32 %v2143, %v2146
      %v2148 = vrot.slane %v2147, 4
      %v2150 = vshll.u32 %v1862, 16
      %v2152 = vrot.slane %v2150, 5
      %v2153 = vsel %vm264, %v2148, %v2152
      %v2154 = vshrl.u32 %v1862, 16
      %v2156 = vrot.slane %v2154, 4
      %v2157 = vor.u32 %v2156, %v2152
      %v2158 = vrot.slane %v2157, 4
      %v2160 = vshll.u32 %v1863, 16
      %v2162 = vrot.slane %v2160, 5
      %v2163 = vsel %vm264, %v2158, %v2162
      %v2165 = vshrl.u32 %v1864, 16
      %v2167 = vrot.slane %v2165, 4
      %v2168 = vshll.u32 %v1864, 16
      %v2170 = vrot.slane %v2168, 5
      %v2171 = vor.u32 %v2167, %v2170
      %v2172 = vrot.slane %v2171, 4
      %v2174 = vshll.u32 %v1865, 16
      %v2176 = vrot.slane %v2174, 5
      %v2177 = vsel %vm264, %v2172, %v2176
      %v2178 = vshrl.u32 %v1865, 16
      %v2180 = vrot.slane %v2178, 4
      %v2181 = vor.u32 %v2180, %v2176
      %v2182 = vrot.slane %v2181, 4
      %v2184 = vshll.u32 %v1866, 16
      %v2186 = vrot.slane %v2184, 5
      %v2187 = vsel %vm264, %v2182, %v2186
      %v2189 = vshrl.u32 %v1867, 16
      %v2191 = vrot.slane %v2189, 4
      %v2192 = vshll.u32 %v1867, 16
      %v2194 = vrot.slane %v2192, 5
      %v2195 = vor.u32 %v2191, %v2194
      %v2196 = vrot.slane %v2195, 4
      %v2198 = vshll.u32 %v1868, 16
      %v2200 = vrot.slane %v2198, 5
      %v2201 = vsel %vm264, %v2196, %v2200
      %v2202 = vshrl.u32 %v1868, 16
      %v2204 = vrot.slane %v2202, 4
      %v2205 = vor.u32 %v2204, %v2200
      %v2206 = vrot.slane %v2205, 4
      %v2208 = vshll.u32 %v1869, 16
      %v2210 = vrot.slane %v2208, 5
      %v2211 = vsel %vm264, %v2206, %v2210
      %v2213 = vshrl.u32 %v1870, 16
      %v2215 = vrot.slane %v2213, 4
      %v2216 = vshll.u32 %v1870, 16
      %v2218 = vrot.slane %v2216, 5
      %v2219 = vor.u32 %v2215, %v2218
      %v2220 = vrot.slane %v2219, 4
      %v2222 = vshll.u32 %v1871, 16
      %v2224 = vrot.slane %v2222, 5
      %v2225 = vsel %vm264, %v2220, %v2224
      %v2226 = vshrl.u32 %v1871, 16
      %v2228 = vrot.slane %v2226, 4
      %v2229 = vor.u32 %v2228, %v2224
      %v2230 = vrot.slane %v2229, 4
      %v2232 = vshll.u32 %v1872, 16
      %v2234 = vrot.slane %v2232, 5
      %v2235 = vsel %vm264, %v2230, %v2234
      %v2237 = vshrl.u32 %v1873, 16
      %v2239 = vrot.slane %v2237, 4
      %v2240 = vshll.u32 %v1873, 16
      %v2242 = vrot.slane %v2240, 5
      %v2243 = vor.u32 %v2239, %v2242
      %v2244 = vrot.slane %v2243, 4
      %v2246 = vshll.u32 %v1874, 16
      %v2248 = vrot.slane %v2246, 5
      %v2249 = vsel %vm264, %v2244, %v2248
      %v2250 = vshrl.u32 %v1874, 16
      %v2252 = vrot.slane %v2250, 4
      %v2253 = vor.u32 %v2252, %v2248
      %v2254 = vrot.slane %v2253, 4
      %v2256 = vshll.u32 %v1875, 16
      %v2258 = vrot.slane %v2256, 5
      %v2259 = vsel %vm264, %v2254, %v2258
      %s2260 = scalar_lea.vmem %s1, 256
      %v2261 = vld [vmem:[%s2260] sm:$0xf]
      %v2262 = vld [vmem:[%s2260 + $0x4] sm:$0xf]
      %v2263 = vld [vmem:[%s2260 + $0x8] sm:$0xf]
      %v2264 = vld [vmem:[%s2260 + $0xc] sm:$0xf]
      %v2265 = vld [vmem:[%s2260 + $0x10] sm:$0xf]
      %v2266 = vld [vmem:[%s2260 + $0x14] sm:$0xf]
      %v2267 = vld [vmem:[%s2260 + $0x18] sm:$0xf]
      %v2268 = vld [vmem:[%s2260 + $0x1c] sm:$0xf]
      %v2269 = vld [vmem:[%s2260 + $0x20] sm:$0xf]
      %v2270 = vld [vmem:[%s2260 + $0x24] sm:$0xf]
      %v2271 = vld [vmem:[%s2260 + $0x28] sm:$0xf]
      %v2272 = vld [vmem:[%s2260 + $0x2c] sm:$0xf]
      %v2273 = vld [vmem:[%s2260 + $0x30] sm:$0xf]
      %v2274 = vld [vmem:[%s2260 + $0x34] sm:$0xf]
      %v2275 = vld [vmem:[%s2260 + $0x38] sm:$0xf]
      %v2276 = vld [vmem:[%s2260 + $0x3c] sm:$0xf]
      %v2277 = vunpack.c.l.b16 %v1889
      %v2278 = vunpack.c.l.b16 %v1899
      %v2279 = vunpack.c.l.b16 %v1913
      %v2280 = vunpack.c.l.b16 %v1923
      %v2281 = vunpack.c.l.b16 %v1937
      %v2282 = vunpack.c.l.b16 %v1947
      %v2283 = vunpack.c.l.b16 %v1961
      %v2284 = vunpack.c.l.b16 %v1971
      %v2285 = vunpack.c.l.b16 %v1985
      %v2286 = vunpack.c.l.b16 %v1995
      %v2287 = vunpack.c.l.b16 %v2009
      %v2288 = vunpack.c.l.b16 %v2019
      %v2289 = vunpack.c.l.b16 %v2033
      %v2290 = vunpack.c.l.b16 %v2043
      %v2291 = vunpack.c.l.b16 %v2057
      %v2292 = vunpack.c.l.b16 %v2067
      %v2293 = vunpack.c.l.b16 %v2081
      %v2294 = vunpack.c.l.b16 %v2091
      %v2295 = vunpack.c.l.b16 %v2105
      %v2296 = vunpack.c.l.b16 %v2115
      %v2297 = vunpack.c.l.b16 %v2129
      %v2298 = vunpack.c.l.b16 %v2139
      %v2299 = vunpack.c.l.b16 %v2153
      %v2300 = vunpack.c.l.b16 %v2163
      %v2301 = vunpack.c.l.b16 %v2177
      %v2302 = vunpack.c.l.b16 %v2187
      %v2303 = vunpack.c.l.b16 %v2201
      %v2304 = vunpack.c.l.b16 %v2211
      %v2305 = vunpack.c.l.b16 %v2225
      %v2306 = vunpack.c.l.b16 %v2235
      %v2307 = vunpack.c.l.b16 %v2249
      %v2308 = vunpack.c.l.b16 %v2259
      %v2309 = vpack.c.b16 %v2278, %v2277
      %v2310 = vpack.c.b16 %v2280, %v2279
      %v2311 = vpack.c.b16 %v2282, %v2281
      %v2312 = vpack.c.b16 %v2284, %v2283
      %v2313 = vpack.c.b16 %v2286, %v2285
      %v2314 = vpack.c.b16 %v2288, %v2287
      %v2315 = vpack.c.b16 %v2290, %v2289
      %v2316 = vpack.c.b16 %v2292, %v2291
      %v2317 = vpack.c.b16 %v2294, %v2293
      %v2318 = vpack.c.b16 %v2296, %v2295
      %v2319 = vpack.c.b16 %v2298, %v2297
      %v2320 = vpack.c.b16 %v2300, %v2299
      %v2321 = vpack.c.b16 %v2302, %v2301
      %v2322 = vpack.c.b16 %v2304, %v2303
      %v2323 = vpack.c.b16 %v2306, %v2305
      %v2324 = vpack.c.b16 %v2308, %v2307
      %v2357 = vunpack.c.l.b16 %v2261
      %v2358 = vunpack.c.l.b16 %v2262
      %v2359 = vunpack.c.l.b16 %v2263
      %v2360 = vunpack.c.l.b16 %v2264
      %v2361 = vunpack.c.l.b16 %v2265
      %v2362 = vunpack.c.l.b16 %v2266
      %v2363 = vunpack.c.l.b16 %v2267
      %v2364 = vunpack.c.l.b16 %v2268
      %v2365 = vunpack.c.l.b16 %v2269
      %v2366 = vunpack.c.l.b16 %v2270
      %v2367 = vunpack.c.l.b16 %v2271
      %v2368 = vunpack.c.l.b16 %v2272
      %v2369 = vunpack.c.l.b16 %v2273
      %v2370 = vunpack.c.l.b16 %v2274
      %v2371 = vunpack.c.l.b16 %v2275
      %v2372 = vunpack.c.l.b16 %v2276
      %v2373 = vpack.c.b16 %v2358, %v2357
      %v2374 = vpack.c.b16 %v2360, %v2359
      %v2375 = vpack.c.b16 %v2362, %v2361
      %v2376 = vpack.c.b16 %v2364, %v2363
      %v2377 = vpack.c.b16 %v2366, %v2365
      %v2378 = vpack.c.b16 %v2368, %v2367
      %v2379 = vpack.c.b16 %v2370, %v2369
      %v2380 = vpack.c.b16 %v2372, %v2371
      %2389 = vmatpush.bf16.msra.mxu0 %v2380
      %2390 = vmatpush.bf16.msra.mxu0 %v2379
      %2391 = vmatpush.bf16.msra.mxu0 %v2378
      %2392 = vmatpush.bf16.msra.mxu0 %v2377
      %2393 = vmatpush.bf16.msra.mxu0 %v2376
      %2394 = vmatpush.bf16.msra.mxu0 %v2375
      %2395 = vmatpush.bf16.msra.mxu0 %v2374
      %2396 = vmatpush.bf16.msra.mxu0 %v2373
      %2397 = vmatmul.bf16.gmra.mxu0 %v2309
      %v2398 = vpop.f32.mrf.mxu0
      %v2399 = vadd.f32 0.0, %v2398
      %v2400 = vpop.f32.mrf.mxu0
      %v2401 = vadd.f32 0.0, %v2400
      %2402 = vmatmul.bf16.gmra.mxu0 %v2310
      %v2403 = vpop.f32.mrf.mxu0
      %v2404 = vadd.f32 0.0, %v2403
      %v2405 = vpop.f32.mrf.mxu0
      %v2406 = vadd.f32 0.0, %v2405
      %2407 = vmatmul.bf16.gmra.mxu0 %v2311
      %v2408 = vpop.f32.mrf.mxu0
      %v2409 = vadd.f32 0.0, %v2408
      %v2410 = vpop.f32.mrf.mxu0
      %v2411 = vadd.f32 0.0, %v2410
      %2412 = vmatmul.bf16.gmra.mxu0 %v2312
      %v2413 = vpop.f32.mrf.mxu0
      %v2414 = vadd.f32 0.0, %v2413
      %v2415 = vpop.f32.mrf.mxu0
      %v2416 = vadd.f32 0.0, %v2415
      %2417 = vmatmul.bf16.gmra.mxu0 %v2313
      %v2418 = vpop.f32.mrf.mxu0
      %v2419 = vadd.f32 0.0, %v2418
      %v2420 = vpop.f32.mrf.mxu0
      %v2421 = vadd.f32 0.0, %v2420
      %2422 = vmatmul.bf16.gmra.mxu0 %v2314
      %v2423 = vpop.f32.mrf.mxu0
      %v2424 = vadd.f32 0.0, %v2423
      %v2425 = vpop.f32.mrf.mxu0
      %v2426 = vadd.f32 0.0, %v2425
      %2427 = vmatmul.bf16.gmra.mxu0 %v2315
      %v2428 = vpop.f32.mrf.mxu0
      %v2429 = vadd.f32 0.0, %v2428
      %v2430 = vpop.f32.mrf.mxu0
      %v2431 = vadd.f32 0.0, %v2430
      %2432 = vmatmul.bf16.gmra.mxu0 %v2316
      %v2433 = vpop.f32.mrf.mxu0
      %v2434 = vadd.f32 0.0, %v2433
      %v2435 = vpop.f32.mrf.mxu0
      %v2436 = vadd.f32 0.0, %v2435
      %2437 = vmatmul.bf16.gmra.mxu0 %v2317
      %v2438 = vpop.f32.mrf.mxu0
      %v2439 = vadd.f32 0.0, %v2438
      %v2440 = vpop.f32.mrf.mxu0
      %v2441 = vadd.f32 0.0, %v2440
      %2442 = vmatmul.bf16.gmra.mxu0 %v2318
      %v2443 = vpop.f32.mrf.mxu0
      %v2444 = vadd.f32 0.0, %v2443
      %v2445 = vpop.f32.mrf.mxu0
      %v2446 = vadd.f32 0.0, %v2445
      %2447 = vmatmul.bf16.gmra.mxu0 %v2319
      %v2448 = vpop.f32.mrf.mxu0
      %v2449 = vadd.f32 0.0, %v2448
      %v2450 = vpop.f32.mrf.mxu0
      %v2451 = vadd.f32 0.0, %v2450
      %2452 = vmatmul.bf16.gmra.mxu0 %v2320
      %v2453 = vpop.f32.mrf.mxu0
      %v2454 = vadd.f32 0.0, %v2453
      %v2455 = vpop.f32.mrf.mxu0
      %v2456 = vadd.f32 0.0, %v2455
      %2457 = vmatmul.bf16.gmra.mxu0 %v2321
      %v2458 = vpop.f32.mrf.mxu0
      %v2459 = vadd.f32 0.0, %v2458
      %v2460 = vpop.f32.mrf.mxu0
      %v2461 = vadd.f32 0.0, %v2460
      %2462 = vmatmul.bf16.gmra.mxu0 %v2322
      %v2463 = vpop.f32.mrf.mxu0
      %v2464 = vadd.f32 0.0, %v2463
      %v2465 = vpop.f32.mrf.mxu0
      %v2466 = vadd.f32 0.0, %v2465
      %2467 = vmatmul.bf16.gmra.mxu0 %v2323
      %v2468 = vpop.f32.mrf.mxu0
      %v2469 = vadd.f32 0.0, %v2468
      %v2470 = vpop.f32.mrf.mxu0
      %v2471 = vadd.f32 0.0, %v2470
      %2472 = vmatmul.bf16.gmra.mxu0 %v2324
      %v2473 = vpop.f32.mrf.mxu0
      %v2474 = vadd.f32 0.0, %v2473
      %v2475 = vpop.f32.mrf.mxu0
      %v2476 = vadd.f32 0.0, %v2475
      %2477 = vdwg.mxu0
      %v2478 = vadd.f32 %v1796, %v2399
      %v2479 = vadd.f32 %v1797, %v2401
      %v2480 = vadd.f32 %v1798, %v2404
      %v2481 = vadd.f32 %v1799, %v2406
      %v2482 = vadd.f32 %v1800, %v2409
      %v2483 = vadd.f32 %v1801, %v2411
      %v2484 = vadd.f32 %v1802, %v2414
      %v2485 = vadd.f32 %v1803, %v2416
      %v2486 = vadd.f32 %v1804, %v2419
      %v2487 = vadd.f32 %v1805, %v2421
      %v2488 = vadd.f32 %v1806, %v2424
      %v2489 = vadd.f32 %v1807, %v2426
      %v2490 = vadd.f32 %v1808, %v2429
      %v2491 = vadd.f32 %v1809, %v2431
      %v2492 = vadd.f32 %v1810, %v2434
      %v2493 = vadd.f32 %v1811, %v2436
      %v2494 = vadd.f32 %v1812, %v2439
      %v2495 = vadd.f32 %v1813, %v2441
      %v2496 = vadd.f32 %v1814, %v2444
      %v2497 = vadd.f32 %v1815, %v2446
      %v2498 = vadd.f32 %v1816, %v2449
      %v2499 = vadd.f32 %v1817, %v2451
      %v2500 = vadd.f32 %v1818, %v2454
      %v2501 = vadd.f32 %v1819, %v2456
      %v2502 = vadd.f32 %v1820, %v2459
      %v2503 = vadd.f32 %v1821, %v2461
      %v2504 = vadd.f32 %v1822, %v2464
      %v2505 = vadd.f32 %v1823, %v2466
      %v2506 = vadd.f32 %v1824, %v2469
      %v2507 = vadd.f32 %v1825, %v2471
      %v2508 = vadd.f32 %v1826, %v2474
      %v2509 = vadd.f32 %v1827, %v2476
      %v2510 = vld [vmem:[%s1513] sm:$0xe]
      %v2511 = vld [vmem:[%s1513 + $0xc] sm:$0xe]
      %v2512 = vld [vmem:[%s1513 + $0x18] sm:$0xe]
      %v2513 = vld [vmem:[%s1513 + $0x24] sm:$0xe]
      %v2514 = vld [vmem:[%s1513 + $0x30] sm:$0xe]
      %v2515 = vld [vmem:[%s1513 + $0x3c] sm:$0xe]
      %v2516 = vld [vmem:[%s1513 + $0x48] sm:$0xe]
      %v2517 = vld [vmem:[%s1513 + $0x54] sm:$0xe]
      %v2518 = vld [vmem:[%s1513 + $0x60] sm:$0xe]
      %v2519 = vld [vmem:[%s1513 + $0x6c] sm:$0xe]
      %v2520 = vld [vmem:[%s1513 + $0x78] sm:$0xe]
      %v2521 = vld [vmem:[%s1513 + $0x84] sm:$0xe]
      %v2522 = vld [vmem:[%s1513 + $0x90] sm:$0xe]
      %v2523 = vld [vmem:[%s1513 + $0x9c] sm:$0xe]
      %v2524 = vld [vmem:[%s1513 + $0xa8] sm:$0xe]
      %v2525 = vld [vmem:[%s1513 + $0xb4] sm:$0xe]
      %v2574 = vrot.slane %v2510, 5
      %v2575 = vrot.slane %v2574, 4
      %v2576 = vrot.slane %v1829, 5
      %v2577 = vsel %vm1150, %v2575, %v2576
      %v2578 = vrot.slane %v2576, 4
      %v2579 = vrot.slane %v1830, 5
      %v2580 = vsel %vm1150, %v2578, %v2579
      %v2581 = vrot.slane %v2511, 5
      %v2582 = vrot.slane %v2581, 4
      %v2583 = vrot.slane %v1832, 5
      %v2584 = vsel %vm1150, %v2582, %v2583
      %v2585 = vrot.slane %v2583, 4
      %v2586 = vrot.slane %v1833, 5
      %v2587 = vsel %vm1150, %v2585, %v2586
      %v2588 = vrot.slane %v2512, 5
      %v2589 = vrot.slane %v2588, 4
      %v2590 = vrot.slane %v1835, 5
      %v2591 = vsel %vm1150, %v2589, %v2590
      %v2592 = vrot.slane %v2590, 4
      %v2593 = vrot.slane %v1836, 5
      %v2594 = vsel %vm1150, %v2592, %v2593
      %v2595 = vrot.slane %v2513, 5
      %v2596 = vrot.slane %v2595, 4
      %v2597 = vrot.slane %v1838, 5
      %v2598 = vsel %vm1150, %v2596, %v2597
      %v2599 = vrot.slane %v2597, 4
      %v2600 = vrot.slane %v1839, 5
      %v2601 = vsel %vm1150, %v2599, %v2600
      %v2602 = vrot.slane %v2514, 5
      %v2603 = vrot.slane %v2602, 4
      %v2604 = vrot.slane %v1841, 5
      %v2605 = vsel %vm1150, %v2603, %v2604
      %v2606 = vrot.slane %v2604, 4
      %v2607 = vrot.slane %v1842, 5
      %v2608 = vsel %vm1150, %v2606, %v2607
      %v2609 = vrot.slane %v2515, 5
      %v2610 = vrot.slane %v2609, 4
      %v2611 = vrot.slane %v1844, 5
      %v2612 = vsel %vm1150, %v2610, %v2611
      %v2613 = vrot.slane %v2611, 4
      %v2614 = vrot.slane %v1845, 5
      %v2615 = vsel %vm1150, %v2613, %v2614
      %v2616 = vrot.slane %v2516, 5
      %v2617 = vrot.slane %v2616, 4
      %v2618 = vrot.slane %v1847, 5
      %v2619 = vsel %vm1150, %v2617, %v2618
      %v2620 = vrot.slane %v2618, 4
      %v2621 = vrot.slane %v1848, 5
      %v2622 = vsel %vm1150, %v2620, %v2621
      %v2623 = vrot.slane %v2517, 5
      %v2624 = vrot.slane %v2623, 4
      %v2625 = vrot.slane %v1850, 5
      %v2626 = vsel %vm1150, %v2624, %v2625
      %v2627 = vrot.slane %v2625, 4
      %v2628 = vrot.slane %v1851, 5
      %v2629 = vsel %vm1150, %v2627, %v2628
      %v2630 = vrot.slane %v2518, 5
      %v2631 = vrot.slane %v2630, 4
      %v2632 = vrot.slane %v1853, 5
      %v2633 = vsel %vm1150, %v2631, %v2632
      %v2634 = vrot.slane %v2632, 4
      %v2635 = vrot.slane %v1854, 5
      %v2636 = vsel %vm1150, %v2634, %v2635
      %v2637 = vrot.slane %v2519, 5
      %v2638 = vrot.slane %v2637, 4
      %v2639 = vrot.slane %v1856, 5
      %v2640 = vsel %vm1150, %v2638, %v2639
      %v2641 = vrot.slane %v2639, 4
      %v2642 = vrot.slane %v1857, 5
      %v2643 = vsel %vm1150, %v2641, %v2642
      %v2644 = vrot.slane %v2520, 5
      %v2645 = vrot.slane %v2644, 4
      %v2646 = vrot.slane %v1859, 5
      %v2647 = vsel %vm1150, %v2645, %v2646
      %v2648 = vrot.slane %v2646, 4
      %v2649 = vrot.slane %v1860, 5
      %v2650 = vsel %vm1150, %v2648, %v2649
      %v2651 = vrot.slane %v2521, 5
      %v2652 = vrot.slane %v2651, 4
      %v2653 = vrot.slane %v1862, 5
      %v2654 = vsel %vm1150, %v2652, %v2653
      %v2655 = vrot.slane %v2653, 4
      %v2656 = vrot.slane %v1863, 5
      %v2657 = vsel %vm1150, %v2655, %v2656
      %v2658 = vrot.slane %v2522, 5
      %v2659 = vrot.slane %v2658, 4
      %v2660 = vrot.slane %v1865, 5
      %v2661 = vsel %vm1150, %v2659, %v2660
      %v2662 = vrot.slane %v2660, 4
      %v2663 = vrot.slane %v1866, 5
      %v2664 = vsel %vm1150, %v2662, %v2663
      %v2665 = vrot.slane %v2523, 5
      %v2666 = vrot.slane %v2665, 4
      %v2667 = vrot.slane %v1868, 5
      %v2668 = vsel %vm1150, %v2666, %v2667
      %v2669 = vrot.slane %v2667, 4
      %v2670 = vrot.slane %v1869, 5
      %v2671 = vsel %vm1150, %v2669, %v2670
      %v2672 = vrot.slane %v2524, 5
      %v2673 = vrot.slane %v2672, 4
      %v2674 = vrot.slane %v1871, 5
      %v2675 = vsel %vm1150, %v2673, %v2674
      %v2676 = vrot.slane %v2674, 4
      %v2677 = vrot.slane %v1872, 5
      %v2678 = vsel %vm1150, %v2676, %v2677
      %v2679 = vrot.slane %v2525, 5
      %v2680 = vrot.slane %v2679, 4
      %v2681 = vrot.slane %v1874, 5
      %v2682 = vsel %vm1150, %v2680, %v2681
      %v2683 = vrot.slane %v2681, 4
      %v2684 = vrot.slane %v1875, 5
      %v2685 = vsel %vm1150, %v2683, %v2684
      %s2686 = scalar_lea.vmem %s1, 320
      %v2687 = vld [vmem:[%s2686] sm:$0xf]
      %v2688 = vld [vmem:[%s2686 + $0x4] sm:$0xf]
      %v2689 = vld [vmem:[%s2686 + $0x8] sm:$0xf]
      %v2690 = vld [vmem:[%s2686 + $0xc] sm:$0xf]
      %v2691 = vld [vmem:[%s2686 + $0x10] sm:$0xf]
      %v2692 = vld [vmem:[%s2686 + $0x14] sm:$0xf]
      %v2693 = vld [vmem:[%s2686 + $0x18] sm:$0xf]
      %v2694 = vld [vmem:[%s2686 + $0x1c] sm:$0xf]
      %v2695 = vld [vmem:[%s2686 + $0x20] sm:$0xf]
      %v2696 = vld [vmem:[%s2686 + $0x24] sm:$0xf]
      %v2697 = vld [vmem:[%s2686 + $0x28] sm:$0xf]
      %v2698 = vld [vmem:[%s2686 + $0x2c] sm:$0xf]
      %v2699 = vld [vmem:[%s2686 + $0x30] sm:$0xf]
      %v2700 = vld [vmem:[%s2686 + $0x34] sm:$0xf]
      %v2701 = vld [vmem:[%s2686 + $0x38] sm:$0xf]
      %v2702 = vld [vmem:[%s2686 + $0x3c] sm:$0xf]
      %v2703 = vunpack.c.l.b16 %v2577
      %v2704 = vunpack.c.l.b16 %v2580
      %v2705 = vunpack.c.l.b16 %v2584
      %v2706 = vunpack.c.l.b16 %v2587
      %v2707 = vunpack.c.l.b16 %v2591
      %v2708 = vunpack.c.l.b16 %v2594
      %v2709 = vunpack.c.l.b16 %v2598
      %v2710 = vunpack.c.l.b16 %v2601
      %v2711 = vunpack.c.l.b16 %v2605
      %v2712 = vunpack.c.l.b16 %v2608
      %v2713 = vunpack.c.l.b16 %v2612
      %v2714 = vunpack.c.l.b16 %v2615
      %v2715 = vunpack.c.l.b16 %v2619
      %v2716 = vunpack.c.l.b16 %v2622
      %v2717 = vunpack.c.l.b16 %v2626
      %v2718 = vunpack.c.l.b16 %v2629
      %v2719 = vunpack.c.l.b16 %v2633
      %v2720 = vunpack.c.l.b16 %v2636
      %v2721 = vunpack.c.l.b16 %v2640
      %v2722 = vunpack.c.l.b16 %v2643
      %v2723 = vunpack.c.l.b16 %v2647
      %v2724 = vunpack.c.l.b16 %v2650
      %v2725 = vunpack.c.l.b16 %v2654
      %v2726 = vunpack.c.l.b16 %v2657
      %v2727 = vunpack.c.l.b16 %v2661
      %v2728 = vunpack.c.l.b16 %v2664
      %v2729 = vunpack.c.l.b16 %v2668
      %v2730 = vunpack.c.l.b16 %v2671
      %v2731 = vunpack.c.l.b16 %v2675
      %v2732 = vunpack.c.l.b16 %v2678
      %v2733 = vunpack.c.l.b16 %v2682
      %v2734 = vunpack.c.l.b16 %v2685
      %v2735 = vpack.c.b16 %v2704, %v2703
      %v2736 = vpack.c.b16 %v2706, %v2705
      %v2737 = vpack.c.b16 %v2708, %v2707
      %v2738 = vpack.c.b16 %v2710, %v2709
      %v2739 = vpack.c.b16 %v2712, %v2711
      %v2740 = vpack.c.b16 %v2714, %v2713
      %v2741 = vpack.c.b16 %v2716, %v2715
      %v2742 = vpack.c.b16 %v2718, %v2717
      %v2743 = vpack.c.b16 %v2720, %v2719
      %v2744 = vpack.c.b16 %v2722, %v2721
      %v2745 = vpack.c.b16 %v2724, %v2723
      %v2746 = vpack.c.b16 %v2726, %v2725
      %v2747 = vpack.c.b16 %v2728, %v2727
      %v2748 = vpack.c.b16 %v2730, %v2729
      %v2749 = vpack.c.b16 %v2732, %v2731
      %v2750 = vpack.c.b16 %v2734, %v2733
      %v2783 = vunpack.c.l.b16 %v2687
      %v2784 = vunpack.c.l.b16 %v2688
      %v2785 = vunpack.c.l.b16 %v2689
      %v2786 = vunpack.c.l.b16 %v2690
      %v2787 = vunpack.c.l.b16 %v2691
      %v2788 = vunpack.c.l.b16 %v2692
      %v2789 = vunpack.c.l.b16 %v2693
      %v2790 = vunpack.c.l.b16 %v2694
      %v2791 = vunpack.c.l.b16 %v2695
      %v2792 = vunpack.c.l.b16 %v2696
      %v2793 = vunpack.c.l.b16 %v2697
      %v2794 = vunpack.c.l.b16 %v2698
      %v2795 = vunpack.c.l.b16 %v2699
      %v2796 = vunpack.c.l.b16 %v2700
      %v2797 = vunpack.c.l.b16 %v2701
      %v2798 = vunpack.c.l.b16 %v2702
      %v2799 = vpack.c.b16 %v2784, %v2783
      %v2800 = vpack.c.b16 %v2786, %v2785
      %v2801 = vpack.c.b16 %v2788, %v2787
      %v2802 = vpack.c.b16 %v2790, %v2789
      %v2803 = vpack.c.b16 %v2792, %v2791
      %v2804 = vpack.c.b16 %v2794, %v2793
      %v2805 = vpack.c.b16 %v2796, %v2795
      %v2806 = vpack.c.b16 %v2798, %v2797
      %2815 = vmatpush.bf16.msra.mxu0 %v2806
      %2816 = vmatpush.bf16.msra.mxu0 %v2805
      %2817 = vmatpush.bf16.msra.mxu0 %v2804
      %2818 = vmatpush.bf16.msra.mxu0 %v2803
      %2819 = vmatpush.bf16.msra.mxu0 %v2802
      %2820 = vmatpush.bf16.msra.mxu0 %v2801
      %2821 = vmatpush.bf16.msra.mxu0 %v2800
      %2822 = vmatpush.bf16.msra.mxu0 %v2799
      %2823 = vmatmul.bf16.gmra.mxu0 %v2735
      %v2824 = vpop.f32.mrf.mxu0
      %v2825 = vadd.f32 0.0, %v2824
      %v2826 = vpop.f32.mrf.mxu0
      %v2827 = vadd.f32 0.0, %v2826
      %2828 = vmatmul.bf16.gmra.mxu0 %v2736
      %v2829 = vpop.f32.mrf.mxu0
      %v2830 = vadd.f32 0.0, %v2829
      %v2831 = vpop.f32.mrf.mxu0
      %v2832 = vadd.f32 0.0, %v2831
      %2833 = vmatmul.bf16.gmra.mxu0 %v2737
      %v2834 = vpop.f32.mrf.mxu0
      %v2835 = vadd.f32 0.0, %v2834
      %v2836 = vpop.f32.mrf.mxu0
      %v2837 = vadd.f32 0.0, %v2836
      %2838 = vmatmul.bf16.gmra.mxu0 %v2738
      %v2839 = vpop.f32.mrf.mxu0
      %v2840 = vadd.f32 0.0, %v2839
      %v2841 = vpop.f32.mrf.mxu0
      %v2842 = vadd.f32 0.0, %v2841
      %2843 = vmatmul.bf16.gmra.mxu0 %v2739
      %v2844 = vpop.f32.mrf.mxu0
      %v2845 = vadd.f32 0.0, %v2844
      %v2846 = vpop.f32.mrf.mxu0
      %v2847 = vadd.f32 0.0, %v2846
      %2848 = vmatmul.bf16.gmra.mxu0 %v2740
      %v2849 = vpop.f32.mrf.mxu0
      %v2850 = vadd.f32 0.0, %v2849
      %v2851 = vpop.f32.mrf.mxu0
      %v2852 = vadd.f32 0.0, %v2851
      %2853 = vmatmul.bf16.gmra.mxu0 %v2741
      %v2854 = vpop.f32.mrf.mxu0
      %v2855 = vadd.f32 0.0, %v2854
      %v2856 = vpop.f32.mrf.mxu0
      %v2857 = vadd.f32 0.0, %v2856
      %2858 = vmatmul.bf16.gmra.mxu0 %v2742
      %v2859 = vpop.f32.mrf.mxu0
      %v2860 = vadd.f32 0.0, %v2859
      %v2861 = vpop.f32.mrf.mxu0
      %v2862 = vadd.f32 0.0, %v2861
      %2863 = vmatmul.bf16.gmra.mxu0 %v2743
      %v2864 = vpop.f32.mrf.mxu0
      %v2865 = vadd.f32 0.0, %v2864
      %v2866 = vpop.f32.mrf.mxu0
      %v2867 = vadd.f32 0.0, %v2866
      %2868 = vmatmul.bf16.gmra.mxu0 %v2744
      %v2869 = vpop.f32.mrf.mxu0
      %v2870 = vadd.f32 0.0, %v2869
      %v2871 = vpop.f32.mrf.mxu0
      %v2872 = vadd.f32 0.0, %v2871
      %2873 = vmatmul.bf16.gmra.mxu0 %v2745
      %v2874 = vpop.f32.mrf.mxu0
      %v2875 = vadd.f32 0.0, %v2874
      %v2876 = vpop.f32.mrf.mxu0
      %v2877 = vadd.f32 0.0, %v2876
      %2878 = vmatmul.bf16.gmra.mxu0 %v2746
      %v2879 = vpop.f32.mrf.mxu0
      %v2880 = vadd.f32 0.0, %v2879
      %v2881 = vpop.f32.mrf.mxu0
      %v2882 = vadd.f32 0.0, %v2881
      %2883 = vmatmul.bf16.gmra.mxu0 %v2747
      %v2884 = vpop.f32.mrf.mxu0
      %v2885 = vadd.f32 0.0, %v2884
      %v2886 = vpop.f32.mrf.mxu0
      %v2887 = vadd.f32 0.0, %v2886
      %2888 = vmatmul.bf16.gmra.mxu0 %v2748
      %v2889 = vpop.f32.mrf.mxu0
      %v2890 = vadd.f32 0.0, %v2889
      %v2891 = vpop.f32.mrf.mxu0
      %v2892 = vadd.f32 0.0, %v2891
      %2893 = vmatmul.bf16.gmra.mxu0 %v2749
      %v2894 = vpop.f32.mrf.mxu0
      %v2895 = vadd.f32 0.0, %v2894
      %v2896 = vpop.f32.mrf.mxu0
      %v2897 = vadd.f32 0.0, %v2896
      %2898 = vmatmul.bf16.gmra.mxu0 %v2750
      %v2899 = vpop.f32.mrf.mxu0
      %v2900 = vadd.f32 0.0, %v2899
      %v2901 = vpop.f32.mrf.mxu0
      %v2902 = vadd.f32 0.0, %v2901
      %2903 = vdwg.mxu0
      %v2904 = vadd.f32 %v2478, %v2825
      %v2905 = vadd.f32 %v2479, %v2827
      %v2906 = vadd.f32 %v2480, %v2830
      %v2907 = vadd.f32 %v2481, %v2832
      %v2908 = vadd.f32 %v2482, %v2835
      %v2909 = vadd.f32 %v2483, %v2837
      %v2910 = vadd.f32 %v2484, %v2840
      %v2911 = vadd.f32 %v2485, %v2842
      %v2912 = vadd.f32 %v2486, %v2845
      %v2913 = vadd.f32 %v2487, %v2847
      %v2914 = vadd.f32 %v2488, %v2850
      %v2915 = vadd.f32 %v2489, %v2852
      %v2916 = vadd.f32 %v2490, %v2855
      %v2917 = vadd.f32 %v2491, %v2857
      %v2918 = vadd.f32 %v2492, %v2860
      %v2919 = vadd.f32 %v2493, %v2862
      %v2920 = vadd.f32 %v2494, %v2865
      %v2921 = vadd.f32 %v2495, %v2867
      %v2922 = vadd.f32 %v2496, %v2870
      %v2923 = vadd.f32 %v2497, %v2872
      %v2924 = vadd.f32 %v2498, %v2875
      %v2925 = vadd.f32 %v2499, %v2877
      %v2926 = vadd.f32 %v2500, %v2880
      %v2927 = vadd.f32 %v2501, %v2882
      %v2928 = vadd.f32 %v2502, %v2885
      %v2929 = vadd.f32 %v2503, %v2887
      %v2930 = vadd.f32 %v2504, %v2890
      %v2931 = vadd.f32 %v2505, %v2892
      %v2932 = vadd.f32 %v2506, %v2895
      %v2933 = vadd.f32 %v2507, %v2897
      %v2934 = vadd.f32 %v2508, %v2900
      %v2935 = vadd.f32 %v2509, %v2902
      %s2936 = scalar_lea.vmem %s192, 24
      %v2937 = vld [vmem:[%s2936] sm:$0xf]
      %v2938 = vld [vmem:[%s2936 + $0x4] sm:$0xf]
      %v2939 = vld [vmem:[%s2936 + $0xc] sm:$0xf]
      %v2940 = vld [vmem:[%s2936 + $0x10] sm:$0xf]
      %v2941 = vld [vmem:[%s2936 + $0x18] sm:$0xf]
      %v2942 = vld [vmem:[%s2936 + $0x1c] sm:$0xf]
      %v2943 = vld [vmem:[%s2936 + $0x24] sm:$0xf]
      %v2944 = vld [vmem:[%s2936 + $0x28] sm:$0xf]
      %v2945 = vld [vmem:[%s2936 + $0x30] sm:$0xf]
      %v2946 = vld [vmem:[%s2936 + $0x34] sm:$0xf]
      %v2947 = vld [vmem:[%s2936 + $0x3c] sm:$0xf]
      %v2948 = vld [vmem:[%s2936 + $0x40] sm:$0xf]
      %v2949 = vld [vmem:[%s2936 + $0x48] sm:$0xf]
      %v2950 = vld [vmem:[%s2936 + $0x4c] sm:$0xf]
      %v2951 = vld [vmem:[%s2936 + $0x54] sm:$0xf]
      %v2952 = vld [vmem:[%s2936 + $0x58] sm:$0xf]
      %v2953 = vld [vmem:[%s2936 + $0x60] sm:$0xf]
      %v2954 = vld [vmem:[%s2936 + $0x64] sm:$0xf]
      %v2955 = vld [vmem:[%s2936 + $0x6c] sm:$0xf]
      %v2956 = vld [vmem:[%s2936 + $0x70] sm:$0xf]
      %v2957 = vld [vmem:[%s2936 + $0x78] sm:$0xf]
      %v2958 = vld [vmem:[%s2936 + $0x7c] sm:$0xf]
      %v2959 = vld [vmem:[%s2936 + $0x84] sm:$0xf]
      %v2960 = vld [vmem:[%s2936 + $0x88] sm:$0xf]
      %v2961 = vld [vmem:[%s2936 + $0x90] sm:$0xf]
      %v2962 = vld [vmem:[%s2936 + $0x94] sm:$0xf]
      %v2963 = vld [vmem:[%s2936 + $0x9c] sm:$0xf]
      %v2964 = vld [vmem:[%s2936 + $0xa0] sm:$0xf]
      %v2965 = vld [vmem:[%s2936 + $0xa8] sm:$0xf]
      %v2966 = vld [vmem:[%s2936 + $0xac] sm:$0xf]
      %v2967 = vld [vmem:[%s2936 + $0xb4] sm:$0xf]
      %v2968 = vld [vmem:[%s2936 + $0xb8] sm:$0xf]
      %s2969 = scalar_lea.vmem %s1, 384
      %v2970 = vld [vmem:[%s2969] sm:$0xf]
      %v2971 = vld [vmem:[%s2969 + $0x4] sm:$0xf]
      %v2972 = vld [vmem:[%s2969 + $0x8] sm:$0xf]
      %v2973 = vld [vmem:[%s2969 + $0xc] sm:$0xf]
      %v2974 = vld [vmem:[%s2969 + $0x10] sm:$0xf]
      %v2975 = vld [vmem:[%s2969 + $0x14] sm:$0xf]
      %v2976 = vld [vmem:[%s2969 + $0x18] sm:$0xf]
      %v2977 = vld [vmem:[%s2969 + $0x1c] sm:$0xf]
      %v2978 = vld [vmem:[%s2969 + $0x20] sm:$0xf]
      %v2979 = vld [vmem:[%s2969 + $0x24] sm:$0xf]
      %v2980 = vld [vmem:[%s2969 + $0x28] sm:$0xf]
      %v2981 = vld [vmem:[%s2969 + $0x2c] sm:$0xf]
      %v2982 = vld [vmem:[%s2969 + $0x30] sm:$0xf]
      %v2983 = vld [vmem:[%s2969 + $0x34] sm:$0xf]
      %v2984 = vld [vmem:[%s2969 + $0x38] sm:$0xf]
      %v2985 = vld [vmem:[%s2969 + $0x3c] sm:$0xf]
      %v3018 = vunpack.c.l.b16 %v2937
      %v3019 = vunpack.c.l.b16 %v2938
      %v3020 = vunpack.c.l.b16 %v2939
      %v3021 = vunpack.c.l.b16 %v2940
      %v3022 = vunpack.c.l.b16 %v2941
      %v3023 = vunpack.c.l.b16 %v2942
      %v3024 = vunpack.c.l.b16 %v2943
      %v3025 = vunpack.c.l.b16 %v2944
      %v3026 = vunpack.c.l.b16 %v2945
      %v3027 = vunpack.c.l.b16 %v2946
      %v3028 = vunpack.c.l.b16 %v2947
      %v3029 = vunpack.c.l.b16 %v2948
      %v3030 = vunpack.c.l.b16 %v2949
      %v3031 = vunpack.c.l.b16 %v2950
      %v3032 = vunpack.c.l.b16 %v2951
      %v3033 = vunpack.c.l.b16 %v2952
      %v3034 = vunpack.c.l.b16 %v2953
      %v3035 = vunpack.c.l.b16 %v2954
      %v3036 = vunpack.c.l.b16 %v2955
      %v3037 = vunpack.c.l.b16 %v2956
      %v3038 = vunpack.c.l.b16 %v2957
      %v3039 = vunpack.c.l.b16 %v2958
      %v3040 = vunpack.c.l.b16 %v2959
      %v3041 = vunpack.c.l.b16 %v2960
      %v3042 = vunpack.c.l.b16 %v2961
      %v3043 = vunpack.c.l.b16 %v2962
      %v3044 = vunpack.c.l.b16 %v2963
      %v3045 = vunpack.c.l.b16 %v2964
      %v3046 = vunpack.c.l.b16 %v2965
      %v3047 = vunpack.c.l.b16 %v2966
      %v3048 = vunpack.c.l.b16 %v2967
      %v3049 = vunpack.c.l.b16 %v2968
      %v3050 = vpack.c.b16 %v3019, %v3018
      %v3051 = vpack.c.b16 %v3021, %v3020
      %v3052 = vpack.c.b16 %v3023, %v3022
      %v3053 = vpack.c.b16 %v3025, %v3024
      %v3054 = vpack.c.b16 %v3027, %v3026
      %v3055 = vpack.c.b16 %v3029, %v3028
      %v3056 = vpack.c.b16 %v3031, %v3030
      %v3057 = vpack.c.b16 %v3033, %v3032
      %v3058 = vpack.c.b16 %v3035, %v3034
      %v3059 = vpack.c.b16 %v3037, %v3036
      %v3060 = vpack.c.b16 %v3039, %v3038
      %v3061 = vpack.c.b16 %v3041, %v3040
      %v3062 = vpack.c.b16 %v3043, %v3042
      %v3063 = vpack.c.b16 %v3045, %v3044
      %v3064 = vpack.c.b16 %v3047, %v3046
      %v3065 = vpack.c.b16 %v3049, %v3048
      %v3098 = vunpack.c.l.b16 %v2970
      %v3099 = vunpack.c.l.b16 %v2971
      %v3100 = vunpack.c.l.b16 %v2972
      %v3101 = vunpack.c.l.b16 %v2973
      %v3102 = vunpack.c.l.b16 %v2974
      %v3103 = vunpack.c.l.b16 %v2975
      %v3104 = vunpack.c.l.b16 %v2976
      %v3105 = vunpack.c.l.b16 %v2977
      %v3106 = vunpack.c.l.b16 %v2978
      %v3107 = vunpack.c.l.b16 %v2979
      %v3108 = vunpack.c.l.b16 %v2980
      %v3109 = vunpack.c.l.b16 %v2981
      %v3110 = vunpack.c.l.b16 %v2982
      %v3111 = vunpack.c.l.b16 %v2983
      %v3112 = vunpack.c.l.b16 %v2984
      %v3113 = vunpack.c.l.b16 %v2985
      %v3114 = vpack.c.b16 %v3099, %v3098
      %v3115 = vpack.c.b16 %v3101, %v3100
      %v3116 = vpack.c.b16 %v3103, %v3102
      %v3117 = vpack.c.b16 %v3105, %v3104
      %v3118 = vpack.c.b16 %v3107, %v3106
      %v3119 = vpack.c.b16 %v3109, %v3108
      %v3120 = vpack.c.b16 %v3111, %v3110
      %v3121 = vpack.c.b16 %v3113, %v3112
      %3130 = vmatpush.bf16.msra.mxu0 %v3121
      %3131 = vmatpush.bf16.msra.mxu0 %v3120
      %3132 = vmatpush.bf16.msra.mxu0 %v3119
      %3133 = vmatpush.bf16.msra.mxu0 %v3118
      %3134 = vmatpush.bf16.msra.mxu0 %v3117
      %3135 = vmatpush.bf16.msra.mxu0 %v3116
      %3136 = vmatpush.bf16.msra.mxu0 %v3115
      %3137 = vmatpush.bf16.msra.mxu0 %v3114
      %3138 = vmatmul.bf16.gmra.mxu0 %v3050
      %v3139 = vpop.f32.mrf.mxu0
      %v3140 = vadd.f32 0.0, %v3139
      %v3141 = vpop.f32.mrf.mxu0
      %v3142 = vadd.f32 0.0, %v3141
      %3143 = vmatmul.bf16.gmra.mxu0 %v3051
      %v3144 = vpop.f32.mrf.mxu0
      %v3145 = vadd.f32 0.0, %v3144
      %v3146 = vpop.f32.mrf.mxu0
      %v3147 = vadd.f32 0.0, %v3146
      %3148 = vmatmul.bf16.gmra.mxu0 %v3052
      %v3149 = vpop.f32.mrf.mxu0
      %v3150 = vadd.f32 0.0, %v3149
      %v3151 = vpop.f32.mrf.mxu0
      %v3152 = vadd.f32 0.0, %v3151
      %3153 = vmatmul.bf16.gmra.mxu0 %v3053
      %v3154 = vpop.f32.mrf.mxu0
      %v3155 = vadd.f32 0.0, %v3154
      %v3156 = vpop.f32.mrf.mxu0
      %v3157 = vadd.f32 0.0, %v3156
      %3158 = vmatmul.bf16.gmra.mxu0 %v3054
      %v3159 = vpop.f32.mrf.mxu0
      %v3160 = vadd.f32 0.0, %v3159
      %v3161 = vpop.f32.mrf.mxu0
      %v3162 = vadd.f32 0.0, %v3161
      %3163 = vmatmul.bf16.gmra.mxu0 %v3055
      %v3164 = vpop.f32.mrf.mxu0
      %v3165 = vadd.f32 0.0, %v3164
      %v3166 = vpop.f32.mrf.mxu0
      %v3167 = vadd.f32 0.0, %v3166
      %3168 = vmatmul.bf16.gmra.mxu0 %v3056
      %v3169 = vpop.f32.mrf.mxu0
      %v3170 = vadd.f32 0.0, %v3169
      %v3171 = vpop.f32.mrf.mxu0
      %v3172 = vadd.f32 0.0, %v3171
      %3173 = vmatmul.bf16.gmra.mxu0 %v3057
      %v3174 = vpop.f32.mrf.mxu0
      %v3175 = vadd.f32 0.0, %v3174
      %v3176 = vpop.f32.mrf.mxu0
      %v3177 = vadd.f32 0.0, %v3176
      %3178 = vmatmul.bf16.gmra.mxu0 %v3058
      %v3179 = vpop.f32.mrf.mxu0
      %v3180 = vadd.f32 0.0, %v3179
      %v3181 = vpop.f32.mrf.mxu0
      %v3182 = vadd.f32 0.0, %v3181
      %3183 = vmatmul.bf16.gmra.mxu0 %v3059
      %v3184 = vpop.f32.mrf.mxu0
      %v3185 = vadd.f32 0.0, %v3184
      %v3186 = vpop.f32.mrf.mxu0
      %v3187 = vadd.f32 0.0, %v3186
      %3188 = vmatmul.bf16.gmra.mxu0 %v3060
      %v3189 = vpop.f32.mrf.mxu0
      %v3190 = vadd.f32 0.0, %v3189
      %v3191 = vpop.f32.mrf.mxu0
      %v3192 = vadd.f32 0.0, %v3191
      %3193 = vmatmul.bf16.gmra.mxu0 %v3061
      %v3194 = vpop.f32.mrf.mxu0
      %v3195 = vadd.f32 0.0, %v3194
      %v3196 = vpop.f32.mrf.mxu0
      %v3197 = vadd.f32 0.0, %v3196
      %3198 = vmatmul.bf16.gmra.mxu0 %v3062
      %v3199 = vpop.f32.mrf.mxu0
      %v3200 = vadd.f32 0.0, %v3199
      %v3201 = vpop.f32.mrf.mxu0
      %v3202 = vadd.f32 0.0, %v3201
      %3203 = vmatmul.bf16.gmra.mxu0 %v3063
      %v3204 = vpop.f32.mrf.mxu0
      %v3205 = vadd.f32 0.0, %v3204
      %v3206 = vpop.f32.mrf.mxu0
      %v3207 = vadd.f32 0.0, %v3206
      %3208 = vmatmul.bf16.gmra.mxu0 %v3064
      %v3209 = vpop.f32.mrf.mxu0
      %v3210 = vadd.f32 0.0, %v3209
      %v3211 = vpop.f32.mrf.mxu0
      %v3212 = vadd.f32 0.0, %v3211
      %3213 = vmatmul.bf16.gmra.mxu0 %v3065
      %v3214 = vpop.f32.mrf.mxu0
      %v3215 = vadd.f32 0.0, %v3214
      %v3216 = vpop.f32.mrf.mxu0
      %v3217 = vadd.f32 0.0, %v3216
      %3218 = vdwg.mxu0
      %v3219 = vadd.f32 %v2904, %v3140
      %v3220 = vadd.f32 %v2905, %v3142
      %v3221 = vadd.f32 %v2906, %v3145
      %v3222 = vadd.f32 %v2907, %v3147
      %v3223 = vadd.f32 %v2908, %v3150
      %v3224 = vadd.f32 %v2909, %v3152
      %v3225 = vadd.f32 %v2910, %v3155
      %v3226 = vadd.f32 %v2911, %v3157
      %v3227 = vadd.f32 %v2912, %v3160
      %v3228 = vadd.f32 %v2913, %v3162
      %v3229 = vadd.f32 %v2914, %v3165
      %v3230 = vadd.f32 %v2915, %v3167
      %v3231 = vadd.f32 %v2916, %v3170
      %v3232 = vadd.f32 %v2917, %v3172
      %v3233 = vadd.f32 %v2918, %v3175
      %v3234 = vadd.f32 %v2919, %v3177
      %v3235 = vadd.f32 %v2920, %v3180
      %v3236 = vadd.f32 %v2921, %v3182
      %v3237 = vadd.f32 %v2922, %v3185
      %v3238 = vadd.f32 %v2923, %v3187
      %v3239 = vadd.f32 %v2924, %v3190
      %v3240 = vadd.f32 %v2925, %v3192
      %v3241 = vadd.f32 %v2926, %v3195
      %v3242 = vadd.f32 %v2927, %v3197
      %v3243 = vadd.f32 %v2928, %v3200
      %v3244 = vadd.f32 %v2929, %v3202
      %v3245 = vadd.f32 %v2930, %v3205
      %v3246 = vadd.f32 %v2931, %v3207
      %v3247 = vadd.f32 %v2932, %v3210
      %v3248 = vadd.f32 %v2933, %v3212
      %v3249 = vadd.f32 %v2934, %v3215
      %v3250 = vadd.f32 %v2935, %v3217
      %v3251 = vld [vmem:[%s2936] sm:$0xf]
      %v3252 = vld [vmem:[%s2936 + $0x4] sm:$0xf]
      %v3253 = vld [vmem:[%s2936 + $0x8] sm:$0x1]
      %v3254 = vld [vmem:[%s2936 + $0xc] sm:$0xf]
      %v3255 = vld [vmem:[%s2936 + $0x10] sm:$0xf]
      %v3256 = vld [vmem:[%s2936 + $0x14] sm:$0x1]
      %v3257 = vld [vmem:[%s2936 + $0x18] sm:$0xf]
      %v3258 = vld [vmem:[%s2936 + $0x1c] sm:$0xf]
      %v3259 = vld [vmem:[%s2936 + $0x20] sm:$0x1]
      %v3260 = vld [vmem:[%s2936 + $0x24] sm:$0xf]
      %v3261 = vld [vmem:[%s2936 + $0x28] sm:$0xf]
      %v3262 = vld [vmem:[%s2936 + $0x2c] sm:$0x1]
      %v3263 = vld [vmem:[%s2936 + $0x30] sm:$0xf]
      %v3264 = vld [vmem:[%s2936 + $0x34] sm:$0xf]
      %v3265 = vld [vmem:[%s2936 + $0x38] sm:$0x1]
      %v3266 = vld [vmem:[%s2936 + $0x3c] sm:$0xf]
      %v3267 = vld [vmem:[%s2936 + $0x40] sm:$0xf]
      %v3268 = vld [vmem:[%s2936 + $0x44] sm:$0x1]
      %v3269 = vld [vmem:[%s2936 + $0x48] sm:$0xf]
      %v3270 = vld [vmem:[%s2936 + $0x4c] sm:$0xf]
      %v3271 = vld [vmem:[%s2936 + $0x50] sm:$0x1]
      %v3272 = vld [vmem:[%s2936 + $0x54] sm:$0xf]
      %v3273 = vld [vmem:[%s2936 + $0x58] sm:$0xf]
      %v3274 = vld [vmem:[%s2936 + $0x5c] sm:$0x1]
      %v3275 = vld [vmem:[%s2936 + $0x60] sm:$0xf]
      %v3276 = vld [vmem:[%s2936 + $0x64] sm:$0xf]
      %v3277 = vld [vmem:[%s2936 + $0x68] sm:$0x1]
      %v3278 = vld [vmem:[%s2936 + $0x6c] sm:$0xf]
      %v3279 = vld [vmem:[%s2936 + $0x70] sm:$0xf]
      %v3280 = vld [vmem:[%s2936 + $0x74] sm:$0x1]
      %v3281 = vld [vmem:[%s2936 + $0x78] sm:$0xf]
      %v3282 = vld [vmem:[%s2936 + $0x7c] sm:$0xf]
      %v3283 = vld [vmem:[%s2936 + $0x80] sm:$0x1]
      %v3284 = vld [vmem:[%s2936 + $0x84] sm:$0xf]
      %v3285 = vld [vmem:[%s2936 + $0x88] sm:$0xf]
      %v3286 = vld [vmem:[%s2936 + $0x8c] sm:$0x1]
      %v3287 = vld [vmem:[%s2936 + $0x90] sm:$0xf]
      %v3288 = vld [vmem:[%s2936 + $0x94] sm:$0xf]
      %v3289 = vld [vmem:[%s2936 + $0x98] sm:$0x1]
      %v3290 = vld [vmem:[%s2936 + $0x9c] sm:$0xf]
      %v3291 = vld [vmem:[%s2936 + $0xa0] sm:$0xf]
      %v3292 = vld [vmem:[%s2936 + $0xa4] sm:$0x1]
      %v3293 = vld [vmem:[%s2936 + $0xa8] sm:$0xf]
      %v3294 = vld [vmem:[%s2936 + $0xac] sm:$0xf]
      %v3295 = vld [vmem:[%s2936 + $0xb0] sm:$0x1]
      %v3296 = vld [vmem:[%s2936 + $0xb4] sm:$0xf]
      %v3297 = vld [vmem:[%s2936 + $0xb8] sm:$0xf]
      %v3298 = vld [vmem:[%s2936 + $0xbc] sm:$0x1]
      %v3300 = vshrl.u32 %v3251, 16
      %v3302 = vrot.slane %v3300, 4
      %v3303 = vshll.u32 %v3251, 16
      %v3305 = vrot.slane %v3303, 5
      %v3306 = vor.u32 %v3302, %v3305
      %v3307 = vrot.slane %v3306, 4
      %v3309 = vshll.u32 %v3252, 16
      %v3311 = vrot.slane %v3309, 5
      %v3312 = vsel %vm264, %v3307, %v3311
      %v3313 = vshrl.u32 %v3252, 16
      %v3315 = vrot.slane %v3313, 4
      %v3316 = vor.u32 %v3315, %v3311
      %v3317 = vrot.slane %v3316, 4
      %v3319 = vshll.u32 %v3253, 16
      %v3321 = vrot.slane %v3319, 5
      %v3322 = vsel %vm264, %v3317, %v3321
      %v3324 = vshrl.u32 %v3254, 16
      %v3326 = vrot.slane %v3324, 4
      %v3327 = vshll.u32 %v3254, 16
      %v3329 = vrot.slane %v3327, 5
      %v3330 = vor.u32 %v3326, %v3329
      %v3331 = vrot.slane %v3330, 4
      %v3333 = vshll.u32 %v3255, 16
      %v3335 = vrot.slane %v3333, 5
      %v3336 = vsel %vm264, %v3331, %v3335
      %v3337 = vshrl.u32 %v3255, 16
      %v3339 = vrot.slane %v3337, 4
      %v3340 = vor.u32 %v3339, %v3335
      %v3341 = vrot.slane %v3340, 4
      %v3343 = vshll.u32 %v3256, 16
      %v3345 = vrot.slane %v3343, 5
      %v3346 = vsel %vm264, %v3341, %v3345
      %v3348 = vshrl.u32 %v3257, 16
      %v3350 = vrot.slane %v3348, 4
      %v3351 = vshll.u32 %v3257, 16
      %v3353 = vrot.slane %v3351, 5
      %v3354 = vor.u32 %v3350, %v3353
      %v3355 = vrot.slane %v3354, 4
      %v3357 = vshll.u32 %v3258, 16
      %v3359 = vrot.slane %v3357, 5
      %v3360 = vsel %vm264, %v3355, %v3359
      %v3361 = vshrl.u32 %v3258, 16
      %v3363 = vrot.slane %v3361, 4
      %v3364 = vor.u32 %v3363, %v3359
      %v3365 = vrot.slane %v3364, 4
      %v3367 = vshll.u32 %v3259, 16
      %v3369 = vrot.slane %v3367, 5
      %v3370 = vsel %vm264, %v3365, %v3369
      %v3372 = vshrl.u32 %v3260, 16
      %v3374 = vrot.slane %v3372, 4
      %v3375 = vshll.u32 %v3260, 16
      %v3377 = vrot.slane %v3375, 5
      %v3378 = vor.u32 %v3374, %v3377
      %v3379 = vrot.slane %v3378, 4
      %v3381 = vshll.u32 %v3261, 16
      %v3383 = vrot.slane %v3381, 5
      %v3384 = vsel %vm264, %v3379, %v3383
      %v3385 = vshrl.u32 %v3261, 16
      %v3387 = vrot.slane %v3385, 4
      %v3388 = vor.u32 %v3387, %v3383
      %v3389 = vrot.slane %v3388, 4
      %v3391 = vshll.u32 %v3262, 16
      %v3393 = vrot.slane %v3391, 5
      %v3394 = vsel %vm264, %v3389, %v3393
      %v3396 = vshrl.u32 %v3263, 16
      %v3398 = vrot.slane %v3396, 4
      %v3399 = vshll.u32 %v3263, 16
      %v3401 = vrot.slane %v3399, 5
      %v3402 = vor.u32 %v3398, %v3401
      %v3403 = vrot.slane %v3402, 4
      %v3405 = vshll.u32 %v3264, 16
      %v3407 = vrot.slane %v3405, 5
      %v3408 = vsel %vm264, %v3403, %v3407
      %v3409 = vshrl.u32 %v3264, 16
      %v3411 = vrot.slane %v3409, 4
      %v3412 = vor.u32 %v3411, %v3407
      %v3413 = vrot.slane %v3412, 4
      %v3415 = vshll.u32 %v3265, 16
      %v3417 = vrot.slane %v3415, 5
      %v3418 = vsel %vm264, %v3413, %v3417
      %v3420 = vshrl.u32 %v3266, 16
      %v3422 = vrot.slane %v3420, 4
      %v3423 = vshll.u32 %v3266, 16
      %v3425 = vrot.slane %v3423, 5
      %v3426 = vor.u32 %v3422, %v3425
      %v3427 = vrot.slane %v3426, 4
      %v3429 = vshll.u32 %v3267, 16
      %v3431 = vrot.slane %v3429, 5
      %v3432 = vsel %vm264, %v3427, %v3431
      %v3433 = vshrl.u32 %v3267, 16
      %v3435 = vrot.slane %v3433, 4
      %v3436 = vor.u32 %v3435, %v3431
      %v3437 = vrot.slane %v3436, 4
      %v3439 = vshll.u32 %v3268, 16
      %v3441 = vrot.slane %v3439, 5
      %v3442 = vsel %vm264, %v3437, %v3441
      %v3444 = vshrl.u32 %v3269, 16
      %v3446 = vrot.slane %v3444, 4
      %v3447 = vshll.u32 %v3269, 16
      %v3449 = vrot.slane %v3447, 5
      %v3450 = vor.u32 %v3446, %v3449
      %v3451 = vrot.slane %v3450, 4
      %v3453 = vshll.u32 %v3270, 16
      %v3455 = vrot.slane %v3453, 5
      %v3456 = vsel %vm264, %v3451, %v3455
      %v3457 = vshrl.u32 %v3270, 16
      %v3459 = vrot.slane %v3457, 4
      %v3460 = vor.u32 %v3459, %v3455
      %v3461 = vrot.slane %v3460, 4
      %v3463 = vshll.u32 %v3271, 16
      %v3465 = vrot.slane %v3463, 5
      %v3466 = vsel %vm264, %v3461, %v3465
      %v3468 = vshrl.u32 %v3272, 16
      %v3470 = vrot.slane %v3468, 4
      %v3471 = vshll.u32 %v3272, 16
      %v3473 = vrot.slane %v3471, 5
      %v3474 = vor.u32 %v3470, %v3473
      %v3475 = vrot.slane %v3474, 4
      %v3477 = vshll.u32 %v3273, 16
      %v3479 = vrot.slane %v3477, 5
      %v3480 = vsel %vm264, %v3475, %v3479
      %v3481 = vshrl.u32 %v3273, 16
      %v3483 = vrot.slane %v3481, 4
      %v3484 = vor.u32 %v3483, %v3479
      %v3485 = vrot.slane %v3484, 4
      %v3487 = vshll.u32 %v3274, 16
      %v3489 = vrot.slane %v3487, 5
      %v3490 = vsel %vm264, %v3485, %v3489
      %v3492 = vshrl.u32 %v3275, 16
      %v3494 = vrot.slane %v3492, 4
      %v3495 = vshll.u32 %v3275, 16
      %v3497 = vrot.slane %v3495, 5
      %v3498 = vor.u32 %v3494, %v3497
      %v3499 = vrot.slane %v3498, 4
      %v3501 = vshll.u32 %v3276, 16
      %v3503 = vrot.slane %v3501, 5
      %v3504 = vsel %vm264, %v3499, %v3503
      %v3505 = vshrl.u32 %v3276, 16
      %v3507 = vrot.slane %v3505, 4
      %v3508 = vor.u32 %v3507, %v3503
      %v3509 = vrot.slane %v3508, 4
      %v3511 = vshll.u32 %v3277, 16
      %v3513 = vrot.slane %v3511, 5
      %v3514 = vsel %vm264, %v3509, %v3513
      %v3516 = vshrl.u32 %v3278, 16
      %v3518 = vrot.slane %v3516, 4
      %v3519 = vshll.u32 %v3278, 16
      %v3521 = vrot.slane %v3519, 5
      %v3522 = vor.u32 %v3518, %v3521
      %v3523 = vrot.slane %v3522, 4
      %v3525 = vshll.u32 %v3279, 16
      %v3527 = vrot.slane %v3525, 5
      %v3528 = vsel %vm264, %v3523, %v3527
      %v3529 = vshrl.u32 %v3279, 16
      %v3531 = vrot.slane %v3529, 4
      %v3532 = vor.u32 %v3531, %v3527
      %v3533 = vrot.slane %v3532, 4
      %v3535 = vshll.u32 %v3280, 16
      %v3537 = vrot.slane %v3535, 5
      %v3538 = vsel %vm264, %v3533, %v3537
      %v3540 = vshrl.u32 %v3281, 16
      %v3542 = vrot.slane %v3540, 4
      %v3543 = vshll.u32 %v3281, 16
      %v3545 = vrot.slane %v3543, 5
      %v3546 = vor.u32 %v3542, %v3545
      %v3547 = vrot.slane %v3546, 4
      %v3549 = vshll.u32 %v3282, 16
      %v3551 = vrot.slane %v3549, 5
      %v3552 = vsel %vm264, %v3547, %v3551
      %v3553 = vshrl.u32 %v3282, 16
      %v3555 = vrot.slane %v3553, 4
      %v3556 = vor.u32 %v3555, %v3551
      %v3557 = vrot.slane %v3556, 4
      %v3559 = vshll.u32 %v3283, 16
      %v3561 = vrot.slane %v3559, 5
      %v3562 = vsel %vm264, %v3557, %v3561
      %v3564 = vshrl.u32 %v3284, 16
      %v3566 = vrot.slane %v3564, 4
      %v3567 = vshll.u32 %v3284, 16
      %v3569 = vrot.slane %v3567, 5
      %v3570 = vor.u32 %v3566, %v3569
      %v3571 = vrot.slane %v3570, 4
      %v3573 = vshll.u32 %v3285, 16
      %v3575 = vrot.slane %v3573, 5
      %v3576 = vsel %vm264, %v3571, %v3575
      %v3577 = vshrl.u32 %v3285, 16
      %v3579 = vrot.slane %v3577, 4
      %v3580 = vor.u32 %v3579, %v3575
      %v3581 = vrot.slane %v3580, 4
      %v3583 = vshll.u32 %v3286, 16
      %v3585 = vrot.slane %v3583, 5
      %v3586 = vsel %vm264, %v3581, %v3585
      %v3588 = vshrl.u32 %v3287, 16
      %v3590 = vrot.slane %v3588, 4
      %v3591 = vshll.u32 %v3287, 16
      %v3593 = vrot.slane %v3591, 5
      %v3594 = vor.u32 %v3590, %v3593
      %v3595 = vrot.slane %v3594, 4
      %v3597 = vshll.u32 %v3288, 16
      %v3599 = vrot.slane %v3597, 5
      %v3600 = vsel %vm264, %v3595, %v3599
      %v3601 = vshrl.u32 %v3288, 16
      %v3603 = vrot.slane %v3601, 4
      %v3604 = vor.u32 %v3603, %v3599
      %v3605 = vrot.slane %v3604, 4
      %v3607 = vshll.u32 %v3289, 16
      %v3609 = vrot.slane %v3607, 5
      %v3610 = vsel %vm264, %v3605, %v3609
      %v3612 = vshrl.u32 %v3290, 16
      %v3614 = vrot.slane %v3612, 4
      %v3615 = vshll.u32 %v3290, 16
      %v3617 = vrot.slane %v3615, 5
      %v3618 = vor.u32 %v3614, %v3617
      %v3619 = vrot.slane %v3618, 4
      %v3621 = vshll.u32 %v3291, 16
      %v3623 = vrot.slane %v3621, 5
      %v3624 = vsel %vm264, %v3619, %v3623
      %v3625 = vshrl.u32 %v3291, 16
      %v3627 = vrot.slane %v3625, 4
      %v3628 = vor.u32 %v3627, %v3623
      %v3629 = vrot.slane %v3628, 4
      %v3631 = vshll.u32 %v3292, 16
      %v3633 = vrot.slane %v3631, 5
      %v3634 = vsel %vm264, %v3629, %v3633
      %v3636 = vshrl.u32 %v3293, 16
      %v3638 = vrot.slane %v3636, 4
      %v3639 = vshll.u32 %v3293, 16
      %v3641 = vrot.slane %v3639, 5
      %v3642 = vor.u32 %v3638, %v3641
      %v3643 = vrot.slane %v3642, 4
      %v3645 = vshll.u32 %v3294, 16
      %v3647 = vrot.slane %v3645, 5
      %v3648 = vsel %vm264, %v3643, %v3647
      %v3649 = vshrl.u32 %v3294, 16
      %v3651 = vrot.slane %v3649, 4
      %v3652 = vor.u32 %v3651, %v3647
      %v3653 = vrot.slane %v3652, 4
      %v3655 = vshll.u32 %v3295, 16
      %v3657 = vrot.slane %v3655, 5
      %v3658 = vsel %vm264, %v3653, %v3657
      %v3660 = vshrl.u32 %v3296, 16
      %v3662 = vrot.slane %v3660, 4
      %v3663 = vshll.u32 %v3296, 16
      %v3665 = vrot.slane %v3663, 5
      %v3666 = vor.u32 %v3662, %v3665
      %v3667 = vrot.slane %v3666, 4
      %v3669 = vshll.u32 %v3297, 16
      %v3671 = vrot.slane %v3669, 5
      %v3672 = vsel %vm264, %v3667, %v3671
      %v3673 = vshrl.u32 %v3297, 16
      %v3675 = vrot.slane %v3673, 4
      %v3676 = vor.u32 %v3675, %v3671
      %v3677 = vrot.slane %v3676, 4
      %v3679 = vshll.u32 %v3298, 16
      %v3681 = vrot.slane %v3679, 5
      %v3682 = vsel %vm264, %v3677, %v3681
      %s3683 = scalar_lea.vmem %s1, 448
      %v3684 = vld [vmem:[%s3683] sm:$0xf]
      %v3685 = vld [vmem:[%s3683 + $0x4] sm:$0xf]
      %v3686 = vld [vmem:[%s3683 + $0x8] sm:$0xf]
      %v3687 = vld [vmem:[%s3683 + $0xc] sm:$0xf]
      %v3688 = vld [vmem:[%s3683 + $0x10] sm:$0xf]
      %v3689 = vld [vmem:[%s3683 + $0x14] sm:$0xf]
      %v3690 = vld [vmem:[%s3683 + $0x18] sm:$0xf]
      %v3691 = vld [vmem:[%s3683 + $0x1c] sm:$0xf]
      %v3692 = vld [vmem:[%s3683 + $0x20] sm:$0xf]
      %v3693 = vld [vmem:[%s3683 + $0x24] sm:$0xf]
      %v3694 = vld [vmem:[%s3683 + $0x28] sm:$0xf]
      %v3695 = vld [vmem:[%s3683 + $0x2c] sm:$0xf]
      %v3696 = vld [vmem:[%s3683 + $0x30] sm:$0xf]
      %v3697 = vld [vmem:[%s3683 + $0x34] sm:$0xf]
      %v3698 = vld [vmem:[%s3683 + $0x38] sm:$0xf]
      %v3699 = vld [vmem:[%s3683 + $0x3c] sm:$0xf]
      %v3700 = vunpack.c.l.b16 %v3312
      %v3701 = vunpack.c.l.b16 %v3322
      %v3702 = vunpack.c.l.b16 %v3336
      %v3703 = vunpack.c.l.b16 %v3346
      %v3704 = vunpack.c.l.b16 %v3360
      %v3705 = vunpack.c.l.b16 %v3370
      %v3706 = vunpack.c.l.b16 %v3384
      %v3707 = vunpack.c.l.b16 %v3394
      %v3708 = vunpack.c.l.b16 %v3408
      %v3709 = vunpack.c.l.b16 %v3418
      %v3710 = vunpack.c.l.b16 %v3432
      %v3711 = vunpack.c.l.b16 %v3442
      %v3712 = vunpack.c.l.b16 %v3456
      %v3713 = vunpack.c.l.b16 %v3466
      %v3714 = vunpack.c.l.b16 %v3480
      %v3715 = vunpack.c.l.b16 %v3490
      %v3716 = vunpack.c.l.b16 %v3504
      %v3717 = vunpack.c.l.b16 %v3514
      %v3718 = vunpack.c.l.b16 %v3528
      %v3719 = vunpack.c.l.b16 %v3538
      %v3720 = vunpack.c.l.b16 %v3552
      %v3721 = vunpack.c.l.b16 %v3562
      %v3722 = vunpack.c.l.b16 %v3576
      %v3723 = vunpack.c.l.b16 %v3586
      %v3724 = vunpack.c.l.b16 %v3600
      %v3725 = vunpack.c.l.b16 %v3610
      %v3726 = vunpack.c.l.b16 %v3624
      %v3727 = vunpack.c.l.b16 %v3634
      %v3728 = vunpack.c.l.b16 %v3648
      %v3729 = vunpack.c.l.b16 %v3658
      %v3730 = vunpack.c.l.b16 %v3672
      %v3731 = vunpack.c.l.b16 %v3682
      %v3732 = vpack.c.b16 %v3701, %v3700
      %v3733 = vpack.c.b16 %v3703, %v3702
      %v3734 = vpack.c.b16 %v3705, %v3704
      %v3735 = vpack.c.b16 %v3707, %v3706
      %v3736 = vpack.c.b16 %v3709, %v3708
      %v3737 = vpack.c.b16 %v3711, %v3710
      %v3738 = vpack.c.b16 %v3713, %v3712
      %v3739 = vpack.c.b16 %v3715, %v3714
      %v3740 = vpack.c.b16 %v3717, %v3716
      %v3741 = vpack.c.b16 %v3719, %v3718
      %v3742 = vpack.c.b16 %v3721, %v3720
      %v3743 = vpack.c.b16 %v3723, %v3722
      %v3744 = vpack.c.b16 %v3725, %v3724
      %v3745 = vpack.c.b16 %v3727, %v3726
      %v3746 = vpack.c.b16 %v3729, %v3728
      %v3747 = vpack.c.b16 %v3731, %v3730
      %v3780 = vunpack.c.l.b16 %v3684
      %v3781 = vunpack.c.l.b16 %v3685
      %v3782 = vunpack.c.l.b16 %v3686
      %v3783 = vunpack.c.l.b16 %v3687
      %v3784 = vunpack.c.l.b16 %v3688
      %v3785 = vunpack.c.l.b16 %v3689
      %v3786 = vunpack.c.l.b16 %v3690
      %v3787 = vunpack.c.l.b16 %v3691
      %v3788 = vunpack.c.l.b16 %v3692
      %v3789 = vunpack.c.l.b16 %v3693
      %v3790 = vunpack.c.l.b16 %v3694
      %v3791 = vunpack.c.l.b16 %v3695
      %v3792 = vunpack.c.l.b16 %v3696
      %v3793 = vunpack.c.l.b16 %v3697
      %v3794 = vunpack.c.l.b16 %v3698
      %v3795 = vunpack.c.l.b16 %v3699
      %v3796 = vpack.c.b16 %v3781, %v3780
      %v3797 = vpack.c.b16 %v3783, %v3782
      %v3798 = vpack.c.b16 %v3785, %v3784
      %v3799 = vpack.c.b16 %v3787, %v3786
      %v3800 = vpack.c.b16 %v3789, %v3788
      %v3801 = vpack.c.b16 %v3791, %v3790
      %v3802 = vpack.c.b16 %v3793, %v3792
      %v3803 = vpack.c.b16 %v3795, %v3794
      %3812 = vmatpush.bf16.msra.mxu0 %v3803
      %3813 = vmatpush.bf16.msra.mxu0 %v3802
      %3814 = vmatpush.bf16.msra.mxu0 %v3801
      %3815 = vmatpush.bf16.msra.mxu0 %v3800
      %3816 = vmatpush.bf16.msra.mxu0 %v3799
      %3817 = vmatpush.bf16.msra.mxu0 %v3798
      %3818 = vmatpush.bf16.msra.mxu0 %v3797
      %3819 = vmatpush.bf16.msra.mxu0 %v3796
      %3820 = vmatmul.bf16.gmra.mxu0 %v3732
      %v3821 = vpop.f32.mrf.mxu0
      %v3822 = vadd.f32 0.0, %v3821
      %v3823 = vpop.f32.mrf.mxu0
      %v3824 = vadd.f32 0.0, %v3823
      %3825 = vmatmul.bf16.gmra.mxu0 %v3733
      %v3826 = vpop.f32.mrf.mxu0
      %v3827 = vadd.f32 0.0, %v3826
      %v3828 = vpop.f32.mrf.mxu0
      %v3829 = vadd.f32 0.0, %v3828
      %3830 = vmatmul.bf16.gmra.mxu0 %v3734
      %v3831 = vpop.f32.mrf.mxu0
      %v3832 = vadd.f32 0.0, %v3831
      %v3833 = vpop.f32.mrf.mxu0
      %v3834 = vadd.f32 0.0, %v3833
      %3835 = vmatmul.bf16.gmra.mxu0 %v3735
      %v3836 = vpop.f32.mrf.mxu0
      %v3837 = vadd.f32 0.0, %v3836
      %v3838 = vpop.f32.mrf.mxu0
      %v3839 = vadd.f32 0.0, %v3838
      %3840 = vmatmul.bf16.gmra.mxu0 %v3736
      %v3841 = vpop.f32.mrf.mxu0
      %v3842 = vadd.f32 0.0, %v3841
      %v3843 = vpop.f32.mrf.mxu0
      %v3844 = vadd.f32 0.0, %v3843
      %3845 = vmatmul.bf16.gmra.mxu0 %v3737
      %v3846 = vpop.f32.mrf.mxu0
      %v3847 = vadd.f32 0.0, %v3846
      %v3848 = vpop.f32.mrf.mxu0
      %v3849 = vadd.f32 0.0, %v3848
      %3850 = vmatmul.bf16.gmra.mxu0 %v3738
      %v3851 = vpop.f32.mrf.mxu0
      %v3852 = vadd.f32 0.0, %v3851
      %v3853 = vpop.f32.mrf.mxu0
      %v3854 = vadd.f32 0.0, %v3853
      %3855 = vmatmul.bf16.gmra.mxu0 %v3739
      %v3856 = vpop.f32.mrf.mxu0
      %v3857 = vadd.f32 0.0, %v3856
      %v3858 = vpop.f32.mrf.mxu0
      %v3859 = vadd.f32 0.0, %v3858
      %3860 = vmatmul.bf16.gmra.mxu0 %v3740
      %v3861 = vpop.f32.mrf.mxu0
      %v3862 = vadd.f32 0.0, %v3861
      %v3863 = vpop.f32.mrf.mxu0
      %v3864 = vadd.f32 0.0, %v3863
      %3865 = vmatmul.bf16.gmra.mxu0 %v3741
      %v3866 = vpop.f32.mrf.mxu0
      %v3867 = vadd.f32 0.0, %v3866
      %v3868 = vpop.f32.mrf.mxu0
      %v3869 = vadd.f32 0.0, %v3868
      %3870 = vmatmul.bf16.gmra.mxu0 %v3742
      %v3871 = vpop.f32.mrf.mxu0
      %v3872 = vadd.f32 0.0, %v3871
      %v3873 = vpop.f32.mrf.mxu0
      %v3874 = vadd.f32 0.0, %v3873
      %3875 = vmatmul.bf16.gmra.mxu0 %v3743
      %v3876 = vpop.f32.mrf.mxu0
      %v3877 = vadd.f32 0.0, %v3876
      %v3878 = vpop.f32.mrf.mxu0
      %v3879 = vadd.f32 0.0, %v3878
      %3880 = vmatmul.bf16.gmra.mxu0 %v3744
      %v3881 = vpop.f32.mrf.mxu0
      %v3882 = vadd.f32 0.0, %v3881
      %v3883 = vpop.f32.mrf.mxu0
      %v3884 = vadd.f32 0.0, %v3883
      %3885 = vmatmul.bf16.gmra.mxu0 %v3745
      %v3886 = vpop.f32.mrf.mxu0
      %v3887 = vadd.f32 0.0, %v3886
      %v3888 = vpop.f32.mrf.mxu0
      %v3889 = vadd.f32 0.0, %v3888
      %3890 = vmatmul.bf16.gmra.mxu0 %v3746
      %v3891 = vpop.f32.mrf.mxu0
      %v3892 = vadd.f32 0.0, %v3891
      %v3893 = vpop.f32.mrf.mxu0
      %v3894 = vadd.f32 0.0, %v3893
      %3895 = vmatmul.bf16.gmra.mxu0 %v3747
      %v3896 = vpop.f32.mrf.mxu0
      %v3897 = vadd.f32 0.0, %v3896
      %v3898 = vpop.f32.mrf.mxu0
      %v3899 = vadd.f32 0.0, %v3898
      %3900 = vdwg.mxu0
      %v3901 = vadd.f32 %v3219, %v3822
      %v3902 = vadd.f32 %v3220, %v3824
      %v3903 = vadd.f32 %v3221, %v3827
      %v3904 = vadd.f32 %v3222, %v3829
      %v3905 = vadd.f32 %v3223, %v3832
      %v3906 = vadd.f32 %v3224, %v3834
      %v3907 = vadd.f32 %v3225, %v3837
      %v3908 = vadd.f32 %v3226, %v3839
      %v3909 = vadd.f32 %v3227, %v3842
      %v3910 = vadd.f32 %v3228, %v3844
      %v3911 = vadd.f32 %v3229, %v3847
      %v3912 = vadd.f32 %v3230, %v3849
      %v3913 = vadd.f32 %v3231, %v3852
      %v3914 = vadd.f32 %v3232, %v3854
      %v3915 = vadd.f32 %v3233, %v3857
      %v3916 = vadd.f32 %v3234, %v3859
      %v3917 = vadd.f32 %v3235, %v3862
      %v3918 = vadd.f32 %v3236, %v3864
      %v3919 = vadd.f32 %v3237, %v3867
      %v3920 = vadd.f32 %v3238, %v3869
      %v3921 = vadd.f32 %v3239, %v3872
      %v3922 = vadd.f32 %v3240, %v3874
      %v3923 = vadd.f32 %v3241, %v3877
      %v3924 = vadd.f32 %v3242, %v3879
      %v3925 = vadd.f32 %v3243, %v3882
      %v3926 = vadd.f32 %v3244, %v3884
      %v3927 = vadd.f32 %v3245, %v3887
      %v3928 = vadd.f32 %v3246, %v3889
      %v3929 = vadd.f32 %v3247, %v3892
      %v3930 = vadd.f32 %v3248, %v3894
      %v3931 = vadd.f32 %v3249, %v3897
      %v3932 = vadd.f32 %v3250, %v3899
      %v3933 = vld [vmem:[%s2936] sm:$0xe]
      %v3934 = vld [vmem:[%s2936 + $0xc] sm:$0xe]
      %v3935 = vld [vmem:[%s2936 + $0x18] sm:$0xe]
      %v3936 = vld [vmem:[%s2936 + $0x24] sm:$0xe]
      %v3937 = vld [vmem:[%s2936 + $0x30] sm:$0xe]
      %v3938 = vld [vmem:[%s2936 + $0x3c] sm:$0xe]
      %v3939 = vld [vmem:[%s2936 + $0x48] sm:$0xe]
      %v3940 = vld [vmem:[%s2936 + $0x54] sm:$0xe]
      %v3941 = vld [vmem:[%s2936 + $0x60] sm:$0xe]
      %v3942 = vld [vmem:[%s2936 + $0x6c] sm:$0xe]
      %v3943 = vld [vmem:[%s2936 + $0x78] sm:$0xe]
      %v3944 = vld [vmem:[%s2936 + $0x84] sm:$0xe]
      %v3945 = vld [vmem:[%s2936 + $0x90] sm:$0xe]
      %v3946 = vld [vmem:[%s2936 + $0x9c] sm:$0xe]
      %v3947 = vld [vmem:[%s2936 + $0xa8] sm:$0xe]
      %v3948 = vld [vmem:[%s2936 + $0xb4] sm:$0xe]
      %v3997 = vrot.slane %v3933, 5
      %v3998 = vrot.slane %v3997, 4
      %v3999 = vrot.slane %v3252, 5
      %v4000 = vsel %vm1150, %v3998, %v3999
      %v4001 = vrot.slane %v3999, 4
      %v4002 = vrot.slane %v3253, 5
      %v4003 = vsel %vm1150, %v4001, %v4002
      %v4004 = vrot.slane %v3934, 5
      %v4005 = vrot.slane %v4004, 4
      %v4006 = vrot.slane %v3255, 5
      %v4007 = vsel %vm1150, %v4005, %v4006
      %v4008 = vrot.slane %v4006, 4
      %v4009 = vrot.slane %v3256, 5
      %v4010 = vsel %vm1150, %v4008, %v4009
      %v4011 = vrot.slane %v3935, 5
      %v4012 = vrot.slane %v4011, 4
      %v4013 = vrot.slane %v3258, 5
      %v4014 = vsel %vm1150, %v4012, %v4013
      %v4015 = vrot.slane %v4013, 4
      %v4016 = vrot.slane %v3259, 5
      %v4017 = vsel %vm1150, %v4015, %v4016
      %v4018 = vrot.slane %v3936, 5
      %v4019 = vrot.slane %v4018, 4
      %v4020 = vrot.slane %v3261, 5
      %v4021 = vsel %vm1150, %v4019, %v4020
      %v4022 = vrot.slane %v4020, 4
      %v4023 = vrot.slane %v3262, 5
      %v4024 = vsel %vm1150, %v4022, %v4023
      %v4025 = vrot.slane %v3937, 5
      %v4026 = vrot.slane %v4025, 4
      %v4027 = vrot.slane %v3264, 5
      %v4028 = vsel %vm1150, %v4026, %v4027
      %v4029 = vrot.slane %v4027, 4
      %v4030 = vrot.slane %v3265, 5
      %v4031 = vsel %vm1150, %v4029, %v4030
      %v4032 = vrot.slane %v3938, 5
      %v4033 = vrot.slane %v4032, 4
      %v4034 = vrot.slane %v3267, 5
      %v4035 = vsel %vm1150, %v4033, %v4034
      %v4036 = vrot.slane %v4034, 4
      %v4037 = vrot.slane %v3268, 5
      %v4038 = vsel %vm1150, %v4036, %v4037
      %v4039 = vrot.slane %v3939, 5
      %v4040 = vrot.slane %v4039, 4
      %v4041 = vrot.slane %v3270, 5
      %v4042 = vsel %vm1150, %v4040, %v4041
      %v4043 = vrot.slane %v4041, 4
      %v4044 = vrot.slane %v3271, 5
      %v4045 = vsel %vm1150, %v4043, %v4044
      %v4046 = vrot.slane %v3940, 5
      %v4047 = vrot.slane %v4046, 4
      %v4048 = vrot.slane %v3273, 5
      %v4049 = vsel %vm1150, %v4047, %v4048
      %v4050 = vrot.slane %v4048, 4
      %v4051 = vrot.slane %v3274, 5
      %v4052 = vsel %vm1150, %v4050, %v4051
      %v4053 = vrot.slane %v3941, 5
      %v4054 = vrot.slane %v4053, 4
      %v4055 = vrot.slane %v3276, 5
      %v4056 = vsel %vm1150, %v4054, %v4055
      %v4057 = vrot.slane %v4055, 4
      %v4058 = vrot.slane %v3277, 5
      %v4059 = vsel %vm1150, %v4057, %v4058
      %v4060 = vrot.slane %v3942, 5
      %v4061 = vrot.slane %v4060, 4
      %v4062 = vrot.slane %v3279, 5
      %v4063 = vsel %vm1150, %v4061, %v4062
      %v4064 = vrot.slane %v4062, 4
      %v4065 = vrot.slane %v3280, 5
      %v4066 = vsel %vm1150, %v4064, %v4065
      %v4067 = vrot.slane %v3943, 5
      %v4068 = vrot.slane %v4067, 4
      %v4069 = vrot.slane %v3282, 5
      %v4070 = vsel %vm1150, %v4068, %v4069
      %v4071 = vrot.slane %v4069, 4
      %v4072 = vrot.slane %v3283, 5
      %v4073 = vsel %vm1150, %v4071, %v4072
      %v4074 = vrot.slane %v3944, 5
      %v4075 = vrot.slane %v4074, 4
      %v4076 = vrot.slane %v3285, 5
      %v4077 = vsel %vm1150, %v4075, %v4076
      %v4078 = vrot.slane %v4076, 4
      %v4079 = vrot.slane %v3286, 5
      %v4080 = vsel %vm1150, %v4078, %v4079
      %v4081 = vrot.slane %v3945, 5
      %v4082 = vrot.slane %v4081, 4
      %v4083 = vrot.slane %v3288, 5
      %v4084 = vsel %vm1150, %v4082, %v4083
      %v4085 = vrot.slane %v4083, 4
      %v4086 = vrot.slane %v3289, 5
      %v4087 = vsel %vm1150, %v4085, %v4086
      %v4088 = vrot.slane %v3946, 5
      %v4089 = vrot.slane %v4088, 4
      %v4090 = vrot.slane %v3291, 5
      %v4091 = vsel %vm1150, %v4089, %v4090
      %v4092 = vrot.slane %v4090, 4
      %v4093 = vrot.slane %v3292, 5
      %v4094 = vsel %vm1150, %v4092, %v4093
      %v4095 = vrot.slane %v3947, 5
      %v4096 = vrot.slane %v4095, 4
      %v4097 = vrot.slane %v3294, 5
      %v4098 = vsel %vm1150, %v4096, %v4097
      %v4099 = vrot.slane %v4097, 4
      %v4100 = vrot.slane %v3295, 5
      %v4101 = vsel %vm1150, %v4099, %v4100
      %v4102 = vrot.slane %v3948, 5
      %v4103 = vrot.slane %v4102, 4
      %v4104 = vrot.slane %v3297, 5
      %v4105 = vsel %vm1150, %v4103, %v4104
      %v4106 = vrot.slane %v4104, 4
      %v4107 = vrot.slane %v3298, 5
      %v4108 = vsel %vm1150, %v4106, %v4107
      %s4109 = scalar_lea.vmem %s1, 512
      %v4110 = vld [vmem:[%s4109] sm:$0xf]
      %v4111 = vld [vmem:[%s4109 + $0x4] sm:$0xf]
      %v4112 = vld [vmem:[%s4109 + $0x8] sm:$0xf]
      %v4113 = vld [vmem:[%s4109 + $0xc] sm:$0xf]
      %v4114 = vld [vmem:[%s4109 + $0x10] sm:$0xf]
      %v4115 = vld [vmem:[%s4109 + $0x14] sm:$0xf]
      %v4116 = vld [vmem:[%s4109 + $0x18] sm:$0xf]
      %v4117 = vld [vmem:[%s4109 + $0x1c] sm:$0xf]
      %v4118 = vld [vmem:[%s4109 + $0x20] sm:$0xf]
      %v4119 = vld [vmem:[%s4109 + $0x24] sm:$0xf]
      %v4120 = vld [vmem:[%s4109 + $0x28] sm:$0xf]
      %v4121 = vld [vmem:[%s4109 + $0x2c] sm:$0xf]
      %v4122 = vld [vmem:[%s4109 + $0x30] sm:$0xf]
      %v4123 = vld [vmem:[%s4109 + $0x34] sm:$0xf]
      %v4124 = vld [vmem:[%s4109 + $0x38] sm:$0xf]
      %v4125 = vld [vmem:[%s4109 + $0x3c] sm:$0xf]
      %v4126 = vunpack.c.l.b16 %v4000
      %v4127 = vunpack.c.l.b16 %v4003
      %v4128 = vunpack.c.l.b16 %v4007
      %v4129 = vunpack.c.l.b16 %v4010
      %v4130 = vunpack.c.l.b16 %v4014
      %v4131 = vunpack.c.l.b16 %v4017
      %v4132 = vunpack.c.l.b16 %v4021
      %v4133 = vunpack.c.l.b16 %v4024
      %v4134 = vunpack.c.l.b16 %v4028
      %v4135 = vunpack.c.l.b16 %v4031
      %v4136 = vunpack.c.l.b16 %v4035
      %v4137 = vunpack.c.l.b16 %v4038
      %v4138 = vunpack.c.l.b16 %v4042
      %v4139 = vunpack.c.l.b16 %v4045
      %v4140 = vunpack.c.l.b16 %v4049
      %v4141 = vunpack.c.l.b16 %v4052
      %v4142 = vunpack.c.l.b16 %v4056
      %v4143 = vunpack.c.l.b16 %v4059
      %v4144 = vunpack.c.l.b16 %v4063
      %v4145 = vunpack.c.l.b16 %v4066
      %v4146 = vunpack.c.l.b16 %v4070
      %v4147 = vunpack.c.l.b16 %v4073
      %v4148 = vunpack.c.l.b16 %v4077
      %v4149 = vunpack.c.l.b16 %v4080
      %v4150 = vunpack.c.l.b16 %v4084
      %v4151 = vunpack.c.l.b16 %v4087
      %v4152 = vunpack.c.l.b16 %v4091
      %v4153 = vunpack.c.l.b16 %v4094
      %v4154 = vunpack.c.l.b16 %v4098
      %v4155 = vunpack.c.l.b16 %v4101
      %v4156 = vunpack.c.l.b16 %v4105
      %v4157 = vunpack.c.l.b16 %v4108
      %v4158 = vpack.c.b16 %v4127, %v4126
      %v4159 = vpack.c.b16 %v4129, %v4128
      %v4160 = vpack.c.b16 %v4131, %v4130
      %v4161 = vpack.c.b16 %v4133, %v4132
      %v4162 = vpack.c.b16 %v4135, %v4134
      %v4163 = vpack.c.b16 %v4137, %v4136
      %v4164 = vpack.c.b16 %v4139, %v4138
      %v4165 = vpack.c.b16 %v4141, %v4140
      %v4166 = vpack.c.b16 %v4143, %v4142
      %v4167 = vpack.c.b16 %v4145, %v4144
      %v4168 = vpack.c.b16 %v4147, %v4146
      %v4169 = vpack.c.b16 %v4149, %v4148
      %v4170 = vpack.c.b16 %v4151, %v4150
      %v4171 = vpack.c.b16 %v4153, %v4152
      %v4172 = vpack.c.b16 %v4155, %v4154
      %v4173 = vpack.c.b16 %v4157, %v4156
      %v4206 = vunpack.c.l.b16 %v4110
      %v4207 = vunpack.c.l.b16 %v4111
      %v4208 = vunpack.c.l.b16 %v4112
      %v4209 = vunpack.c.l.b16 %v4113
      %v4210 = vunpack.c.l.b16 %v4114
      %v4211 = vunpack.c.l.b16 %v4115
      %v4212 = vunpack.c.l.b16 %v4116
      %v4213 = vunpack.c.l.b16 %v4117
      %v4214 = vunpack.c.l.b16 %v4118
      %v4215 = vunpack.c.l.b16 %v4119
      %v4216 = vunpack.c.l.b16 %v4120
      %v4217 = vunpack.c.l.b16 %v4121
      %v4218 = vunpack.c.l.b16 %v4122
      %v4219 = vunpack.c.l.b16 %v4123
      %v4220 = vunpack.c.l.b16 %v4124
      %v4221 = vunpack.c.l.b16 %v4125
      %v4222 = vpack.c.b16 %v4207, %v4206
      %v4223 = vpack.c.b16 %v4209, %v4208
      %v4224 = vpack.c.b16 %v4211, %v4210
      %v4225 = vpack.c.b16 %v4213, %v4212
      %v4226 = vpack.c.b16 %v4215, %v4214
      %v4227 = vpack.c.b16 %v4217, %v4216
      %v4228 = vpack.c.b16 %v4219, %v4218
      %v4229 = vpack.c.b16 %v4221, %v4220
      %4238 = vmatpush.bf16.msra.mxu0 %v4229
      %4239 = vmatpush.bf16.msra.mxu0 %v4228
      %4240 = vmatpush.bf16.msra.mxu0 %v4227
      %4241 = vmatpush.bf16.msra.mxu0 %v4226
      %4242 = vmatpush.bf16.msra.mxu0 %v4225
      %4243 = vmatpush.bf16.msra.mxu0 %v4224
      %4244 = vmatpush.bf16.msra.mxu0 %v4223
      %4245 = vmatpush.bf16.msra.mxu0 %v4222
      %4246 = vmatmul.bf16.gmra.mxu0 %v4158
      %v4247 = vpop.f32.mrf.mxu0
      %v4248 = vadd.f32 0.0, %v4247
      %v4249 = vpop.f32.mrf.mxu0
      %v4250 = vadd.f32 0.0, %v4249
      %4251 = vmatmul.bf16.gmra.mxu0 %v4159
      %v4252 = vpop.f32.mrf.mxu0
      %v4253 = vadd.f32 0.0, %v4252
      %v4254 = vpop.f32.mrf.mxu0
      %v4255 = vadd.f32 0.0, %v4254
      %4256 = vmatmul.bf16.gmra.mxu0 %v4160
      %v4257 = vpop.f32.mrf.mxu0
      %v4258 = vadd.f32 0.0, %v4257
      %v4259 = vpop.f32.mrf.mxu0
      %v4260 = vadd.f32 0.0, %v4259
      %4261 = vmatmul.bf16.gmra.mxu0 %v4161
      %v4262 = vpop.f32.mrf.mxu0
      %v4263 = vadd.f32 0.0, %v4262
      %v4264 = vpop.f32.mrf.mxu0
      %v4265 = vadd.f32 0.0, %v4264
      %4266 = vmatmul.bf16.gmra.mxu0 %v4162
      %v4267 = vpop.f32.mrf.mxu0
      %v4268 = vadd.f32 0.0, %v4267
      %v4269 = vpop.f32.mrf.mxu0
      %v4270 = vadd.f32 0.0, %v4269
      %4271 = vmatmul.bf16.gmra.mxu0 %v4163
      %v4272 = vpop.f32.mrf.mxu0
      %v4273 = vadd.f32 0.0, %v4272
      %v4274 = vpop.f32.mrf.mxu0
      %v4275 = vadd.f32 0.0, %v4274
      %4276 = vmatmul.bf16.gmra.mxu0 %v4164
      %v4277 = vpop.f32.mrf.mxu0
      %v4278 = vadd.f32 0.0, %v4277
      %v4279 = vpop.f32.mrf.mxu0
      %v4280 = vadd.f32 0.0, %v4279
      %4281 = vmatmul.bf16.gmra.mxu0 %v4165
      %v4282 = vpop.f32.mrf.mxu0
      %v4283 = vadd.f32 0.0, %v4282
      %v4284 = vpop.f32.mrf.mxu0
      %v4285 = vadd.f32 0.0, %v4284
      %4286 = vmatmul.bf16.gmra.mxu0 %v4166
      %v4287 = vpop.f32.mrf.mxu0
      %v4288 = vadd.f32 0.0, %v4287
      %v4289 = vpop.f32.mrf.mxu0
      %v4290 = vadd.f32 0.0, %v4289
      %4291 = vmatmul.bf16.gmra.mxu0 %v4167
      %v4292 = vpop.f32.mrf.mxu0
      %v4293 = vadd.f32 0.0, %v4292
      %v4294 = vpop.f32.mrf.mxu0
      %v4295 = vadd.f32 0.0, %v4294
      %4296 = vmatmul.bf16.gmra.mxu0 %v4168
      %v4297 = vpop.f32.mrf.mxu0
      %v4298 = vadd.f32 0.0, %v4297
      %v4299 = vpop.f32.mrf.mxu0
      %v4300 = vadd.f32 0.0, %v4299
      %4301 = vmatmul.bf16.gmra.mxu0 %v4169
      %v4302 = vpop.f32.mrf.mxu0
      %v4303 = vadd.f32 0.0, %v4302
      %v4304 = vpop.f32.mrf.mxu0
      %v4305 = vadd.f32 0.0, %v4304
      %4306 = vmatmul.bf16.gmra.mxu0 %v4170
      %v4307 = vpop.f32.mrf.mxu0
      %v4308 = vadd.f32 0.0, %v4307
      %v4309 = vpop.f32.mrf.mxu0
      %v4310 = vadd.f32 0.0, %v4309
      %4311 = vmatmul.bf16.gmra.mxu0 %v4171
      %v4312 = vpop.f32.mrf.mxu0
      %v4313 = vadd.f32 0.0, %v4312
      %v4314 = vpop.f32.mrf.mxu0
      %v4315 = vadd.f32 0.0, %v4314
      %4316 = vmatmul.bf16.gmra.mxu0 %v4172
      %v4317 = vpop.f32.mrf.mxu0
      %v4318 = vadd.f32 0.0, %v4317
      %v4319 = vpop.f32.mrf.mxu0
      %v4320 = vadd.f32 0.0, %v4319
      %4321 = vmatmul.bf16.gmra.mxu0 %v4173
      %v4322 = vpop.f32.mrf.mxu0
      %v4323 = vadd.f32 0.0, %v4322
      %v4324 = vpop.f32.mrf.mxu0
      %v4325 = vadd.f32 0.0, %v4324
      %4326 = vdwg.mxu0
      %v4327 = vadd.f32 %v3901, %v4248
      %v4328 = vadd.f32 %v3902, %v4250
      %v4329 = vadd.f32 %v3903, %v4253
      %v4330 = vadd.f32 %v3904, %v4255
      %v4331 = vadd.f32 %v3905, %v4258
      %v4332 = vadd.f32 %v3906, %v4260
      %v4333 = vadd.f32 %v3907, %v4263
      %v4334 = vadd.f32 %v3908, %v4265
      %v4335 = vadd.f32 %v3909, %v4268
      %v4336 = vadd.f32 %v3910, %v4270
      %v4337 = vadd.f32 %v3911, %v4273
      %v4338 = vadd.f32 %v3912, %v4275
      %v4339 = vadd.f32 %v3913, %v4278
      %v4340 = vadd.f32 %v3914, %v4280
      %v4341 = vadd.f32 %v3915, %v4283
      %v4342 = vadd.f32 %v3916, %v4285
      %v4343 = vadd.f32 %v3917, %v4288
      %v4344 = vadd.f32 %v3918, %v4290
      %v4345 = vadd.f32 %v3919, %v4293
      %v4346 = vadd.f32 %v3920, %v4295
      %v4347 = vadd.f32 %v3921, %v4298
      %v4348 = vadd.f32 %v3922, %v4300
      %v4349 = vadd.f32 %v3923, %v4303
      %v4350 = vadd.f32 %v3924, %v4305
      %v4351 = vadd.f32 %v3925, %v4308
      %v4352 = vadd.f32 %v3926, %v4310
      %v4353 = vadd.f32 %v3927, %v4313
      %v4354 = vadd.f32 %v3928, %v4315
      %v4355 = vadd.f32 %v3929, %v4318
      %v4356 = vadd.f32 %v3930, %v4320
      %v4357 = vadd.f32 %v3931, %v4323
      %v4358 = vadd.f32 %v3932, %v4325
      %v4359 = vld [vmem:[%s2] sm:$0x1]
      %v4361 = vperm.slane %v4359, 0
      %v4363 = vmul.f32 %v4327, %v4361
      %v4364 = vmul.f32 %v4328, %v4361
      %v4365 = vmul.f32 %v4329, %v4361
      %v4366 = vmul.f32 %v4330, %v4361
      %v4367 = vmul.f32 %v4331, %v4361
      %v4368 = vmul.f32 %v4332, %v4361
      %v4369 = vmul.f32 %v4333, %v4361
      %v4370 = vmul.f32 %v4334, %v4361
      %v4371 = vmul.f32 %v4335, %v4361
      %v4372 = vmul.f32 %v4336, %v4361
      %v4373 = vmul.f32 %v4337, %v4361
      %v4374 = vmul.f32 %v4338, %v4361
      %v4375 = vmul.f32 %v4339, %v4361
      %v4376 = vmul.f32 %v4340, %v4361
      %v4377 = vmul.f32 %v4341, %v4361
      %v4378 = vmul.f32 %v4342, %v4361
      %v4379 = vmul.f32 %v4343, %v4361
      %v4380 = vmul.f32 %v4344, %v4361
      %v4381 = vmul.f32 %v4345, %v4361
      %v4382 = vmul.f32 %v4346, %v4361
      %v4383 = vmul.f32 %v4347, %v4361
      %v4384 = vmul.f32 %v4348, %v4361
      %v4385 = vmul.f32 %v4349, %v4361
      %v4386 = vmul.f32 %v4350, %v4361
      %v4387 = vmul.f32 %v4351, %v4361
      %v4388 = vmul.f32 %v4352, %v4361
      %v4389 = vmul.f32 %v4353, %v4361
      %v4390 = vmul.f32 %v4354, %v4361
      %v4391 = vmul.f32 %v4355, %v4361
      %v4392 = vmul.f32 %v4356, %v4361
      %v4393 = vmul.f32 %v4357, %v4361
      %v4394 = vmul.f32 %v4358, %v4361
      %v4395 = vld [vmem:[%s3] sm:$0x1]
      %v4397 = vperm.slane %v4395, 0
      %v4399 = vadd.f32 %v4363, %v4397
      %v4400 = vadd.f32 %v4364, %v4397
      %v4401 = vadd.f32 %v4365, %v4397
      %v4402 = vadd.f32 %v4366, %v4397
      %v4403 = vadd.f32 %v4367, %v4397
      %v4404 = vadd.f32 %v4368, %v4397
      %v4405 = vadd.f32 %v4369, %v4397
      %v4406 = vadd.f32 %v4370, %v4397
      %v4407 = vadd.f32 %v4371, %v4397
      %v4408 = vadd.f32 %v4372, %v4397
      %v4409 = vadd.f32 %v4373, %v4397
      %v4410 = vadd.f32 %v4374, %v4397
      %v4411 = vadd.f32 %v4375, %v4397
      %v4412 = vadd.f32 %v4376, %v4397
      %v4413 = vadd.f32 %v4377, %v4397
      %v4414 = vadd.f32 %v4378, %v4397
      %v4415 = vadd.f32 %v4379, %v4397
      %v4416 = vadd.f32 %v4380, %v4397
      %v4417 = vadd.f32 %v4381, %v4397
      %v4418 = vadd.f32 %v4382, %v4397
      %v4419 = vadd.f32 %v4383, %v4397
      %v4420 = vadd.f32 %v4384, %v4397
      %v4421 = vadd.f32 %v4385, %v4397
      %v4422 = vadd.f32 %v4386, %v4397
      %v4423 = vadd.f32 %v4387, %v4397
      %v4424 = vadd.f32 %v4388, %v4397
      %v4425 = vadd.f32 %v4389, %v4397
      %v4426 = vadd.f32 %v4390, %v4397
      %v4427 = vadd.f32 %v4391, %v4397
      %v4428 = vadd.f32 %v4392, %v4397
      %v4429 = vadd.f32 %v4393, %v4397
      %v4430 = vadd.f32 %v4394, %v4397
      %v4431 = vmax.f32 %v4399, 0.0
      %v4432 = vmax.f32 %v4400, 0.0
      %v4433 = vmax.f32 %v4401, 0.0
      %v4434 = vmax.f32 %v4402, 0.0
      %v4435 = vmax.f32 %v4403, 0.0
      %v4436 = vmax.f32 %v4404, 0.0
      %v4437 = vmax.f32 %v4405, 0.0
      %v4438 = vmax.f32 %v4406, 0.0
      %v4439 = vmax.f32 %v4407, 0.0
      %v4440 = vmax.f32 %v4408, 0.0
      %v4441 = vmax.f32 %v4409, 0.0
      %v4442 = vmax.f32 %v4410, 0.0
      %v4443 = vmax.f32 %v4411, 0.0
      %v4444 = vmax.f32 %v4412, 0.0
      %v4445 = vmax.f32 %v4413, 0.0
      %v4446 = vmax.f32 %v4414, 0.0
      %v4447 = vmax.f32 %v4415, 0.0
      %v4448 = vmax.f32 %v4416, 0.0
      %v4449 = vmax.f32 %v4417, 0.0
      %v4450 = vmax.f32 %v4418, 0.0
      %v4451 = vmax.f32 %v4419, 0.0
      %v4452 = vmax.f32 %v4420, 0.0
      %v4453 = vmax.f32 %v4421, 0.0
      %v4454 = vmax.f32 %v4422, 0.0
      %v4455 = vmax.f32 %v4423, 0.0
      %v4456 = vmax.f32 %v4424, 0.0
      %v4457 = vmax.f32 %v4425, 0.0
      %v4458 = vmax.f32 %v4426, 0.0
      %v4459 = vmax.f32 %v4427, 0.0
      %v4460 = vmax.f32 %v4428, 0.0
      %v4461 = vmax.f32 %v4429, 0.0
      %v4462 = vmax.f32 %v4430, 0.0
      %v4463 = vpack.c.bf16 %v4431, %v4431
      %v4464 = vpack.c.bf16 %v4432, %v4432
      %v4465 = vpack.c.bf16 %v4433, %v4433
      %v4466 = vpack.c.bf16 %v4434, %v4434
      %v4467 = vpack.c.bf16 %v4435, %v4435
      %v4468 = vpack.c.bf16 %v4436, %v4436
      %v4469 = vpack.c.bf16 %v4437, %v4437
      %v4470 = vpack.c.bf16 %v4438, %v4438
      %v4471 = vpack.c.bf16 %v4439, %v4439
      %v4472 = vpack.c.bf16 %v4440, %v4440
      %v4473 = vpack.c.bf16 %v4441, %v4441
      %v4474 = vpack.c.bf16 %v4442, %v4442
      %v4475 = vpack.c.bf16 %v4443, %v4443
      %v4476 = vpack.c.bf16 %v4444, %v4444
      %v4477 = vpack.c.bf16 %v4445, %v4445
      %v4478 = vpack.c.bf16 %v4446, %v4446
      %v4479 = vpack.c.bf16 %v4447, %v4447
      %v4480 = vpack.c.bf16 %v4448, %v4448
      %v4481 = vpack.c.bf16 %v4449, %v4449
      %v4482 = vpack.c.bf16 %v4450, %v4450
      %v4483 = vpack.c.bf16 %v4451, %v4451
      %v4484 = vpack.c.bf16 %v4452, %v4452
      %v4485 = vpack.c.bf16 %v4453, %v4453
      %v4486 = vpack.c.bf16 %v4454, %v4454
      %v4487 = vpack.c.bf16 %v4455, %v4455
      %v4488 = vpack.c.bf16 %v4456, %v4456
      %v4489 = vpack.c.bf16 %v4457, %v4457
      %v4490 = vpack.c.bf16 %v4458, %v4458
      %v4491 = vpack.c.bf16 %v4459, %v4459
      %v4492 = vpack.c.bf16 %v4460, %v4460
      %v4493 = vpack.c.bf16 %v4461, %v4461
      %v4494 = vpack.c.bf16 %v4462, %v4462
      %4495 = vst [vmem:[%s197] sm:$0xf] %v4463
      %4496 = vst [vmem:[%s197 + $0x4] sm:$0xf] %v4464
      %4497 = vst [vmem:[%s197 + $0x8] sm:$0xf] %v4465
      %4498 = vst [vmem:[%s197 + $0xc] sm:$0xf] %v4466
      %4499 = vst [vmem:[%s197 + $0x10] sm:$0xf] %v4467
      %4500 = vst [vmem:[%s197 + $0x14] sm:$0xf] %v4468
      %4501 = vst [vmem:[%s197 + $0x18] sm:$0xf] %v4469
      %4502 = vst [vmem:[%s197 + $0x1c] sm:$0xf] %v4470
      %4503 = vst [vmem:[%s197 + $0x20] sm:$0xf] %v4471
      %4504 = vst [vmem:[%s197 + $0x24] sm:$0xf] %v4472
      %4505 = vst [vmem:[%s197 + $0x28] sm:$0xf] %v4473
      %4506 = vst [vmem:[%s197 + $0x2c] sm:$0xf] %v4474
      %4507 = vst [vmem:[%s197 + $0x30] sm:$0xf] %v4475
      %4508 = vst [vmem:[%s197 + $0x34] sm:$0xf] %v4476
      %4509 = vst [vmem:[%s197 + $0x38] sm:$0xf] %v4477
      %4510 = vst [vmem:[%s197 + $0x3c] sm:$0xf] %v4478
      %4511 = vst [vmem:[%s197 + $0x40] sm:$0xf] %v4479
      %4512 = vst [vmem:[%s197 + $0x44] sm:$0xf] %v4480
      %4513 = vst [vmem:[%s197 + $0x48] sm:$0xf] %v4481
      %4514 = vst [vmem:[%s197 + $0x4c] sm:$0xf] %v4482
      %4515 = vst [vmem:[%s197 + $0x50] sm:$0xf] %v4483
      %4516 = vst [vmem:[%s197 + $0x54] sm:$0xf] %v4484
      %4517 = vst [vmem:[%s197 + $0x58] sm:$0xf] %v4485
      %4518 = vst [vmem:[%s197 + $0x5c] sm:$0xf] %v4486
      %4519 = vst [vmem:[%s197 + $0x60] sm:$0xf] %v4487
      %4520 = vst [vmem:[%s197 + $0x64] sm:$0xf] %v4488
      %4521 = vst [vmem:[%s197 + $0x68] sm:$0xf] %v4489
      %4522 = vst [vmem:[%s197 + $0x6c] sm:$0xf] %v4490
      %4523 = vst [vmem:[%s197 + $0x70] sm:$0xf] %v4491
      %4524 = vst [vmem:[%s197 + $0x74] sm:$0xf] %v4492
      %4525 = vst [vmem:[%s197 + $0x78] sm:$0xf] %v4493
      %4526 = vst [vmem:[%s197 + $0x7c] sm:$0xf] %v4494
      %p4527 = scmp.lt.s32.totalorder %s15, 1
      %s4528 = scalar_select %p4527, %s15, 1
      %s4529 = smul.addr %s4528, 32
      %s4530 = smul.addr %s4529, 4
      %s4531 = scalar_lea.vmem %s4, %s4530
      // Predicated region
      $region37: #{inception_branch_factorization1_forward.4} parent=35 // pred_check
        %p4532 = pneg %p122
      $region38: #{inception_branch_factorization1_forward.4} parent=35 // pred_check_branch
        %4534 = sbr.rel (%p4532) target = $region40
      $region39: #{inception_branch_factorization1_forward.4} parent=35 // pred_region
        _
      $region40: #{inception_branch_factorization1_forward.4} parent=35 // pred_fallthru
        _
    $region36: #{inception_branch_factorization1_forward.4} parent=5 // pred_fallthru
      _
    %p4535 = scmp.le.s32.totalorder 2, %s10
    // Predicated region
    $region41: #{inception_branch_factorization1_forward.4} parent=5 // pred_check
      %p4536 = pneg %p4535
    $region42: #{inception_branch_factorization1_forward.4} parent=5 // pred_check_branch
      %4538 = sbr.rel (%p4536) target = $region44
    $region43: #{inception_branch_factorization1_forward.4} parent=5 // pred_region
      %s4539 = ssub.s32 %s10, 2
      // Predicated region
      $region45: #{inception_branch_factorization1_forward.4} parent=43 // pred_check
        %p4540 = pneg %p128
      $region46: #{inception_branch_factorization1_forward.4} parent=43 // pred_check_branch
        %4542 = sbr.rel (%p4540) target = $region48
      $region47: #{inception_branch_factorization1_forward.4} parent=43 // pred_region
        %p4543 = scmp.lt.s32.totalorder %s16, 1
        %s4544 = scalar_select %p4543, %s16, 1
        %s4545 = smul.addr %s4544, 32
        %s4546 = smul.addr %s4545, 4
        %s4547 = scalar_lea.vmem %s4, %s4546
      $region48: #{inception_branch_factorization1_forward.4} parent=43 // pred_fallthru
        _
    $region44: #{inception_branch_factorization1_forward.4} parent=5 // pred_fallthru
      _
  $region6: #{inception_branch_factorization1_forward.4} parent=0 // loop_footer
    %s14 = sadd.s32 1, %s10
  $region7: #{inception_branch_factorization1_forward.4} parent=0 // loop_footer_branch
    %9 = sbr.rel target = $region3
  $region8: #{inception_branch_factorization1_forward.4} parent=0 // loop_exit
    _

</llo_original>
